<compile_context>
chip_gen: v5e
topology: v5e:2x2
jax: 0.10.0
libtpu: 0.0.40
codegen_flags: <defaults>
</compile_context>

<pallas_src>
import jax
import jax.numpy as jnp
import numpy as np
from jax.experimental import pallas as pl
from jax.experimental.pallas import tpu as pltpu


# --------------------------------------------------------------------------
# Kernel
# --------------------------------------------------------------------------
def _make_kernel(Bt, H, W, Cin, Cout, use_im2col):
    """Build the fused BasicBlock kernel for one (Bt, H, W, C) NHWC tile."""
    M = Bt * H * W

    def _zero_halo(ref, c):
        # Zero only the 1-pixel halo; interior is fully overwritten below.
        # Re-done every grid step: program_id(0)==0 gating is unsafe with
        # ("parallel",) megacore splitting (second core starts at pid != 0).
        zrow = jnp.zeros((Bt, 1, W + 2, c), jnp.float32)
        zcol = jnp.zeros((Bt, H + 2, 1, c), jnp.float32)
        ref[:, 0:1, :, :] = zrow
        ref[:, H + 1:H + 2, :, :] = zrow
        ref[:, :, 0:1, :] = zcol
        ref[:, :, W + 1:W + 2, :] = zcol

    def _conv3x3(src_ref, w_ref, cin):
        # BN scale is pre-folded into w_ref (per output column) in the
        # wrapper, so only a bias add (+ ReLU) remains after the dot(s).
        if use_im2col:
            # C >= 128: concat is lane-aligned -> ONE MXU dot with K = 9*C.
            cols = [src_ref[:, kh:kh + H, kw:kw + W, :].astype(jnp.bfloat16)
                    for kh in range(3) for kw in range(3)]
            patch = jnp.concatenate(cols, axis=-1).reshape(M, 9 * cin)
            return jnp.dot(patch, w_ref[...],
                           preferred_element_type=jnp.float32)
        # C < 128: 9-way concat would force cross-lane relayouts and
        # materialize ~9x the tile; instead do 9 accumulating dots on the
        # shifted slices (per-slice bf16 cast, f32 accumulation).
        acc = jnp.zeros((M, Cout), jnp.float32)
        for tap in range(9):
            kh, kw = tap // 3, tap % 3
            sl = src_ref[:, kh:kh + H, kw:kw + W, :].astype(jnp.bfloat16)
            acc = acc + jnp.dot(sl.reshape(M, cin), w_ref[tap],
                                preferred_element_type=jnp.float32)
        return acc

    def kernel(x_ref, w1_ref, b1_ref, w2_ref, b2_ref, o_ref, xpad_s, mid_s):
        # ---- stage zero-padded input (padding folded into the kernel) -----
        _zero_halo(xpad_s, Cin)
        xpad_s[:, 1:H + 1, 1:W + 1, :] = x_ref[...]

        # ---- conv1 (3x3,s=1,p=1, BN1 scale folded into w1) + bias + ReLU --
        out1 = jnp.maximum(_conv3x3(xpad_s, w1_ref, Cin) + b1_ref[...], 0.0)

        # ---- stage zero-padded intermediate for conv2 ----------------------
        _zero_halo(mid_s, Cout)
        mid_s[:, 1:H + 1, 1:W + 1, :] = out1.reshape(Bt, H, W, Cout)

        # ---- conv2 (BN2 scale folded into w2) + bias ------------------------
        out2 = _conv3x3(mid_s, w2_ref, Cout) + b2_ref[...]

        # ---- residual add (f32 NHWC identity, used in place) + ReLU --------
        o_ref[...] = jnp.maximum(out2.reshape(Bt, H, W, Cout) + x_ref[...], 0.0)

    return kernel


# --------------------------------------------------------------------------
# Wrapper helpers
# --------------------------------------------------------------------------
def _fold_bn(bn, eps):
    scale = (bn["gamma"] / jnp.sqrt(bn["var"] + eps)).astype(jnp.float32)
    bias = (bn["beta"].astype(jnp.float32)
            - bn["mean"].astype(jnp.float32) * scale)
    return scale, bias.reshape(1, -1)


def _prep_weight(w_oihw, scale, use_im2col):
    # Fold per-output-channel BN scale into the conv weight (done once on the
    # XLA side, amortized over the batch), then OIHW -> (kh,kw,ci,co) layout.
    cout, cin = w_oihw.shape[0], w_oihw.shape[1]
    w = w_oihw.astype(jnp.float32) * scale.reshape(cout, 1, 1, 1)
    w = jnp.transpose(w, (2, 3, 1, 0))                 # (kh, kw, ci, co)
    if use_im2col:
        w = w.reshape(9 * cin, cout)                   # single K = 9*Cin dot
    else:
        w = w.reshape(9, cin, cout)                    # 9 accumulating dots
    return w.astype(jnp.bfloat16)


def _vmem_capacity_bytes():
    try:
        info = pltpu.get_tpu_info()
        for attr in ("vmem_capacity_bytes", "vmem_bytes", "vmem_size_bytes"):
            v = getattr(info, attr, None)
            if v:
                return int(v)
    except Exception:
        pass
    return 64 << 20        # conservative default: v7x per-TensorCore VMEM


def _tile_vmem_bytes(Bt, H, W, Cin, Cout, use_im2col):
    """Per-grid-step VMEM estimate, *including* matmul temporaries."""
    M = Bt * H * W
    b = 2 * Bt * H * W * (Cin + Cout) * 4              # 2x-buffered f32 x/out tiles
    b += 2 * 9 * (Cin + Cout) * Cout * 2               # bf16 weights (2 bufs)
    b += Bt * (H + 2) * (W + 2) * (Cin + Cout) * 4     # f32 padded scratches
    b += (9 if use_im2col else 1) * M * max(Cin, Cout) * 2   # patch / tap slice (bf16)
    b += 3 * M * Cout * 4                              # acc1 / out1 / acc2 (f32)
    return b


def _pick_bt(B, H, W, Cin, Cout, use_im2col, cap):
    """Batch-block size: feed the MXU (M ~>= 512) on small-spatial stages,
    keep the grid >= 2 (v7x two-TC split) and stay under the VMEM cap."""
    target = max(1, -(-512 // (H * W)))                # ceil(512 / (H*W))
    best = 1
    for bt in range(1, B + 1):
        if B % bt or bt > target:
            continue
        if B >= 2 and B // bt < 2:
            continue
        if 2 * _tile_vmem_bytes(bt, H, W, Cin, Cout, use_im2col) > cap:
            continue
        best = bt
    return best


# --------------------------------------------------------------------------
# Public forward
# --------------------------------------------------------------------------
def basic_block_forward(x_nchw, w1_oihw, bn1, w2_oihw, bn2, eps=1e-5):
    """BasicBlock forward. x_nchw: (B, C, H, W) f32; conv weights OIHW."""
    B, Cin, H, W = x_nchw.shape
    Cout = w1_oihw.shape[0]
    assert Cin == Cout, "identity path requires matching channels (downsample=None)"

    x = jnp.transpose(x_nchw, (0, 2, 3, 1)).astype(jnp.float32)   # NHWC

    use_im2col = min(Cin, Cout) >= 128        # lane-aligned concat only then

    s1, b1 = _fold_bn(bn1, eps)
    s2, b2 = _fold_bn(bn2, eps)
    w1 = _prep_weight(w1_oihw, s1, use_im2col)
    w2 = _prep_weight(w2_oihw, s2, use_im2col)

    cap = (_vmem_capacity_bytes() * 3) // 4   # ~48 MiB on v7x, ~96 MiB on v5e/v6e
    Bt = _pick_bt(B, H, W, Cin, Cout, use_im2col, cap)
    tile_bytes = _tile_vmem_bytes(Bt, H, W, Cin, Cout, use_im2col)
    vmem_limit = int(min(max(int(tile_bytes * 1.5) + (4 << 20), 16 << 20), cap))

    kernel = _make_kernel(Bt, H, W, Cin, Cout, use_im2col)

    if use_im2col:
        w_spec = lambda cin: pl.BlockSpec((9 * cin, Cout), lambda b: (0, 0))
    else:
        w_spec = lambda cin: pl.BlockSpec((9, cin, Cout), lambda b: (0, 0, 0))
    bias_spec = pl.BlockSpec((1, Cout), lambda b: (0, 0))

    out_nhwc = pl.pallas_call(
        kernel,
        out_shape=jax.ShapeDtypeStruct((B, H, W, Cout), jnp.float32),
        grid=(B // Bt,),
        in_specs=[
            pl.BlockSpec((Bt, H, W, Cin), lambda b: (b, 0, 0, 0)),
            w_spec(Cin),
            bias_spec,
            w_spec(Cout),
            bias_spec,
        ],
        out_specs=pl.BlockSpec((Bt, H, W, Cout), lambda b: (b, 0, 0, 0)),
        scratch_shapes=[
            pltpu.VMEM((Bt, H + 2, W + 2, Cin), jnp.float32),
            pltpu.VMEM((Bt, H + 2, W + 2, Cout), jnp.float32),
        ],
        compiler_params=pltpu.CompilerParams(
            dimension_semantics=("parallel",),
            vmem_limit_bytes=vmem_limit),
    )(x, w1, b1, w2, b2)

    return jnp.transpose(out_nhwc, (0, 3, 1, 2))       # back to NCHW


# --------------------------------------------------------------------------
# Pure-JAX reference (NCHW) for correctness checking
# --------------------------------------------------------------------------
def basic_block_reference(x, w1, bn1, w2, bn2, eps=1e-5):
    def conv(a, w):
        return jax.lax.conv_general_dilated(
            a, w, window_strides=(1, 1), padding=((1, 1), (1, 1)),
            dimension_numbers=("NCHW", "OIHW", "NCHW"))

    def bn(a, p):
        s = (p["gamma"] / jnp.sqrt(p["var"] + eps)).reshape(1, -1, 1, 1)
        b = (p["beta"] - p["mean"] * p["gamma"] / jnp.sqrt(p["var"] + eps)
             ).reshape(1, -1, 1, 1)
        return a * s + b

    out = jax.nn.relu(bn(conv(x, w1), bn1))
    out = bn(conv(out, w2), bn2)
    return jax.nn.relu(out + x)


if __name__ == "__main__":
    key = jax.random.PRNGKey(0)
    B, C, H, W = 2, 4, 16, 16  # inplanes == planes == 4, stride=1
    ks = jax.random.split(key, 11)

    x = jax.random.normal(ks[0], (B, C, H, W), jnp.float32)
    w1 = jax.random.normal(ks[1], (C, C, 3, 3), jnp.float32) * 0.2
    w2 = jax.random.normal(ks[2], (C, C, 3, 3), jnp.float32) * 0.2
    bn1 = dict(
        gamma=jax.random.uniform(ks[3], (C,), minval=0.8, maxval=1.2),
        beta=jax.random.normal(ks[4], (C,)) * 0.1,
        mean=jax.random.normal(ks[5], (C,)) * 0.1,
        var=jax.random.uniform(ks[6], (C,), minval=0.5, maxval=1.5),
    )
    bn2 = dict(
        gamma=jax.random.uniform(ks[7], (C,), minval=0.8, maxval=1.2),
        beta=jax.random.normal(ks[8], (C,)) * 0.1,
        mean=jax.random.normal(ks[9], (C,)) * 0.1,
        var=jax.random.uniform(ks[10], (C,), minval=0.5, maxval=1.5),
    )

    out = basic_block_forward(x, w1, bn1, w2, bn2)
    out = jax.block_until_ready(out)

    ref = basic_block_reference(x, w1, bn1, w2, bn2)
    assert out.shape == (B, C, H, W), out.shape
    np.testing.assert_allclose(np.asarray(out), np.asarray(ref),
                               atol=2e-2, rtol=2e-2)
    print("KERNEL_OK")
</pallas_src>

<mosaic_0001>
module attributes {stable_mosaic.version = 11 : i64} {
  func.func @kernel(%arg0: i32, %arg1: memref<1x16x16x4xf32, #tpu.memory_space<vmem>>, %arg2: memref<9x4x4xbf16, #tpu.memory_space<vmem>>, %arg3: memref<1x4xf32, #tpu.memory_space<vmem>>, %arg4: memref<9x4x4xbf16, #tpu.memory_space<vmem>>, %arg5: memref<1x4xf32, #tpu.memory_space<vmem>>, %arg6: memref<1x16x16x4xf32, #tpu.memory_space<vmem>>, %arg7: memref<1x18x18x4xf32, #tpu.memory_space<vmem>>, %arg8: memref<1x18x18x4xf32, #tpu.memory_space<vmem>>) attributes {dimension_semantics = [#tpu.dimension_semantics<parallel>], iteration_bounds = array<i64: 2>, scalar_prefetch = 0 : i64, scratch_operands = 2 : i64, tpu.core_type = #tpu.core_type<tc>, window_params = [{transform_indices = @transform_0, window_bounds = array<i64: 1, 16, 16, 4>}, {pipeline_mode = #tpu.pipeline_mode<synchronous>, transform_indices = @transform_1, window_bounds = array<i64: 9, 4, 4>}, {pipeline_mode = #tpu.pipeline_mode<synchronous>, transform_indices = @transform_2, window_bounds = array<i64: 1, 4>}, {pipeline_mode = #tpu.pipeline_mode<synchronous>, transform_indices = @transform_3, window_bounds = array<i64: 9, 4, 4>}, {pipeline_mode = #tpu.pipeline_mode<synchronous>, transform_indices = @transform_4, window_bounds = array<i64: 1, 4>}, {transform_indices = @transform_5, window_bounds = array<i64: 1, 16, 16, 4>}]} {
    %cst = arith.constant 0.000000e+00 : f32
    %0 = vector.broadcast %cst : f32 to vector<1x1x18x4xf32>
    %cst_0 = arith.constant 0.000000e+00 : f32
    %1 = vector.broadcast %cst_0 : f32 to vector<1x18x1x4xf32>
    %c0 = arith.constant 0 : index
    %c0_1 = arith.constant 0 : index
    %c0_2 = arith.constant 0 : index
    %c0_3 = arith.constant 0 : index
    %2 = vector.load %arg7[%c0, %c0_1, %c0_2, %c0_3] : memref<1x18x18x4xf32, #tpu.memory_space<vmem>>, vector<1x1x18x4xf32>
    tpu.vector_store %arg7[%c0, %c0_1, %c0_2, %c0_3], %0 {strides = array<i32>} : memref<1x18x18x4xf32, #tpu.memory_space<vmem>>, vector<1x1x18x4xf32>,
    %c0_4 = arith.constant 0 : index
    %c17 = arith.constant 17 : index
    %c0_5 = arith.constant 0 : index
    %c0_6 = arith.constant 0 : index
    %3 = vector.load %arg7[%c0_4, %c17, %c0_5, %c0_6] : memref<1x18x18x4xf32, #tpu.memory_space<vmem>>, vector<1x1x18x4xf32>
    tpu.vector_store %arg7[%c0_4, %c17, %c0_5, %c0_6], %0 {strides = array<i32>} : memref<1x18x18x4xf32, #tpu.memory_space<vmem>>, vector<1x1x18x4xf32>,
    %c0_7 = arith.constant 0 : index
    %c0_8 = arith.constant 0 : index
    %c0_9 = arith.constant 0 : index
    %c0_10 = arith.constant 0 : index
    %4 = vector.load %arg7[%c0_7, %c0_8, %c0_9, %c0_10] : memref<1x18x18x4xf32, #tpu.memory_space<vmem>>, vector<1x18x1x4xf32>
    tpu.vector_store %arg7[%c0_7, %c0_8, %c0_9, %c0_10], %1 {strides = array<i32>} : memref<1x18x18x4xf32, #tpu.memory_space<vmem>>, vector<1x18x1x4xf32>,
    %c0_11 = arith.constant 0 : index
    %c0_12 = arith.constant 0 : index
    %c17_13 = arith.constant 17 : index
    %c0_14 = arith.constant 0 : index
    %5 = vector.load %arg7[%c0_11, %c0_12, %c17_13, %c0_14] : memref<1x18x18x4xf32, #tpu.memory_space<vmem>>, vector<1x18x1x4xf32>
    tpu.vector_store %arg7[%c0_11, %c0_12, %c17_13, %c0_14], %1 {strides = array<i32>} : memref<1x18x18x4xf32, #tpu.memory_space<vmem>>, vector<1x18x1x4xf32>,
    %c0_15 = arith.constant 0 : index
    %c0_16 = arith.constant 0 : index
    %c0_17 = arith.constant 0 : index
    %c0_18 = arith.constant 0 : index
    %6 = vector.load %arg1[%c0_15, %c0_16, %c0_17, %c0_18] : memref<1x16x16x4xf32, #tpu.memory_space<vmem>>, vector<1x16x16x4xf32>
    %c0_19 = arith.constant 0 : index
    %c1 = arith.constant 1 : index
    %c1_20 = arith.constant 1 : index
    %c0_21 = arith.constant 0 : index
    %7 = vector.load %arg7[%c0_19, %c1, %c1_20, %c0_21] : memref<1x18x18x4xf32, #tpu.memory_space<vmem>>, vector<1x16x16x4xf32>
    tpu.vector_store %arg7[%c0_19, %c1, %c1_20, %c0_21], %6 {strides = array<i32>} : memref<1x18x18x4xf32, #tpu.memory_space<vmem>>, vector<1x16x16x4xf32>,
    %cst_22 = arith.constant 0.000000e+00 : f32
    %8 = vector.broadcast %cst_22 : f32 to vector<256x4xf32>
    %c0_23 = arith.constant 0 : index
    %c0_24 = arith.constant 0 : index
    %c0_25 = arith.constant 0 : index
    %c0_26 = arith.constant 0 : index
    %9 = vector.load %arg7[%c0_23, %c0_24, %c0_25, %c0_26] : memref<1x18x18x4xf32, #tpu.memory_space<vmem>>, vector<1x16x16x4xf32>
    %10 = arith.truncf %9 : vector<1x16x16x4xf32> to vector<1x16x16x4xbf16>
    %11 = vector.shape_cast %10 : vector<1x16x16x4xbf16> to vector<256x4xbf16>
    %c0_27 = arith.constant 0 : index
    %c0_28 = arith.constant 0 : index
    %c0_29 = arith.constant 0 : index
    %12 = vector.load %arg2[%c0_27, %c0_28, %c0_29] : memref<9x4x4xbf16, #tpu.memory_space<vmem>>, vector<1x4x4xbf16>
    %13 = vector.shape_cast %12 : vector<1x4x4xbf16> to vector<4x4xbf16>
    %cst_30 = arith.constant dense<0.000000e+00> : vector<256x4xf32>
    %14 = tpu.matmul %11, %13, %cst_30 {dimension_numbers = #tpu.dot_dimension_numbers<[1], [0], [0], [1], [0, 0, 1, 1], [], []>} : vector<256x4xbf16>, vector<4x4xbf16>, vector<256x4xf32> -> vector<256x4xf32>
    %15 = arith.addf %8, %14 : vector<256x4xf32>
    %c0_31 = arith.constant 0 : index
    %c0_32 = arith.constant 0 : index
    %c1_33 = arith.constant 1 : index
    %c0_34 = arith.constant 0 : index
    %16 = vector.load %arg7[%c0_31, %c0_32, %c1_33, %c0_34] : memref<1x18x18x4xf32, #tpu.memory_space<vmem>>, vector<1x16x16x4xf32>
    %17 = arith.truncf %16 : vector<1x16x16x4xf32> to vector<1x16x16x4xbf16>
    %18 = vector.shape_cast %17 : vector<1x16x16x4xbf16> to vector<256x4xbf16>
    %c1_35 = arith.constant 1 : index
    %c0_36 = arith.constant 0 : index
    %c0_37 = arith.constant 0 : index
    %19 = vector.load %arg2[%c1_35, %c0_36, %c0_37] : memref<9x4x4xbf16, #tpu.memory_space<vmem>>, vector<1x4x4xbf16>
    %20 = vector.shape_cast %19 : vector<1x4x4xbf16> to vector<4x4xbf16>
    %cst_38 = arith.constant dense<0.000000e+00> : vector<256x4xf32>
    %21 = tpu.matmul %18, %20, %cst_38 {dimension_numbers = #tpu.dot_dimension_numbers<[1], [0], [0], [1], [0, 0, 1, 1], [], []>} : vector<256x4xbf16>, vector<4x4xbf16>, vector<256x4xf32> -> vector<256x4xf32>
    %22 = arith.addf %15, %21 : vector<256x4xf32>
    %c0_39 = arith.constant 0 : index
    %c0_40 = arith.constant 0 : index
    %c2 = arith.constant 2 : index
    %c0_41 = arith.constant 0 : index
    %23 = vector.load %arg7[%c0_39, %c0_40, %c2, %c0_41] : memref<1x18x18x4xf32, #tpu.memory_space<vmem>>, vector<1x16x16x4xf32>
    %24 = arith.truncf %23 : vector<1x16x16x4xf32> to vector<1x16x16x4xbf16>
    %25 = vector.shape_cast %24 : vector<1x16x16x4xbf16> to vector<256x4xbf16>
    %c2_42 = arith.constant 2 : index
    %c0_43 = arith.constant 0 : index
    %c0_44 = arith.constant 0 : index
    %26 = vector.load %arg2[%c2_42, %c0_43, %c0_44] : memref<9x4x4xbf16, #tpu.memory_space<vmem>>, vector<1x4x4xbf16>
    %27 = vector.shape_cast %26 : vector<1x4x4xbf16> to vector<4x4xbf16>
    %cst_45 = arith.constant dense<0.000000e+00> : vector<256x4xf32>
    %28 = tpu.matmul %25, %27, %cst_45 {dimension_numbers = #tpu.dot_dimension_numbers<[1], [0], [0], [1], [0, 0, 1, 1], [], []>} : vector<256x4xbf16>, vector<4x4xbf16>, vector<256x4xf32> -> vector<256x4xf32>
    %29 = arith.addf %22, %28 : vector<256x4xf32>
    %c0_46 = arith.constant 0 : index
    %c1_47 = arith.constant 1 : index
    %c0_48 = arith.constant 0 : index
    %c0_49 = arith.constant 0 : index
    %30 = vector.load %arg7[%c0_46, %c1_47, %c0_48, %c0_49] : memref<1x18x18x4xf32, #tpu.memory_space<vmem>>, vector<1x16x16x4xf32>
    %31 = arith.truncf %30 : vector<1x16x16x4xf32> to vector<1x16x16x4xbf16>
    %32 = vector.shape_cast %31 : vector<1x16x16x4xbf16> to vector<256x4xbf16>
    %c3 = arith.constant 3 : index
    %c0_50 = arith.constant 0 : index
    %c0_51 = arith.constant 0 : index
    %33 = vector.load %arg2[%c3, %c0_50, %c0_51] : memref<9x4x4xbf16, #tpu.memory_space<vmem>>, vector<1x4x4xbf16>
    %34 = vector.shape_cast %33 : vector<1x4x4xbf16> to vector<4x4xbf16>
    %cst_52 = arith.constant dense<0.000000e+00> : vector<256x4xf32>
    %35 = tpu.matmul %32, %34, %cst_52 {dimension_numbers = #tpu.dot_dimension_numbers<[1], [0], [0], [1], [0, 0, 1, 1], [], []>} : vector<256x4xbf16>, vector<4x4xbf16>, vector<256x4xf32> -> vector<256x4xf32>
    %36 = arith.addf %29, %35 : vector<256x4xf32>
    %c0_53 = arith.constant 0 : index
    %c1_54 = arith.constant 1 : index
    %c1_55 = arith.constant 1 : index
    %c0_56 = arith.constant 0 : index
    %37 = vector.load %arg7[%c0_53, %c1_54, %c1_55, %c0_56] : memref<1x18x18x4xf32, #tpu.memory_space<vmem>>, vector<1x16x16x4xf32>
    %38 = arith.truncf %37 : vector<1x16x16x4xf32> to vector<1x16x16x4xbf16>
    %39 = vector.shape_cast %38 : vector<1x16x16x4xbf16> to vector<256x4xbf16>
    %c4 = arith.constant 4 : index
    %c0_57 = arith.constant 0 : index
    %c0_58 = arith.constant 0 : index
    %40 = vector.load %arg2[%c4, %c0_57, %c0_58] : memref<9x4x4xbf16, #tpu.memory_space<vmem>>, vector<1x4x4xbf16>
    %41 = vector.shape_cast %40 : vector<1x4x4xbf16> to vector<4x4xbf16>
    %cst_59 = arith.constant dense<0.000000e+00> : vector<256x4xf32>
    %42 = tpu.matmul %39, %41, %cst_59 {dimension_numbers = #tpu.dot_dimension_numbers<[1], [0], [0], [1], [0, 0, 1, 1], [], []>} : vector<256x4xbf16>, vector<4x4xbf16>, vector<256x4xf32> -> vector<256x4xf32>
    %43 = arith.addf %36, %42 : vector<256x4xf32>
    %c0_60 = arith.constant 0 : index
    %c1_61 = arith.constant 1 : index
    %c2_62 = arith.constant 2 : index
    %c0_63 = arith.constant 0 : index
    %44 = vector.load %arg7[%c0_60, %c1_61, %c2_62, %c0_63] : memref<1x18x18x4xf32, #tpu.memory_space<vmem>>, vector<1x16x16x4xf32>
    %45 = arith.truncf %44 : vector<1x16x16x4xf32> to vector<1x16x16x4xbf16>
    %46 = vector.shape_cast %45 : vector<1x16x16x4xbf16> to vector<256x4xbf16>
    %c5 = arith.constant 5 : index
    %c0_64 = arith.constant 0 : index
    %c0_65 = arith.constant 0 : index
    %47 = vector.load %arg2[%c5, %c0_64, %c0_65] : memref<9x4x4xbf16, #tpu.memory_space<vmem>>, vector<1x4x4xbf16>
    %48 = vector.shape_cast %47 : vector<1x4x4xbf16> to vector<4x4xbf16>
    %cst_66 = arith.constant dense<0.000000e+00> : vector<256x4xf32>
    %49 = tpu.matmul %46, %48, %cst_66 {dimension_numbers = #tpu.dot_dimension_numbers<[1], [0], [0], [1], [0, 0, 1, 1], [], []>} : vector<256x4xbf16>, vector<4x4xbf16>, vector<256x4xf32> -> vector<256x4xf32>
    %50 = arith.addf %43, %49 : vector<256x4xf32>
    %c0_67 = arith.constant 0 : index
    %c2_68 = arith.constant 2 : index
    %c0_69 = arith.constant 0 : index
    %c0_70 = arith.constant 0 : index
    %51 = vector.load %arg7[%c0_67, %c2_68, %c0_69, %c0_70] : memref<1x18x18x4xf32, #tpu.memory_space<vmem>>, vector<1x16x16x4xf32>
    %52 = arith.truncf %51 : vector<1x16x16x4xf32> to vector<1x16x16x4xbf16>
    %53 = vector.shape_cast %52 : vector<1x16x16x4xbf16> to vector<256x4xbf16>
    %c6 = arith.constant 6 : index
    %c0_71 = arith.constant 0 : index
    %c0_72 = arith.constant 0 : index
    %54 = vector.load %arg2[%c6, %c0_71, %c0_72] : memref<9x4x4xbf16, #tpu.memory_space<vmem>>, vector<1x4x4xbf16>
    %55 = vector.shape_cast %54 : vector<1x4x4xbf16> to vector<4x4xbf16>
    %cst_73 = arith.constant dense<0.000000e+00> : vector<256x4xf32>
    %56 = tpu.matmul %53, %55, %cst_73 {dimension_numbers = #tpu.dot_dimension_numbers<[1], [0], [0], [1], [0, 0, 1, 1], [], []>} : vector<256x4xbf16>, vector<4x4xbf16>, vector<256x4xf32> -> vector<256x4xf32>
    %57 = arith.addf %50, %56 : vector<256x4xf32>
    %c0_74 = arith.constant 0 : index
    %c2_75 = arith.constant 2 : index
    %c1_76 = arith.constant 1 : index
    %c0_77 = arith.constant 0 : index
    %58 = vector.load %arg7[%c0_74, %c2_75, %c1_76, %c0_77] : memref<1x18x18x4xf32, #tpu.memory_space<vmem>>, vector<1x16x16x4xf32>
    %59 = arith.truncf %58 : vector<1x16x16x4xf32> to vector<1x16x16x4xbf16>
    %60 = vector.shape_cast %59 : vector<1x16x16x4xbf16> to vector<256x4xbf16>
    %c7 = arith.constant 7 : index
    %c0_78 = arith.constant 0 : index
    %c0_79 = arith.constant 0 : index
    %61 = vector.load %arg2[%c7, %c0_78, %c0_79] : memref<9x4x4xbf16, #tpu.memory_space<vmem>>, vector<1x4x4xbf16>
    %62 = vector.shape_cast %61 : vector<1x4x4xbf16> to vector<4x4xbf16>
    %cst_80 = arith.constant dense<0.000000e+00> : vector<256x4xf32>
    %63 = tpu.matmul %60, %62, %cst_80 {dimension_numbers = #tpu.dot_dimension_numbers<[1], [0], [0], [1], [0, 0, 1, 1], [], []>} : vector<256x4xbf16>, vector<4x4xbf16>, vector<256x4xf32> -> vector<256x4xf32>
    %64 = arith.addf %57, %63 : vector<256x4xf32>
    %c0_81 = arith.constant 0 : index
    %c2_82 = arith.constant 2 : index
    %c2_83 = arith.constant 2 : index
    %c0_84 = arith.constant 0 : index
    %65 = vector.load %arg7[%c0_81, %c2_82, %c2_83, %c0_84] : memref<1x18x18x4xf32, #tpu.memory_space<vmem>>, vector<1x16x16x4xf32>
    %66 = arith.truncf %65 : vector<1x16x16x4xf32> to vector<1x16x16x4xbf16>
    %67 = vector.shape_cast %66 : vector<1x16x16x4xbf16> to vector<256x4xbf16>
    %c8 = arith.constant 8 : index
    %c0_85 = arith.constant 0 : index
    %c0_86 = arith.constant 0 : index
    %68 = vector.load %arg2[%c8, %c0_85, %c0_86] : memref<9x4x4xbf16, #tpu.memory_space<vmem>>, vector<1x4x4xbf16>
    %69 = vector.shape_cast %68 : vector<1x4x4xbf16> to vector<4x4xbf16>
    %cst_87 = arith.constant dense<0.000000e+00> : vector<256x4xf32>
    %70 = tpu.matmul %67, %69, %cst_87 {dimension_numbers = #tpu.dot_dimension_numbers<[1], [0], [0], [1], [0, 0, 1, 1], [], []>} : vector<256x4xbf16>, vector<4x4xbf16>, vector<256x4xf32> -> vector<256x4xf32>
    %71 = arith.addf %64, %70 : vector<256x4xf32>
    %c0_88 = arith.constant 0 : index
    %c0_89 = arith.constant 0 : index
    %72 = vector.load %arg3[%c0_88, %c0_89] : memref<1x4xf32, #tpu.memory_space<vmem>>, vector<1x4xf32>
    %73 = vector.broadcast %72 : vector<1x4xf32> to vector<256x4xf32>
    %74 = arith.addf %71, %73 : vector<256x4xf32>
    %cst_90 = arith.constant 0.000000e+00 : f32
    %75 = vector.broadcast %cst_90 : f32 to vector<256x4xf32>
    %76 = arith.maximumf %74, %75 : vector<256x4xf32>
    %cst_91 = arith.constant 0.000000e+00 : f32
    %77 = vector.broadcast %cst_91 : f32 to vector<1x1x18x4xf32>
    %cst_92 = arith.constant 0.000000e+00 : f32
    %78 = vector.broadcast %cst_92 : f32 to vector<1x18x1x4xf32>
    %c0_93 = arith.constant 0 : index
    %c0_94 = arith.constant 0 : index
    %c0_95 = arith.constant 0 : index
    %c0_96 = arith.constant 0 : index
    %79 = vector.load %arg8[%c0_93, %c0_94, %c0_95, %c0_96] : memref<1x18x18x4xf32, #tpu.memory_space<vmem>>, vector<1x1x18x4xf32>
    tpu.vector_store %arg8[%c0_93, %c0_94, %c0_95, %c0_96], %77 {strides = array<i32>} : memref<1x18x18x4xf32, #tpu.memory_space<vmem>>, vector<1x1x18x4xf32>,
    %c0_97 = arith.constant 0 : index
    %c17_98 = arith.constant 17 : index
    %c0_99 = arith.constant 0 : index
    %c0_100 = arith.constant 0 : index
    %80 = vector.load %arg8[%c0_97, %c17_98, %c0_99, %c0_100] : memref<1x18x18x4xf32, #tpu.memory_space<vmem>>, vector<1x1x18x4xf32>
    tpu.vector_store %arg8[%c0_97, %c17_98, %c0_99, %c0_100], %77 {strides = array<i32>} : memref<1x18x18x4xf32, #tpu.memory_space<vmem>>, vector<1x1x18x4xf32>,
    %c0_101 = arith.constant 0 : index
    %c0_102 = arith.constant 0 : index
    %c0_103 = arith.constant 0 : index
    %c0_104 = arith.constant 0 : index
    %81 = vector.load %arg8[%c0_101, %c0_102, %c0_103, %c0_104] : memref<1x18x18x4xf32, #tpu.memory_space<vmem>>, vector<1x18x1x4xf32>
    tpu.vector_store %arg8[%c0_101, %c0_102, %c0_103, %c0_104], %78 {strides = array<i32>} : memref<1x18x18x4xf32, #tpu.memory_space<vmem>>, vector<1x18x1x4xf32>,
    %c0_105 = arith.constant 0 : index
    %c0_106 = arith.constant 0 : index
    %c17_107 = arith.constant 17 : index
    %c0_108 = arith.constant 0 : index
    %82 = vector.load %arg8[%c0_105, %c0_106, %c17_107, %c0_108] : memref<1x18x18x4xf32, #tpu.memory_space<vmem>>, vector<1x18x1x4xf32>
    tpu.vector_store %arg8[%c0_105, %c0_106, %c17_107, %c0_108], %78 {strides = array<i32>} : memref<1x18x18x4xf32, #tpu.memory_space<vmem>>, vector<1x18x1x4xf32>,
    %83 = vector.shape_cast %76 : vector<256x4xf32> to vector<1x16x16x4xf32>
    %c0_109 = arith.constant 0 : index
    %c1_110 = arith.constant 1 : index
    %c1_111 = arith.constant 1 : index
    %c0_112 = arith.constant 0 : index
    %84 = vector.load %arg8[%c0_109, %c1_110, %c1_111, %c0_112] : memref<1x18x18x4xf32, #tpu.memory_space<vmem>>, vector<1x16x16x4xf32>
    tpu.vector_store %arg8[%c0_109, %c1_110, %c1_111, %c0_112], %83 {strides = array<i32>} : memref<1x18x18x4xf32, #tpu.memory_space<vmem>>, vector<1x16x16x4xf32>,
    %cst_113 = arith.constant 0.000000e+00 : f32
    %85 = vector.broadcast %cst_113 : f32 to vector<256x4xf32>
    %c0_114 = arith.constant 0 : index
    %c0_115 = arith.constant 0 : index
    %c0_116 = arith.constant 0 : index
    %c0_117 = arith.constant 0 : index
    %86 = vector.load %arg8[%c0_114, %c0_115, %c0_116, %c0_117] : memref<1x18x18x4xf32, #tpu.memory_space<vmem>>, vector<1x16x16x4xf32>
    %87 = arith.truncf %86 : vector<1x16x16x4xf32> to vector<1x16x16x4xbf16>
    %88 = vector.shape_cast %87 : vector<1x16x16x4xbf16> to vector<256x4xbf16>
    %c0_118 = arith.constant 0 : index
    %c0_119 = arith.constant 0 : index
    %c0_120 = arith.constant 0 : index
    %89 = vector.load %arg4[%c0_118, %c0_119, %c0_120] : memref<9x4x4xbf16, #tpu.memory_space<vmem>>, vector<1x4x4xbf16>
    %90 = vector.shape_cast %89 : vector<1x4x4xbf16> to vector<4x4xbf16>
    %cst_121 = arith.constant dense<0.000000e+00> : vector<256x4xf32>
    %91 = tpu.matmul %88, %90, %cst_121 {dimension_numbers = #tpu.dot_dimension_numbers<[1], [0], [0], [1], [0, 0, 1, 1], [], []>} : vector<256x4xbf16>, vector<4x4xbf16>, vector<256x4xf32> -> vector<256x4xf32>
    %92 = arith.addf %85, %91 : vector<256x4xf32>
    %c0_122 = arith.constant 0 : index
    %c0_123 = arith.constant 0 : index
    %c1_124 = arith.constant 1 : index
    %c0_125 = arith.constant 0 : index
    %93 = vector.load %arg8[%c0_122, %c0_123, %c1_124, %c0_125] : memref<1x18x18x4xf32, #tpu.memory_space<vmem>>, vector<1x16x16x4xf32>
    %94 = arith.truncf %93 : vector<1x16x16x4xf32> to vector<1x16x16x4xbf16>
    %95 = vector.shape_cast %94 : vector<1x16x16x4xbf16> to vector<256x4xbf16>
    %c1_126 = arith.constant 1 : index
    %c0_127 = arith.constant 0 : index
    %c0_128 = arith.constant 0 : index
    %96 = vector.load %arg4[%c1_126, %c0_127, %c0_128] : memref<9x4x4xbf16, #tpu.memory_space<vmem>>, vector<1x4x4xbf16>
    %97 = vector.shape_cast %96 : vector<1x4x4xbf16> to vector<4x4xbf16>
    %cst_129 = arith.constant dense<0.000000e+00> : vector<256x4xf32>
    %98 = tpu.matmul %95, %97, %cst_129 {dimension_numbers = #tpu.dot_dimension_numbers<[1], [0], [0], [1], [0, 0, 1, 1], [], []>} : vector<256x4xbf16>, vector<4x4xbf16>, vector<256x4xf32> -> vector<256x4xf32>
    %99 = arith.addf %92, %98 : vector<256x4xf32>
    %c0_130 = arith.constant 0 : index
    %c0_131 = arith.constant 0 : index
    %c2_132 = arith.constant 2 : index
    %c0_133 = arith.constant 0 : index
    %100 = vector.load %arg8[%c0_130, %c0_131, %c2_132, %c0_133] : memref<1x18x18x4xf32, #tpu.memory_space<vmem>>, vector<1x16x16x4xf32>
    %101 = arith.truncf %100 : vector<1x16x16x4xf32> to vector<1x16x16x4xbf16>
    %102 = vector.shape_cast %101 : vector<1x16x16x4xbf16> to vector<256x4xbf16>
    %c2_134 = arith.constant 2 : index
    %c0_135 = arith.constant 0 : index
    %c0_136 = arith.constant 0 : index
    %103 = vector.load %arg4[%c2_134, %c0_135, %c0_136] : memref<9x4x4xbf16, #tpu.memory_space<vmem>>, vector<1x4x4xbf16>
    %104 = vector.shape_cast %103 : vector<1x4x4xbf16> to vector<4x4xbf16>
    %cst_137 = arith.constant dense<0.000000e+00> : vector<256x4xf32>
    %105 = tpu.matmul %102, %104, %cst_137 {dimension_numbers = #tpu.dot_dimension_numbers<[1], [0], [0], [1], [0, 0, 1, 1], [], []>} : vector<256x4xbf16>, vector<4x4xbf16>, vector<256x4xf32> -> vector<256x4xf32>
    %106 = arith.addf %99, %105 : vector<256x4xf32>
    %c0_138 = arith.constant 0 : index
    %c1_139 = arith.constant 1 : index
    %c0_140 = arith.constant 0 : index
    %c0_141 = arith.constant 0 : index
    %107 = vector.load %arg8[%c0_138, %c1_139, %c0_140, %c0_141] : memref<1x18x18x4xf32, #tpu.memory_space<vmem>>, vector<1x16x16x4xf32>
    %108 = arith.truncf %107 : vector<1x16x16x4xf32> to vector<1x16x16x4xbf16>
    %109 = vector.shape_cast %108 : vector<1x16x16x4xbf16> to vector<256x4xbf16>
    %c3_142 = arith.constant 3 : index
    %c0_143 = arith.constant 0 : index
    %c0_144 = arith.constant 0 : index
    %110 = vector.load %arg4[%c3_142, %c0_143, %c0_144] : memref<9x4x4xbf16, #tpu.memory_space<vmem>>, vector<1x4x4xbf16>
    %111 = vector.shape_cast %110 : vector<1x4x4xbf16> to vector<4x4xbf16>
    %cst_145 = arith.constant dense<0.000000e+00> : vector<256x4xf32>
    %112 = tpu.matmul %109, %111, %cst_145 {dimension_numbers = #tpu.dot_dimension_numbers<[1], [0], [0], [1], [0, 0, 1, 1], [], []>} : vector<256x4xbf16>, vector<4x4xbf16>, vector<256x4xf32> -> vector<256x4xf32>
    %113 = arith.addf %106, %112 : vector<256x4xf32>
    %c0_146 = arith.constant 0 : index
    %c1_147 = arith.constant 1 : index
    %c1_148 = arith.constant 1 : index
    %c0_149 = arith.constant 0 : index
    %114 = vector.load %arg8[%c0_146, %c1_147, %c1_148, %c0_149] : memref<1x18x18x4xf32, #tpu.memory_space<vmem>>, vector<1x16x16x4xf32>
    %115 = arith.truncf %114 : vector<1x16x16x4xf32> to vector<1x16x16x4xbf16>
    %116 = vector.shape_cast %115 : vector<1x16x16x4xbf16> to vector<256x4xbf16>
    %c4_150 = arith.constant 4 : index
    %c0_151 = arith.constant 0 : index
    %c0_152 = arith.constant 0 : index
    %117 = vector.load %arg4[%c4_150, %c0_151, %c0_152] : memref<9x4x4xbf16, #tpu.memory_space<vmem>>, vector<1x4x4xbf16>
    %118 = vector.shape_cast %117 : vector<1x4x4xbf16> to vector<4x4xbf16>
    %cst_153 = arith.constant dense<0.000000e+00> : vector<256x4xf32>
    %119 = tpu.matmul %116, %118, %cst_153 {dimension_numbers = #tpu.dot_dimension_numbers<[1], [0], [0], [1], [0, 0, 1, 1], [], []>} : vector<256x4xbf16>, vector<4x4xbf16>, vector<256x4xf32> -> vector<256x4xf32>
    %120 = arith.addf %113, %119 : vector<256x4xf32>
    %c0_154 = arith.constant 0 : index
    %c1_155 = arith.constant 1 : index
    %c2_156 = arith.constant 2 : index
    %c0_157 = arith.constant 0 : index
    %121 = vector.load %arg8[%c0_154, %c1_155, %c2_156, %c0_157] : memref<1x18x18x4xf32, #tpu.memory_space<vmem>>, vector<1x16x16x4xf32>
    %122 = arith.truncf %121 : vector<1x16x16x4xf32> to vector<1x16x16x4xbf16>
    %123 = vector.shape_cast %122 : vector<1x16x16x4xbf16> to vector<256x4xbf16>
    %c5_158 = arith.constant 5 : index
    %c0_159 = arith.constant 0 : index
    %c0_160 = arith.constant 0 : index
    %124 = vector.load %arg4[%c5_158, %c0_159, %c0_160] : memref<9x4x4xbf16, #tpu.memory_space<vmem>>, vector<1x4x4xbf16>
    %125 = vector.shape_cast %124 : vector<1x4x4xbf16> to vector<4x4xbf16>
    %cst_161 = arith.constant dense<0.000000e+00> : vector<256x4xf32>
    %126 = tpu.matmul %123, %125, %cst_161 {dimension_numbers = #tpu.dot_dimension_numbers<[1], [0], [0], [1], [0, 0, 1, 1], [], []>} : vector<256x4xbf16>, vector<4x4xbf16>, vector<256x4xf32> -> vector<256x4xf32>
    %127 = arith.addf %120, %126 : vector<256x4xf32>
    %c0_162 = arith.constant 0 : index
    %c2_163 = arith.constant 2 : index
    %c0_164 = arith.constant 0 : index
    %c0_165 = arith.constant 0 : index
    %128 = vector.load %arg8[%c0_162, %c2_163, %c0_164, %c0_165] : memref<1x18x18x4xf32, #tpu.memory_space<vmem>>, vector<1x16x16x4xf32>
    %129 = arith.truncf %128 : vector<1x16x16x4xf32> to vector<1x16x16x4xbf16>
    %130 = vector.shape_cast %129 : vector<1x16x16x4xbf16> to vector<256x4xbf16>
    %c6_166 = arith.constant 6 : index
    %c0_167 = arith.constant 0 : index
    %c0_168 = arith.constant 0 : index
    %131 = vector.load %arg4[%c6_166, %c0_167, %c0_168] : memref<9x4x4xbf16, #tpu.memory_space<vmem>>, vector<1x4x4xbf16>
    %132 = vector.shape_cast %131 : vector<1x4x4xbf16> to vector<4x4xbf16>
    %cst_169 = arith.constant dense<0.000000e+00> : vector<256x4xf32>
    %133 = tpu.matmul %130, %132, %cst_169 {dimension_numbers = #tpu.dot_dimension_numbers<[1], [0], [0], [1], [0, 0, 1, 1], [], []>} : vector<256x4xbf16>, vector<4x4xbf16>, vector<256x4xf32> -> vector<256x4xf32>
    %134 = arith.addf %127, %133 : vector<256x4xf32>
    %c0_170 = arith.constant 0 : index
    %c2_171 = arith.constant 2 : index
    %c1_172 = arith.constant 1 : index
    %c0_173 = arith.constant 0 : index
    %135 = vector.load %arg8[%c0_170, %c2_171, %c1_172, %c0_173] : memref<1x18x18x4xf32, #tpu.memory_space<vmem>>, vector<1x16x16x4xf32>
    %136 = arith.truncf %135 : vector<1x16x16x4xf32> to vector<1x16x16x4xbf16>
    %137 = vector.shape_cast %136 : vector<1x16x16x4xbf16> to vector<256x4xbf16>
    %c7_174 = arith.constant 7 : index
    %c0_175 = arith.constant 0 : index
    %c0_176 = arith.constant 0 : index
    %138 = vector.load %arg4[%c7_174, %c0_175, %c0_176] : memref<9x4x4xbf16, #tpu.memory_space<vmem>>, vector<1x4x4xbf16>
    %139 = vector.shape_cast %138 : vector<1x4x4xbf16> to vector<4x4xbf16>
    %cst_177 = arith.constant dense<0.000000e+00> : vector<256x4xf32>
    %140 = tpu.matmul %137, %139, %cst_177 {dimension_numbers = #tpu.dot_dimension_numbers<[1], [0], [0], [1], [0, 0, 1, 1], [], []>} : vector<256x4xbf16>, vector<4x4xbf16>, vector<256x4xf32> -> vector<256x4xf32>
    %141 = arith.addf %134, %140 : vector<256x4xf32>
    %c0_178 = arith.constant 0 : index
    %c2_179 = arith.constant 2 : index
    %c2_180 = arith.constant 2 : index
    %c0_181 = arith.constant 0 : index
    %142 = vector.load %arg8[%c0_178, %c2_179, %c2_180, %c0_181] : memref<1x18x18x4xf32, #tpu.memory_space<vmem>>, vector<1x16x16x4xf32>
    %143 = arith.truncf %142 : vector<1x16x16x4xf32> to vector<1x16x16x4xbf16>
    %144 = vector.shape_cast %143 : vector<1x16x16x4xbf16> to vector<256x4xbf16>
    %c8_182 = arith.constant 8 : index
    %c0_183 = arith.constant 0 : index
    %c0_184 = arith.constant 0 : index
    %145 = vector.load %arg4[%c8_182, %c0_183, %c0_184] : memref<9x4x4xbf16, #tpu.memory_space<vmem>>, vector<1x4x4xbf16>
    %146 = vector.shape_cast %145 : vector<1x4x4xbf16> to vector<4x4xbf16>
    %cst_185 = arith.constant dense<0.000000e+00> : vector<256x4xf32>
    %147 = tpu.matmul %144, %146, %cst_185 {dimension_numbers = #tpu.dot_dimension_numbers<[1], [0], [0], [1], [0, 0, 1, 1], [], []>} : vector<256x4xbf16>, vector<4x4xbf16>, vector<256x4xf32> -> vector<256x4xf32>
    %148 = arith.addf %141, %147 : vector<256x4xf32>
    %c0_186 = arith.constant 0 : index
    %c0_187 = arith.constant 0 : index
    %149 = vector.load %arg5[%c0_186, %c0_187] : memref<1x4xf32, #tpu.memory_space<vmem>>, vector<1x4xf32>
    %150 = vector.broadcast %149 : vector<1x4xf32> to vector<256x4xf32>
    %151 = arith.addf %148, %150 : vector<256x4xf32>
    %152 = vector.shape_cast %151 : vector<256x4xf32> to vector<1x16x16x4xf32>
    %c0_188 = arith.constant 0 : index
    %c0_189 = arith.constant 0 : index
    %c0_190 = arith.constant 0 : index
    %c0_191 = arith.constant 0 : index
    %153 = vector.load %arg1[%c0_188, %c0_189, %c0_190, %c0_191] : memref<1x16x16x4xf32, #tpu.memory_space<vmem>>, vector<1x16x16x4xf32>
    %154 = arith.addf %152, %153 : vector<1x16x16x4xf32>
    %cst_192 = arith.constant 0.000000e+00 : f32
    %155 = vector.broadcast %cst_192 : f32 to vector<1x16x16x4xf32>
    %156 = arith.maximumf %154, %155 : vector<1x16x16x4xf32>
    %c0_193 = arith.constant 0 : index
    %c0_194 = arith.constant 0 : index
    %c0_195 = arith.constant 0 : index
    %c0_196 = arith.constant 0 : index
    %157 = vector.load %arg6[%c0_193, %c0_194, %c0_195, %c0_196] : memref<1x16x16x4xf32, #tpu.memory_space<vmem>>, vector<1x16x16x4xf32>
    tpu.vector_store %arg6[%c0_193, %c0_194, %c0_195, %c0_196], %156 {strides = array<i32>} : memref<1x16x16x4xf32, #tpu.memory_space<vmem>>, vector<1x16x16x4xf32>,
    return
  }
  func.func @transform_0(%arg0: i32) -> (i32, i32, i32, i32) {
    %c0_i32 = arith.constant 0 : i32
    %c0_i32_0 = arith.constant 0 : i32
    %c0_i32_1 = arith.constant 0 : i32
    %c0_i32_2 = arith.constant 0 : i32
    return %arg0, %c0_i32, %c0_i32_0, %c0_i32_1 : i32, i32, i32, i32
  }
  func.func @transform_1(%arg0: i32) -> (i32, i32, i32) {
    %c0_i32 = arith.constant 0 : i32
    %c0_i32_0 = arith.constant 0 : i32
    %c0_i32_1 = arith.constant 0 : i32
    %c0_i32_2 = arith.constant 0 : i32
    return %c0_i32, %c0_i32_0, %c0_i32_1 : i32, i32, i32
  }
  func.func @transform_2(%arg0: i32) -> (i32, i32) {
    %c0_i32 = arith.constant 0 : i32
    %c0_i32_0 = arith.constant 0 : i32
    %c0_i32_1 = arith.constant 0 : i32
    return %c0_i32, %c0_i32_0 : i32, i32
  }
  func.func @transform_3(%arg0: i32) -> (i32, i32, i32) {
    %c0_i32 = arith.constant 0 : i32
    %c0_i32_0 = arith.constant 0 : i32
    %c0_i32_1 = arith.constant 0 : i32
    %c0_i32_2 = arith.constant 0 : i32
    return %c0_i32, %c0_i32_0, %c0_i32_1 : i32, i32, i32
  }
  func.func @transform_4(%arg0: i32) -> (i32, i32) {
    %c0_i32 = arith.constant 0 : i32
    %c0_i32_0 = arith.constant 0 : i32
    %c0_i32_1 = arith.constant 0 : i32
    return %c0_i32, %c0_i32_0 : i32, i32
  }
  func.func @transform_5(%arg0: i32) -> (i32, i32, i32, i32) {
    %c0_i32 = arith.constant 0 : i32
    %c0_i32_0 = arith.constant 0 : i32
    %c0_i32_1 = arith.constant 0 : i32
    %c0_i32_2 = arith.constant 0 : i32
    return %arg0, %c0_i32, %c0_i32_0, %c0_i32_1 : i32, i32, i32, i32
  }
}

</mosaic_0001>

<llo_original>
// kernel: tpu_custom_call.1
$region0: #{tpu_custom_call.1}
  #allocation0 [shape = 'u32[]', space=smem, size = 0x4, offset = 0x4, fixed_abs, tag = 'smem constant byte address 0x4 - core index']
  #allocation1 [shape = 'u32[72,128]{1,0:T(1,128)}', space=vmem, size = 0x9000, scoped, tag = 'internal scratch']
  #allocation2 [shape = 'f32[1,18,18,4]{3,2,1,0:T(8,128)}', space=vmem, size = 0x36000, scoped, tag = 'scratch operand']
  #allocation3 [shape = 'f32[1,18,18,4]{3,2,1,0:T(8,128)}', space=vmem, size = 0x36000, scoped, tag = 'scratch operand']
  %s0 = inlined_call_operand.vmem [shape: f32[2,16,16,4], index: 0, kind: input, shape index: {}]
  %s1 = inlined_call_operand.vmem [shape: bf16[9,4,4], index: 1, kind: input, shape index: {}]
  %s2 = inlined_call_operand.vmem [shape: f32[1,4], index: 2, kind: input, shape index: {}]
  %s3 = inlined_call_operand.vmem [shape: bf16[9,4,4], index: 3, kind: input, shape index: {}]
  %s4 = inlined_call_operand.vmem [shape: f32[1,4], index: 4, kind: input, shape index: {}]
  %s5 = inlined_call_operand.vmem [shape: f32[2,16,16,4], index: 5, kind: output, shape index: {}]
  %s6 = sld [smem:[#allocation0]]
  $region53: #{tpu_custom_call.1} parent=0
    _
  %s8 = ssub.s32 1, %s6
  %s9 = scalar_select 0, %s8, %s6
  loop: start=0, step=1, limit=4
  $region2: #{tpu_custom_call.1} parent=0 // loop_pre_header
    _
  $region3: #{tpu_custom_call.1} parent=0 // loop_header
    %s11 = sphi 0, %s15
    %p12 = scmp.ge.s32.totalorder %s11, 4
    %s21 = sphi 0, %s23
    %s24 = sphi 0, %s21
    %s25 = sphi 0, %s24
    %s41 = sphi 0, %s25
    %s45 = sphi 0, %s45
    %s47 = sphi 0, %s45
    %s48 = sphi 0, %s47
    %s62 = sphi 0, %s48
    %s66 = sphi 0, %s66
    %s68 = sphi 0, %s66
    %s69 = sphi 0, %s68
    %s83 = sphi 0, %s69
    %s87 = sphi 0, %s87
    %s89 = sphi 0, %s87
    %s90 = sphi 0, %s89
    %s104 = sphi 0, %s90
    %s108 = sphi 0, %s108
    %s110 = sphi 0, %s108
    %s111 = sphi 0, %s110
    %s125 = sphi 0, %s111
    %s131 = sphi 0, %s133
    %s134 = sphi 0, %s131
    %s135 = sphi 0, %s134
    %s151 = sphi 0, %s135
  $region4: #{tpu_custom_call.1} parent=0 // loop_header_branch
    %14 = sbr.rel (%p12) target = $region8
  $region5: #{tpu_custom_call.1} parent=0 // loop_body
    %s16 = ssub.s32 %s11, 1
    %s17 = ssub.s32 %s11, 2
    %s18 = sadd.s32 %s11, 1
    %s19 = ssub.s32 %s11, %s18
    %p20 = scmp.eq.s32.totalorder %s19, 0
    %s22 = sadd.s32 %s21, 1
    %s23 = scalar_select %p20, %s21, %s22
    %p26 = pneg %p20
    %p27 = scmp.eq.s32.totalorder %s11, 1
    %p28 = por %p26, %p27
    %p29 = scmp.ne.s32.totalorder %s21, %s24
    %p30 = scmp.eq.s32.totalorder %s11, 0
    %p31 = por %p29, %p30
    %p32 = scmp.ne.s32.totalorder %s21, %s24
    %p33 = scmp.eq.s32.totalorder %s16, 1
    %p34 = por %p32, %p33
    %p35 = scmp.ne.s32.totalorder %s24, %s25
    %p36 = scmp.eq.s32.totalorder %s16, 0
    %p37 = por %p35, %p36
    %p38 = scmp.ne.s32.totalorder %s24, %s25
    %p39 = scmp.eq.s32.totalorder %s17, 1
    %p40 = por %p38, %p39
    %p42 = scmp.ne.s32.totalorder %s25, %s41
    %p43 = scmp.eq.s32.totalorder %s17, 0
    %p44 = por %p42, %p43
    %s46 = sadd.s32 %s45, 1
    %p49 = scmp.eq.s32.totalorder %s11, 1
    %p50 = scmp.ne.s32.totalorder %s45, %s47
    %p51 = scmp.eq.s32.totalorder %s11, 0
    %p52 = por %p50, %p51
    %p53 = scmp.ne.s32.totalorder %s45, %s47
    %p54 = scmp.eq.s32.totalorder %s16, 1
    %p55 = por %p53, %p54
    %p56 = scmp.ne.s32.totalorder %s47, %s48
    %p57 = scmp.eq.s32.totalorder %s16, 0
    %p58 = por %p56, %p57
    %p59 = scmp.ne.s32.totalorder %s47, %s48
    %p60 = scmp.eq.s32.totalorder %s17, 1
    %p61 = por %p59, %p60
    %p63 = scmp.ne.s32.totalorder %s48, %s62
    %p64 = scmp.eq.s32.totalorder %s17, 0
    %p65 = por %p63, %p64
    %s67 = sadd.s32 %s66, 1
    %p70 = scmp.eq.s32.totalorder %s11, 1
    %p71 = scmp.ne.s32.totalorder %s66, %s68
    %p72 = scmp.eq.s32.totalorder %s11, 0
    %p73 = por %p71, %p72
    %p74 = scmp.ne.s32.totalorder %s66, %s68
    %p75 = scmp.eq.s32.totalorder %s16, 1
    %p76 = por %p74, %p75
    %p77 = scmp.ne.s32.totalorder %s68, %s69
    %p78 = scmp.eq.s32.totalorder %s16, 0
    %p79 = por %p77, %p78
    %p80 = scmp.ne.s32.totalorder %s68, %s69
    %p81 = scmp.eq.s32.totalorder %s17, 1
    %p82 = por %p80, %p81
    %p84 = scmp.ne.s32.totalorder %s69, %s83
    %p85 = scmp.eq.s32.totalorder %s17, 0
    %p86 = por %p84, %p85
    %s88 = sadd.s32 %s87, 1
    %p91 = scmp.eq.s32.totalorder %s11, 1
    %p92 = scmp.ne.s32.totalorder %s87, %s89
    %p93 = scmp.eq.s32.totalorder %s11, 0
    %p94 = por %p92, %p93
    %p95 = scmp.ne.s32.totalorder %s87, %s89
    %p96 = scmp.eq.s32.totalorder %s16, 1
    %p97 = por %p95, %p96
    %p98 = scmp.ne.s32.totalorder %s89, %s90
    %p99 = scmp.eq.s32.totalorder %s16, 0
    %p100 = por %p98, %p99
    %p101 = scmp.ne.s32.totalorder %s89, %s90
    %p102 = scmp.eq.s32.totalorder %s17, 1
    %p103 = por %p101, %p102
    %p105 = scmp.ne.s32.totalorder %s90, %s104
    %p106 = scmp.eq.s32.totalorder %s17, 0
    %p107 = por %p105, %p106
    %s109 = sadd.s32 %s108, 1
    %p112 = scmp.eq.s32.totalorder %s11, 1
    %p113 = scmp.ne.s32.totalorder %s108, %s110
    %p114 = scmp.eq.s32.totalorder %s11, 0
    %p115 = por %p113, %p114
    %p116 = scmp.ne.s32.totalorder %s108, %s110
    %p117 = scmp.eq.s32.totalorder %s16, 1
    %p118 = por %p116, %p117
    %p119 = scmp.ne.s32.totalorder %s110, %s111
    %p120 = scmp.eq.s32.totalorder %s16, 0
    %p121 = por %p119, %p120
    %p122 = scmp.ne.s32.totalorder %s110, %s111
    %p123 = scmp.eq.s32.totalorder %s17, 1
    %p124 = por %p122, %p123
    %p126 = scmp.ne.s32.totalorder %s111, %s125
    %p127 = scmp.eq.s32.totalorder %s17, 0
    %p128 = por %p126, %p127
    %s129 = ssub.s32 %s11, %s18
    %p130 = scmp.eq.s32.totalorder %s129, 0
    %s132 = sadd.s32 %s131, 1
    %s133 = scalar_select %p130, %s131, %s132
    %p136 = pneg %p130
    %p137 = scmp.eq.s32.totalorder %s11, 1
    %p138 = por %p136, %p137
    %p139 = scmp.ne.s32.totalorder %s131, %s134
    %p140 = scmp.eq.s32.totalorder %s11, 0
    %p141 = por %p139, %p140
    %p142 = scmp.ne.s32.totalorder %s131, %s134
    %p143 = scmp.eq.s32.totalorder %s16, 1
    %p144 = por %p142, %p143
    %p145 = scmp.ne.s32.totalorder %s134, %s135
    %p146 = scmp.eq.s32.totalorder %s16, 0
    %p147 = por %p145, %p146
    %p148 = scmp.ne.s32.totalorder %s134, %s135
    %p149 = scmp.eq.s32.totalorder %s17, 1
    %p150 = por %p148, %p149
    %p152 = scmp.ne.s32.totalorder %s135, %s151
    %p153 = scmp.eq.s32.totalorder %s17, 0
    %p154 = por %p152, %p153
    %p155 = scmp.le.s32.totalorder 1, %s11
    %p156 = scmp.lt.s32.totalorder %s11, 3
    %p157 = pnand %p155, %p156
    %p158 = pneg %p157
    // Predicated region
    $region9: #{tpu_custom_call.1} parent=5 // pred_check
      _
    $region10: #{tpu_custom_call.1} parent=5 // pred_check_branch
      %160 = sbr.rel (%p157) target = $region12
    $region11: #{tpu_custom_call.1} parent=5 // pred_region
      %s161 = ssub.s32 %s11, 1
      // Predicated region
      $region13: #{tpu_custom_call.1} parent=11 // pred_check
        %p162 = pneg %p58
      $region14: #{tpu_custom_call.1} parent=11 // pred_check_branch
        %164 = sbr.rel (%p162) target = $region16
      $region15: #{tpu_custom_call.1} parent=11 // pred_region
        _
      $region16: #{tpu_custom_call.1} parent=11 // pred_fallthru
        _
      // Predicated region
      $region17: #{tpu_custom_call.1} parent=11 // pred_check
        %p165 = pneg %p79
      $region18: #{tpu_custom_call.1} parent=11 // pred_check_branch
        %167 = sbr.rel (%p165) target = $region20
      $region19: #{tpu_custom_call.1} parent=11 // pred_region
        _
      $region20: #{tpu_custom_call.1} parent=11 // pred_fallthru
        _
      // Predicated region
      $region21: #{tpu_custom_call.1} parent=11 // pred_check
        %p168 = pneg %p100
      $region22: #{tpu_custom_call.1} parent=11 // pred_check_branch
        %170 = sbr.rel (%p168) target = $region24
      $region23: #{tpu_custom_call.1} parent=11 // pred_region
        _
      $region24: #{tpu_custom_call.1} parent=11 // pred_fallthru
        _
      // Predicated region
      $region25: #{tpu_custom_call.1} parent=11 // pred_check
        %p171 = pneg %p121
      $region26: #{tpu_custom_call.1} parent=11 // pred_check_branch
        %173 = sbr.rel (%p171) target = $region28
      $region27: #{tpu_custom_call.1} parent=11 // pred_region
        _
      $region28: #{tpu_custom_call.1} parent=11 // pred_fallthru
        _
    $region12: #{tpu_custom_call.1} parent=5 // pred_fallthru
      _
    %p174 = scmp.lt.s32.totalorder %s11, 2
    // Predicated region
    $region29: #{tpu_custom_call.1} parent=5 // pred_check
      %p175 = pneg %p174
    $region30: #{tpu_custom_call.1} parent=5 // pred_check_branch
      %177 = sbr.rel (%p175) target = $region32
    $region31: #{tpu_custom_call.1} parent=5 // pred_region
      // Predicated region
      $region33: #{tpu_custom_call.1} parent=31 // pred_check
        %p178 = pneg %p31
      $region34: #{tpu_custom_call.1} parent=31 // pred_check_branch
        %180 = sbr.rel (%p178) target = $region36
      $region35: #{tpu_custom_call.1} parent=31 // pred_region
        %p181 = scmp.lt.s32.totalorder %s11, 1
        %s182 = scalar_select %p181, %s11, 1
        %s183 = smul.addr %s182, 32
        %s184 = smul.addr %s183, 8
        %s185 = scalar_lea.vmem %s0, %s184
      $region36: #{tpu_custom_call.1} parent=31 // pred_fallthru
        _
    $region32: #{tpu_custom_call.1} parent=5 // pred_fallthru
      _
    %p186 = scmp.le.s32.totalorder 1, %s11
    %p187 = scmp.lt.s32.totalorder %s11, 3
    %p188 = pnand %p186, %p187
    %p189 = pneg %p188
    // Predicated region
    $region37: #{tpu_custom_call.1} parent=5 // pred_check
      _
    $region38: #{tpu_custom_call.1} parent=5 // pred_check_branch
      %191 = sbr.rel (%p188) target = $region40
    $region39: #{tpu_custom_call.1} parent=5 // pred_region
      %s192 = ssub.s32 %s11, 1
      %p193 = scmp.lt.s32.totalorder %s16, 1
      %s194 = scalar_select %p193, %s16, 1
      %s195 = smul.addr %s194, 32
      %s196 = smul.addr %s195, 8
      %s197 = scalar_lea.vmem %s0, %s196
      %p198 = pneg %p37
      %p199 = pneg %p34
      %p200 = pneg %p58
      %p201 = pneg %p55
      %p202 = pneg %p79
      %p203 = pneg %p76
      %p204 = pneg %p100
      %p205 = pneg %p97
      %p206 = pneg %p121
      %p207 = pneg %p118
      %p208 = pneg %p147
      %p209 = pneg %p144
      %p210 = scmp.lt.s32.totalorder %s16, 1
      %s211 = scalar_select %p210, %s16, 1
      %s212 = smul.addr %s211, 32
      %s213 = smul.addr %s212, 8
      %s214 = scalar_lea.vmem %s5, %s213
      %p215 = scmp.lt.s32.totalorder %s16, 1
      %s216 = scalar_select %p215, %s16, 1
      %s217 = smul.addr %s216, 32
      %s218 = smul.addr %s217, 8
      %s219 = scalar_lea.vmem %s0, %s218
      %p220 = scmp.lt.s32.totalorder %s16, 1
      %s221 = scalar_select %p220, %s16, 1
      %s222 = smul.addr %s221, 32
      %s223 = smul.addr %s222, 8
      %s224 = scalar_lea.vmem %s5, %s223
      %vm226 = vcmask 31744
      %227 = vst.msk [vmem:[#allocation2] sm:$0xff] %vm226, 0.0
      %228 = vst.msk [vmem:[#allocation2 + $0x8] sm:$0xff] %vm226, 0.0
      %vm229 = vcmask 25600
      %230 = vst.msk [vmem:[#allocation2 + $0x10] sm:$0x3] %vm229, 0.0
      %s231 = scalar_lea.vmem [#allocation2], 408
      %232 = vst.msk [vmem:[%s231] sm:$0xff] %vm226, 0.0
      %233 = vst.msk [vmem:[%s231 + $0x8] sm:$0xff] %vm226, 0.0
      %234 = vst.msk [vmem:[%s231 + $0x10] sm:$0x3] %vm229, 0.0
      %vm235 = vcmask 24576
      %236 = vst.msk [vmem:[#allocation2] sm:$0x1] %vm235, 0.0
      %237 = vst.msk [vmem:[#allocation2 + $0x18] sm:$0x1] %vm235, 0.0
      %238 = vst.msk [vmem:[#allocation2 + $0x30] sm:$0x1] %vm235, 0.0
      %239 = vst.msk [vmem:[#allocation2 + $0x48] sm:$0x1] %vm235, 0.0
      %240 = vst.msk [vmem:[#allocation2 + $0x60] sm:$0x1] %vm235, 0.0
      %241 = vst.msk [vmem:[#allocation2 + $0x78] sm:$0x1] %vm235, 0.0
      %242 = vst.msk [vmem:[#allocation2 + $0x90] sm:$0x1] %vm235, 0.0
      %243 = vst.msk [vmem:[#allocation2 + $0xa8] sm:$0x1] %vm235, 0.0
      %244 = vst.msk [vmem:[#allocation2 + $0xc0] sm:$0x1] %vm235, 0.0
      %245 = vst.msk [vmem:[#allocation2 + $0xd8] sm:$0x1] %vm235, 0.0
      %246 = vst.msk [vmem:[#allocation2 + $0xf0] sm:$0x1] %vm235, 0.0
      %247 = vst.msk [vmem:[#allocation2 + $0x108] sm:$0x1] %vm235, 0.0
      %248 = vst.msk [vmem:[#allocation2 + $0x120] sm:$0x1] %vm235, 0.0
      %249 = vst.msk [vmem:[#allocation2 + $0x138] sm:$0x1] %vm235, 0.0
      %250 = vst.msk [vmem:[#allocation2 + $0x150] sm:$0x1] %vm235, 0.0
      %251 = vst.msk [vmem:[#allocation2 + $0x168] sm:$0x1] %vm235, 0.0
      %252 = vst.msk [vmem:[#allocation2 + $0x180] sm:$0x1] %vm235, 0.0
      %253 = vst.msk [vmem:[#allocation2 + $0x198] sm:$0x1] %vm235, 0.0
      %254 = vst.msk [vmem:[#allocation2 + $0x11] sm:$0x1] %vm235, 0.0
      %255 = vst.msk [vmem:[#allocation2 + $0x29] sm:$0x1] %vm235, 0.0
      %256 = vst.msk [vmem:[#allocation2 + $0x41] sm:$0x1] %vm235, 0.0
      %257 = vst.msk [vmem:[#allocation2 + $0x59] sm:$0x1] %vm235, 0.0
      %258 = vst.msk [vmem:[#allocation2 + $0x71] sm:$0x1] %vm235, 0.0
      %259 = vst.msk [vmem:[#allocation2 + $0x89] sm:$0x1] %vm235, 0.0
      %260 = vst.msk [vmem:[#allocation2 + $0xa1] sm:$0x1] %vm235, 0.0
      %261 = vst.msk [vmem:[#allocation2 + $0xb9] sm:$0x1] %vm235, 0.0
      %262 = vst.msk [vmem:[#allocation2 + $0xd1] sm:$0x1] %vm235, 0.0
      %263 = vst.msk [vmem:[#allocation2 + $0xe9] sm:$0x1] %vm235, 0.0
      %264 = vst.msk [vmem:[#allocation2 + $0x101] sm:$0x1] %vm235, 0.0
      %265 = vst.msk [vmem:[#allocation2 + $0x119] sm:$0x1] %vm235, 0.0
      %266 = vst.msk [vmem:[#allocation2 + $0x131] sm:$0x1] %vm235, 0.0
      %267 = vst.msk [vmem:[#allocation2 + $0x149] sm:$0x1] %vm235, 0.0
      %268 = vst.msk [vmem:[#allocation2 + $0x161] sm:$0x1] %vm235, 0.0
      %269 = vst.msk [vmem:[#allocation2 + $0x179] sm:$0x1] %vm235, 0.0
      %270 = vst.msk [vmem:[#allocation2 + $0x191] sm:$0x1] %vm235, 0.0
      %271 = vst.msk [vmem:[#allocation2 + $0x1a9] sm:$0x1] %vm235, 0.0
      %v272 = vld [vmem:[%s219] sm:$0xff]
      %v273 = vld [vmem:[%s219 + $0x8] sm:$0xff]
      %v274 = vld [vmem:[%s219 + $0x10] sm:$0xff]
      %v275 = vld [vmem:[%s219 + $0x18] sm:$0xff]
      %v276 = vld [vmem:[%s219 + $0x20] sm:$0xff]
      %v277 = vld [vmem:[%s219 + $0x28] sm:$0xff]
      %v278 = vld [vmem:[%s219 + $0x30] sm:$0xff]
      %v279 = vld [vmem:[%s219 + $0x38] sm:$0xff]
      %v280 = vld [vmem:[%s219 + $0x40] sm:$0xff]
      %v281 = vld [vmem:[%s219 + $0x48] sm:$0xff]
      %v282 = vld [vmem:[%s219 + $0x50] sm:$0xff]
      %v283 = vld [vmem:[%s219 + $0x58] sm:$0xff]
      %v284 = vld [vmem:[%s219 + $0x60] sm:$0xff]
      %v285 = vld [vmem:[%s219 + $0x68] sm:$0xff]
      %v286 = vld [vmem:[%s219 + $0x70] sm:$0xff]
      %v287 = vld [vmem:[%s219 + $0x78] sm:$0xff]
      %v288 = vld [vmem:[%s219 + $0x80] sm:$0xff]
      %v289 = vld [vmem:[%s219 + $0x88] sm:$0xff]
      %v290 = vld [vmem:[%s219 + $0x90] sm:$0xff]
      %v291 = vld [vmem:[%s219 + $0x98] sm:$0xff]
      %v292 = vld [vmem:[%s219 + $0xa0] sm:$0xff]
      %v293 = vld [vmem:[%s219 + $0xa8] sm:$0xff]
      %v294 = vld [vmem:[%s219 + $0xb0] sm:$0xff]
      %v295 = vld [vmem:[%s219 + $0xb8] sm:$0xff]
      %v296 = vld [vmem:[%s219 + $0xc0] sm:$0xff]
      %v297 = vld [vmem:[%s219 + $0xc8] sm:$0xff]
      %v298 = vld [vmem:[%s219 + $0xd0] sm:$0xff]
      %v299 = vld [vmem:[%s219 + $0xd8] sm:$0xff]
      %v300 = vld [vmem:[%s219 + $0xe0] sm:$0xff]
      %v301 = vld [vmem:[%s219 + $0xe8] sm:$0xff]
      %v302 = vld [vmem:[%s219 + $0xf0] sm:$0xff]
      %v303 = vld [vmem:[%s219 + $0xf8] sm:$0xff]
      %s304 = scalar_lea.vmem [#allocation2], 24
      %305 = vst.msk [vmem:[%s304 + $0x1] sm:$0xff] %vm226, %v272
      %306 = vst.msk [vmem:[%s304 + $0x9] sm:$0xff] %vm226, %v273
      %307 = vst.msk [vmem:[%s304 + $0x19] sm:$0xff] %vm226, %v274
      %308 = vst.msk [vmem:[%s304 + $0x21] sm:$0xff] %vm226, %v275
      %309 = vst.msk [vmem:[%s304 + $0x31] sm:$0xff] %vm226, %v276
      %310 = vst.msk [vmem:[%s304 + $0x39] sm:$0xff] %vm226, %v277
      %311 = vst.msk [vmem:[%s304 + $0x49] sm:$0xff] %vm226, %v278
      %312 = vst.msk [vmem:[%s304 + $0x51] sm:$0xff] %vm226, %v279
      %313 = vst.msk [vmem:[%s304 + $0x61] sm:$0xff] %vm226, %v280
      %314 = vst.msk [vmem:[%s304 + $0x69] sm:$0xff] %vm226, %v281
      %315 = vst.msk [vmem:[%s304 + $0x79] sm:$0xff] %vm226, %v282
      %316 = vst.msk [vmem:[%s304 + $0x81] sm:$0xff] %vm226, %v283
      %317 = vst.msk [vmem:[%s304 + $0x91] sm:$0xff] %vm226, %v284
      %318 = vst.msk [vmem:[%s304 + $0x99] sm:$0xff] %vm226, %v285
      %319 = vst.msk [vmem:[%s304 + $0xa9] sm:$0xff] %vm226, %v286
      %320 = vst.msk [vmem:[%s304 + $0xb1] sm:$0xff] %vm226, %v287
      %321 = vst.msk [vmem:[%s304 + $0xc1] sm:$0xff] %vm226, %v288
      %322 = vst.msk [vmem:[%s304 + $0xc9] sm:$0xff] %vm226, %v289
      %323 = vst.msk [vmem:[%s304 + $0xd9] sm:$0xff] %vm226, %v290
      %324 = vst.msk [vmem:[%s304 + $0xe1] sm:$0xff] %vm226, %v291
      %325 = vst.msk [vmem:[%s304 + $0xf1] sm:$0xff] %vm226, %v292
      %326 = vst.msk [vmem:[%s304 + $0xf9] sm:$0xff] %vm226, %v293
      %327 = vst.msk [vmem:[%s304 + $0x109] sm:$0xff] %vm226, %v294
      %328 = vst.msk [vmem:[%s304 + $0x111] sm:$0xff] %vm226, %v295
      %329 = vst.msk [vmem:[%s304 + $0x121] sm:$0xff] %vm226, %v296
      %330 = vst.msk [vmem:[%s304 + $0x129] sm:$0xff] %vm226, %v297
      %331 = vst.msk [vmem:[%s304 + $0x139] sm:$0xff] %vm226, %v298
      %332 = vst.msk [vmem:[%s304 + $0x141] sm:$0xff] %vm226, %v299
      %333 = vst.msk [vmem:[%s304 + $0x151] sm:$0xff] %vm226, %v300
      %334 = vst.msk [vmem:[%s304 + $0x159] sm:$0xff] %vm226, %v301
      %335 = vst.msk [vmem:[%s304 + $0x169] sm:$0xff] %vm226, %v302
      %336 = vst.msk [vmem:[%s304 + $0x171] sm:$0xff] %vm226, %v303
      %v337 = vld [vmem:[#allocation2] sm:$0xff]
      %v338 = vld [vmem:[#allocation2 + $0x8] sm:$0xff]
      %v339 = vld [vmem:[#allocation2 + $0x18] sm:$0xff]
      %v340 = vld [vmem:[#allocation2 + $0x20] sm:$0xff]
      %v341 = vld [vmem:[#allocation2 + $0x30] sm:$0xff]
      %v342 = vld [vmem:[#allocation2 + $0x38] sm:$0xff]
      %v343 = vld [vmem:[#allocation2 + $0x48] sm:$0xff]
      %v344 = vld [vmem:[#allocation2 + $0x50] sm:$0xff]
      %v345 = vld [vmem:[#allocation2 + $0x60] sm:$0xff]
      %v346 = vld [vmem:[#allocation2 + $0x68] sm:$0xff]
      %v347 = vld [vmem:[#allocation2 + $0x78] sm:$0xff]
      %v348 = vld [vmem:[#allocation2 + $0x80] sm:$0xff]
      %v349 = vld [vmem:[#allocation2 + $0x90] sm:$0xff]
      %v350 = vld [vmem:[#allocation2 + $0x98] sm:$0xff]
      %v351 = vld [vmem:[#allocation2 + $0xa8] sm:$0xff]
      %v352 = vld [vmem:[#allocation2 + $0xb0] sm:$0xff]
      %v353 = vld [vmem:[#allocation2 + $0xc0] sm:$0xff]
      %v354 = vld [vmem:[#allocation2 + $0xc8] sm:$0xff]
      %v355 = vld [vmem:[#allocation2 + $0xd8] sm:$0xff]
      %v356 = vld [vmem:[#allocation2 + $0xe0] sm:$0xff]
      %v357 = vld [vmem:[#allocation2 + $0xf0] sm:$0xff]
      %v358 = vld [vmem:[#allocation2 + $0xf8] sm:$0xff]
      %v359 = vld [vmem:[#allocation2 + $0x108] sm:$0xff]
      %v360 = vld [vmem:[#allocation2 + $0x110] sm:$0xff]
      %v361 = vld [vmem:[#allocation2 + $0x120] sm:$0xff]
      %v362 = vld [vmem:[#allocation2 + $0x128] sm:$0xff]
      %v363 = vld [vmem:[#allocation2 + $0x138] sm:$0xff]
      %v364 = vld [vmem:[#allocation2 + $0x140] sm:$0xff]
      %v365 = vld [vmem:[#allocation2 + $0x150] sm:$0xff]
      %v366 = vld [vmem:[#allocation2 + $0x158] sm:$0xff]
      %v367 = vld [vmem:[#allocation2 + $0x168] sm:$0xff]
      %v368 = vld [vmem:[#allocation2 + $0x170] sm:$0xff]
      %v369 = vpack.c.bf16 %v337, %v337
      %v370 = vpack.c.bf16 %v338, %v338
      %v371 = vpack.c.bf16 %v339, %v339
      %v372 = vpack.c.bf16 %v340, %v340
      %v373 = vpack.c.bf16 %v341, %v341
      %v374 = vpack.c.bf16 %v342, %v342
      %v375 = vpack.c.bf16 %v343, %v343
      %v376 = vpack.c.bf16 %v344, %v344
      %v377 = vpack.c.bf16 %v345, %v345
      %v378 = vpack.c.bf16 %v346, %v346
      %v379 = vpack.c.bf16 %v347, %v347
      %v380 = vpack.c.bf16 %v348, %v348
      %v381 = vpack.c.bf16 %v349, %v349
      %v382 = vpack.c.bf16 %v350, %v350
      %v383 = vpack.c.bf16 %v351, %v351
      %v384 = vpack.c.bf16 %v352, %v352
      %v385 = vpack.c.bf16 %v353, %v353
      %v386 = vpack.c.bf16 %v354, %v354
      %v387 = vpack.c.bf16 %v355, %v355
      %v388 = vpack.c.bf16 %v356, %v356
      %v389 = vpack.c.bf16 %v357, %v357
      %v390 = vpack.c.bf16 %v358, %v358
      %v391 = vpack.c.bf16 %v359, %v359
      %v392 = vpack.c.bf16 %v360, %v360
      %v393 = vpack.c.bf16 %v361, %v361
      %v394 = vpack.c.bf16 %v362, %v362
      %v395 = vpack.c.bf16 %v363, %v363
      %v396 = vpack.c.bf16 %v364, %v364
      %v397 = vpack.c.bf16 %v365, %v365
      %v398 = vpack.c.bf16 %v366, %v366
      %v399 = vpack.c.bf16 %v367, %v367
      %v400 = vpack.c.bf16 %v368, %v368
      %v401 = vld [vmem:[%s1] sm:$0x3]
      %v402 = vld [vmem:[#allocation2 + $0x1] sm:$0xff]
      %v403 = vld [vmem:[#allocation2 + $0x9] sm:$0xff]
      %v404 = vld [vmem:[#allocation2 + $0x19] sm:$0xff]
      %v405 = vld [vmem:[#allocation2 + $0x21] sm:$0xff]
      %v406 = vld [vmem:[#allocation2 + $0x31] sm:$0xff]
      %v407 = vld [vmem:[#allocation2 + $0x39] sm:$0xff]
      %v408 = vld [vmem:[#allocation2 + $0x49] sm:$0xff]
      %v409 = vld [vmem:[#allocation2 + $0x51] sm:$0xff]
      %v410 = vld [vmem:[#allocation2 + $0x61] sm:$0xff]
      %v411 = vld [vmem:[#allocation2 + $0x69] sm:$0xff]
      %v412 = vld [vmem:[#allocation2 + $0x79] sm:$0xff]
      %v413 = vld [vmem:[#allocation2 + $0x81] sm:$0xff]
      %v414 = vld [vmem:[#allocation2 + $0x91] sm:$0xff]
      %v415 = vld [vmem:[#allocation2 + $0x99] sm:$0xff]
      %v416 = vld [vmem:[#allocation2 + $0xa9] sm:$0xff]
      %v417 = vld [vmem:[#allocation2 + $0xb1] sm:$0xff]
      %v418 = vld [vmem:[#allocation2 + $0xc1] sm:$0xff]
      %v419 = vld [vmem:[#allocation2 + $0xc9] sm:$0xff]
      %v420 = vld [vmem:[#allocation2 + $0xd9] sm:$0xff]
      %v421 = vld [vmem:[#allocation2 + $0xe1] sm:$0xff]
      %v422 = vld [vmem:[#allocation2 + $0xf1] sm:$0xff]
      %v423 = vld [vmem:[#allocation2 + $0xf9] sm:$0xff]
      %v424 = vld [vmem:[#allocation2 + $0x109] sm:$0xff]
      %v425 = vld [vmem:[#allocation2 + $0x111] sm:$0xff]
      %v426 = vld [vmem:[#allocation2 + $0x121] sm:$0xff]
      %v427 = vld [vmem:[#allocation2 + $0x129] sm:$0xff]
      %v428 = vld [vmem:[#allocation2 + $0x139] sm:$0xff]
      %v429 = vld [vmem:[#allocation2 + $0x141] sm:$0xff]
      %v430 = vld [vmem:[#allocation2 + $0x151] sm:$0xff]
      %v431 = vld [vmem:[#allocation2 + $0x159] sm:$0xff]
      %v432 = vld [vmem:[#allocation2 + $0x169] sm:$0xff]
      %v433 = vld [vmem:[#allocation2 + $0x171] sm:$0xff]
      %v434 = vpack.c.bf16 %v402, %v402
      %v435 = vpack.c.bf16 %v403, %v403
      %v436 = vpack.c.bf16 %v404, %v404
      %v437 = vpack.c.bf16 %v405, %v405
      %v438 = vpack.c.bf16 %v406, %v406
      %v439 = vpack.c.bf16 %v407, %v407
      %v440 = vpack.c.bf16 %v408, %v408
      %v441 = vpack.c.bf16 %v409, %v409
      %v442 = vpack.c.bf16 %v410, %v410
      %v443 = vpack.c.bf16 %v411, %v411
      %v444 = vpack.c.bf16 %v412, %v412
      %v445 = vpack.c.bf16 %v413, %v413
      %v446 = vpack.c.bf16 %v414, %v414
      %v447 = vpack.c.bf16 %v415, %v415
      %v448 = vpack.c.bf16 %v416, %v416
      %v449 = vpack.c.bf16 %v417, %v417
      %v450 = vpack.c.bf16 %v418, %v418
      %v451 = vpack.c.bf16 %v419, %v419
      %v452 = vpack.c.bf16 %v420, %v420
      %v453 = vpack.c.bf16 %v421, %v421
      %v454 = vpack.c.bf16 %v422, %v422
      %v455 = vpack.c.bf16 %v423, %v423
      %v456 = vpack.c.bf16 %v424, %v424
      %v457 = vpack.c.bf16 %v425, %v425
      %v458 = vpack.c.bf16 %v426, %v426
      %v459 = vpack.c.bf16 %v427, %v427
      %v460 = vpack.c.bf16 %v428, %v428
      %v461 = vpack.c.bf16 %v429, %v429
      %v462 = vpack.c.bf16 %v430, %v430
      %v463 = vpack.c.bf16 %v431, %v431
      %v464 = vpack.c.bf16 %v432, %v432
      %v465 = vpack.c.bf16 %v433, %v433
      %s466 = scalar_lea.vmem %s1, 2
      %v467 = vld [vmem:[%s466] sm:$0x3]
      %v500 = vunpack.c.l.b16 %v434
      %v501 = vunpack.c.l.b16 %v435
      %v502 = vunpack.c.l.b16 %v436
      %v503 = vunpack.c.l.b16 %v437
      %v504 = vunpack.c.l.b16 %v438
      %v505 = vunpack.c.l.b16 %v439
      %v506 = vunpack.c.l.b16 %v440
      %v507 = vunpack.c.l.b16 %v441
      %v508 = vunpack.c.l.b16 %v442
      %v509 = vunpack.c.l.b16 %v443
      %v510 = vunpack.c.l.b16 %v444
      %v511 = vunpack.c.l.b16 %v445
      %v512 = vunpack.c.l.b16 %v446
      %v513 = vunpack.c.l.b16 %v447
      %v514 = vunpack.c.l.b16 %v448
      %v515 = vunpack.c.l.b16 %v449
      %v516 = vunpack.c.l.b16 %v450
      %v517 = vunpack.c.l.b16 %v451
      %v518 = vunpack.c.l.b16 %v452
      %v519 = vunpack.c.l.b16 %v453
      %v520 = vunpack.c.l.b16 %v454
      %v521 = vunpack.c.l.b16 %v455
      %v522 = vunpack.c.l.b16 %v456
      %v523 = vunpack.c.l.b16 %v457
      %v524 = vunpack.c.l.b16 %v458
      %v525 = vunpack.c.l.b16 %v459
      %v526 = vunpack.c.l.b16 %v460
      %v527 = vunpack.c.l.b16 %v461
      %v528 = vunpack.c.l.b16 %v462
      %v529 = vunpack.c.l.b16 %v463
      %v530 = vunpack.c.l.b16 %v464
      %v531 = vunpack.c.l.b16 %v465
      %v532 = vpack.c.b16 %v501, %v500
      %v533 = vpack.c.b16 %v503, %v502
      %v534 = vpack.c.b16 %v505, %v504
      %v535 = vpack.c.b16 %v507, %v506
      %v536 = vpack.c.b16 %v509, %v508
      %v537 = vpack.c.b16 %v511, %v510
      %v538 = vpack.c.b16 %v513, %v512
      %v539 = vpack.c.b16 %v515, %v514
      %v540 = vpack.c.b16 %v517, %v516
      %v541 = vpack.c.b16 %v519, %v518
      %v542 = vpack.c.b16 %v521, %v520
      %v543 = vpack.c.b16 %v523, %v522
      %v544 = vpack.c.b16 %v525, %v524
      %v545 = vpack.c.b16 %v527, %v526
      %v546 = vpack.c.b16 %v529, %v528
      %v547 = vpack.c.b16 %v531, %v530
      %v549 = vsel %vm226, %v532, 0
      %v552 = vsel %vm226, %v533, 0
      %v555 = vsel %vm226, %v534, 0
      %v558 = vsel %vm226, %v535, 0
      %v561 = vsel %vm226, %v536, 0
      %v564 = vsel %vm226, %v537, 0
      %v567 = vsel %vm226, %v538, 0
      %v570 = vsel %vm226, %v539, 0
      %v573 = vsel %vm226, %v540, 0
      %v576 = vsel %vm226, %v541, 0
      %v579 = vsel %vm226, %v542, 0
      %v582 = vsel %vm226, %v543, 0
      %v585 = vsel %vm226, %v544, 0
      %v588 = vsel %vm226, %v545, 0
      %v591 = vsel %vm226, %v546, 0
      %v594 = vsel %vm226, %v547, 0
      %vm596 = vcmask 1041408
      %v598 = vsel %vm596, %v467, 0
      %600 = vmatpush.bf16.msra.mxu0 0
      %601 = vmatpush.bf16.msra.mxu0 0
      %602 = vmatpush.bf16.msra.mxu0 0
      %603 = vmatpush.bf16.msra.mxu0 0
      %604 = vmatpush.bf16.msra.mxu0 0
      %605 = vmatpush.bf16.msra.mxu0 0
      %606 = vmatpush.bf16.msra.mxu0 0
      %607 = vmatpush.bf16.msra.mxu0 %v598
      %608 = vmatmul.bf16.gmra.mxu0 %v549
      %v609 = vpop.f32.mrf.mxu0
      %v610 = vadd.f32 0.0, %v609
      %v611 = vpop.f32.mrf.mxu0
      %v612 = vadd.f32 0.0, %v611
      %613 = vmatmul.bf16.gmra.mxu0 %v552
      %v614 = vpop.f32.mrf.mxu0
      %v615 = vadd.f32 0.0, %v614
      %v616 = vpop.f32.mrf.mxu0
      %v617 = vadd.f32 0.0, %v616
      %618 = vmatmul.bf16.gmra.mxu0 %v555
      %v619 = vpop.f32.mrf.mxu0
      %v620 = vadd.f32 0.0, %v619
      %v621 = vpop.f32.mrf.mxu0
      %v622 = vadd.f32 0.0, %v621
      %623 = vmatmul.bf16.gmra.mxu0 %v558
      %v624 = vpop.f32.mrf.mxu0
      %v625 = vadd.f32 0.0, %v624
      %v626 = vpop.f32.mrf.mxu0
      %v627 = vadd.f32 0.0, %v626
      %628 = vmatmul.bf16.gmra.mxu0 %v561
      %v629 = vpop.f32.mrf.mxu0
      %v630 = vadd.f32 0.0, %v629
      %v631 = vpop.f32.mrf.mxu0
      %v632 = vadd.f32 0.0, %v631
      %633 = vmatmul.bf16.gmra.mxu0 %v564
      %v634 = vpop.f32.mrf.mxu0
      %v635 = vadd.f32 0.0, %v634
      %v636 = vpop.f32.mrf.mxu0
      %v637 = vadd.f32 0.0, %v636
      %638 = vmatmul.bf16.gmra.mxu0 %v567
      %v639 = vpop.f32.mrf.mxu0
      %v640 = vadd.f32 0.0, %v639
      %v641 = vpop.f32.mrf.mxu0
      %v642 = vadd.f32 0.0, %v641
      %643 = vmatmul.bf16.gmra.mxu0 %v570
      %v644 = vpop.f32.mrf.mxu0
      %v645 = vadd.f32 0.0, %v644
      %v646 = vpop.f32.mrf.mxu0
      %v647 = vadd.f32 0.0, %v646
      %648 = vmatmul.bf16.gmra.mxu0 %v573
      %v649 = vpop.f32.mrf.mxu0
      %v650 = vadd.f32 0.0, %v649
      %v651 = vpop.f32.mrf.mxu0
      %v652 = vadd.f32 0.0, %v651
      %653 = vmatmul.bf16.gmra.mxu0 %v576
      %v654 = vpop.f32.mrf.mxu0
      %v655 = vadd.f32 0.0, %v654
      %v656 = vpop.f32.mrf.mxu0
      %v657 = vadd.f32 0.0, %v656
      %658 = vmatmul.bf16.gmra.mxu0 %v579
      %v659 = vpop.f32.mrf.mxu0
      %v660 = vadd.f32 0.0, %v659
      %v661 = vpop.f32.mrf.mxu0
      %v662 = vadd.f32 0.0, %v661
      %663 = vmatmul.bf16.gmra.mxu0 %v582
      %v664 = vpop.f32.mrf.mxu0
      %v665 = vadd.f32 0.0, %v664
      %v666 = vpop.f32.mrf.mxu0
      %v667 = vadd.f32 0.0, %v666
      %668 = vmatmul.bf16.gmra.mxu0 %v585
      %v669 = vpop.f32.mrf.mxu0
      %v670 = vadd.f32 0.0, %v669
      %v671 = vpop.f32.mrf.mxu0
      %v672 = vadd.f32 0.0, %v671
      %673 = vmatmul.bf16.gmra.mxu0 %v588
      %v674 = vpop.f32.mrf.mxu0
      %v675 = vadd.f32 0.0, %v674
      %v676 = vpop.f32.mrf.mxu0
      %v677 = vadd.f32 0.0, %v676
      %678 = vmatmul.bf16.gmra.mxu0 %v591
      %v679 = vpop.f32.mrf.mxu0
      %v680 = vadd.f32 0.0, %v679
      %v681 = vpop.f32.mrf.mxu0
      %v682 = vadd.f32 0.0, %v681
      %683 = vmatmul.bf16.gmra.mxu0 %v594
      %v684 = vpop.f32.mrf.mxu0
      %v685 = vadd.f32 0.0, %v684
      %v686 = vpop.f32.mrf.mxu0
      %v687 = vadd.f32 0.0, %v686
      %688 = vdwg.mxu0
      %v721 = vunpack.c.l.b16 %v369
      %v722 = vunpack.c.l.b16 %v370
      %v723 = vunpack.c.l.b16 %v371
      %v724 = vunpack.c.l.b16 %v372
      %v725 = vunpack.c.l.b16 %v373
      %v726 = vunpack.c.l.b16 %v374
      %v727 = vunpack.c.l.b16 %v375
      %v728 = vunpack.c.l.b16 %v376
      %v729 = vunpack.c.l.b16 %v377
      %v730 = vunpack.c.l.b16 %v378
      %v731 = vunpack.c.l.b16 %v379
      %v732 = vunpack.c.l.b16 %v380
      %v733 = vunpack.c.l.b16 %v381
      %v734 = vunpack.c.l.b16 %v382
      %v735 = vunpack.c.l.b16 %v383
      %v736 = vunpack.c.l.b16 %v384
      %v737 = vunpack.c.l.b16 %v385
      %v738 = vunpack.c.l.b16 %v386
      %v739 = vunpack.c.l.b16 %v387
      %v740 = vunpack.c.l.b16 %v388
      %v741 = vunpack.c.l.b16 %v389
      %v742 = vunpack.c.l.b16 %v390
      %v743 = vunpack.c.l.b16 %v391
      %v744 = vunpack.c.l.b16 %v392
      %v745 = vunpack.c.l.b16 %v393
      %v746 = vunpack.c.l.b16 %v394
      %v747 = vunpack.c.l.b16 %v395
      %v748 = vunpack.c.l.b16 %v396
      %v749 = vunpack.c.l.b16 %v397
      %v750 = vunpack.c.l.b16 %v398
      %v751 = vunpack.c.l.b16 %v399
      %v752 = vunpack.c.l.b16 %v400
      %v753 = vpack.c.b16 %v722, %v721
      %v754 = vpack.c.b16 %v724, %v723
      %v755 = vpack.c.b16 %v726, %v725
      %v756 = vpack.c.b16 %v728, %v727
      %v757 = vpack.c.b16 %v730, %v729
      %v758 = vpack.c.b16 %v732, %v731
      %v759 = vpack.c.b16 %v734, %v733
      %v760 = vpack.c.b16 %v736, %v735
      %v761 = vpack.c.b16 %v738, %v737
      %v762 = vpack.c.b16 %v740, %v739
      %v763 = vpack.c.b16 %v742, %v741
      %v764 = vpack.c.b16 %v744, %v743
      %v765 = vpack.c.b16 %v746, %v745
      %v766 = vpack.c.b16 %v748, %v747
      %v767 = vpack.c.b16 %v750, %v749
      %v768 = vpack.c.b16 %v752, %v751
      %v770 = vsel %vm226, %v753, 0
      %v773 = vsel %vm226, %v754, 0
      %v776 = vsel %vm226, %v755, 0
      %v779 = vsel %vm226, %v756, 0
      %v782 = vsel %vm226, %v757, 0
      %v785 = vsel %vm226, %v758, 0
      %v788 = vsel %vm226, %v759, 0
      %v791 = vsel %vm226, %v760, 0
      %v794 = vsel %vm226, %v761, 0
      %v797 = vsel %vm226, %v762, 0
      %v800 = vsel %vm226, %v763, 0
      %v803 = vsel %vm226, %v764, 0
      %v806 = vsel %vm226, %v765, 0
      %v809 = vsel %vm226, %v766, 0
      %v812 = vsel %vm226, %v767, 0
      %v815 = vsel %vm226, %v768, 0
      %v818 = vsel %vm596, %v401, 0
      %820 = vmatpush.bf16.msra.mxu0 0
      %821 = vmatpush.bf16.msra.mxu0 0
      %822 = vmatpush.bf16.msra.mxu0 0
      %823 = vmatpush.bf16.msra.mxu0 0
      %824 = vmatpush.bf16.msra.mxu0 0
      %825 = vmatpush.bf16.msra.mxu0 0
      %826 = vmatpush.bf16.msra.mxu0 0
      %827 = vmatpush.bf16.msra.mxu0 %v818
      %828 = vmatmul.bf16.gmra.mxu0 %v770
      %v829 = vpop.f32.mrf.mxu0
      %v830 = vadd.f32 %v610, %v829
      %v831 = vpop.f32.mrf.mxu0
      %v832 = vadd.f32 %v612, %v831
      %833 = vmatmul.bf16.gmra.mxu0 %v773
      %v834 = vpop.f32.mrf.mxu0
      %v835 = vadd.f32 %v615, %v834
      %v836 = vpop.f32.mrf.mxu0
      %v837 = vadd.f32 %v617, %v836
      %838 = vmatmul.bf16.gmra.mxu0 %v776
      %v839 = vpop.f32.mrf.mxu0
      %v840 = vadd.f32 %v620, %v839
      %v841 = vpop.f32.mrf.mxu0
      %v842 = vadd.f32 %v622, %v841
      %843 = vmatmul.bf16.gmra.mxu0 %v779
      %v844 = vpop.f32.mrf.mxu0
      %v845 = vadd.f32 %v625, %v844
      %v846 = vpop.f32.mrf.mxu0
      %v847 = vadd.f32 %v627, %v846
      %848 = vmatmul.bf16.gmra.mxu0 %v782
      %v849 = vpop.f32.mrf.mxu0
      %v850 = vadd.f32 %v630, %v849
      %v851 = vpop.f32.mrf.mxu0
      %v852 = vadd.f32 %v632, %v851
      %853 = vmatmul.bf16.gmra.mxu0 %v785
      %v854 = vpop.f32.mrf.mxu0
      %v855 = vadd.f32 %v635, %v854
      %v856 = vpop.f32.mrf.mxu0
      %v857 = vadd.f32 %v637, %v856
      %858 = vmatmul.bf16.gmra.mxu0 %v788
      %v859 = vpop.f32.mrf.mxu0
      %v860 = vadd.f32 %v640, %v859
      %v861 = vpop.f32.mrf.mxu0
      %v862 = vadd.f32 %v642, %v861
      %863 = vmatmul.bf16.gmra.mxu0 %v791
      %v864 = vpop.f32.mrf.mxu0
      %v865 = vadd.f32 %v645, %v864
      %v866 = vpop.f32.mrf.mxu0
      %v867 = vadd.f32 %v647, %v866
      %868 = vmatmul.bf16.gmra.mxu0 %v794
      %v869 = vpop.f32.mrf.mxu0
      %v870 = vadd.f32 %v650, %v869
      %v871 = vpop.f32.mrf.mxu0
      %v872 = vadd.f32 %v652, %v871
      %873 = vmatmul.bf16.gmra.mxu0 %v797
      %v874 = vpop.f32.mrf.mxu0
      %v875 = vadd.f32 %v655, %v874
      %v876 = vpop.f32.mrf.mxu0
      %v877 = vadd.f32 %v657, %v876
      %878 = vmatmul.bf16.gmra.mxu0 %v800
      %v879 = vpop.f32.mrf.mxu0
      %v880 = vadd.f32 %v660, %v879
      %v881 = vpop.f32.mrf.mxu0
      %v882 = vadd.f32 %v662, %v881
      %883 = vmatmul.bf16.gmra.mxu0 %v803
      %v884 = vpop.f32.mrf.mxu0
      %v885 = vadd.f32 %v665, %v884
      %v886 = vpop.f32.mrf.mxu0
      %v887 = vadd.f32 %v667, %v886
      %888 = vmatmul.bf16.gmra.mxu0 %v806
      %v889 = vpop.f32.mrf.mxu0
      %v890 = vadd.f32 %v670, %v889
      %v891 = vpop.f32.mrf.mxu0
      %v892 = vadd.f32 %v672, %v891
      %893 = vmatmul.bf16.gmra.mxu0 %v809
      %v894 = vpop.f32.mrf.mxu0
      %v895 = vadd.f32 %v675, %v894
      %v896 = vpop.f32.mrf.mxu0
      %v897 = vadd.f32 %v677, %v896
      %898 = vmatmul.bf16.gmra.mxu0 %v812
      %v899 = vpop.f32.mrf.mxu0
      %v900 = vadd.f32 %v680, %v899
      %v901 = vpop.f32.mrf.mxu0
      %v902 = vadd.f32 %v682, %v901
      %903 = vmatmul.bf16.gmra.mxu0 %v815
      %v904 = vpop.f32.mrf.mxu0
      %v905 = vadd.f32 %v685, %v904
      %v906 = vpop.f32.mrf.mxu0
      %v907 = vadd.f32 %v687, %v906
      %908 = vdwg.mxu0
      %v909 = vld [vmem:[#allocation2 + $0x2] sm:$0xff]
      %v910 = vld [vmem:[#allocation2 + $0xa] sm:$0xff]
      %v911 = vld [vmem:[#allocation2 + $0x1a] sm:$0xff]
      %v912 = vld [vmem:[#allocation2 + $0x22] sm:$0xff]
      %v913 = vld [vmem:[#allocation2 + $0x32] sm:$0xff]
      %v914 = vld [vmem:[#allocation2 + $0x3a] sm:$0xff]
      %v915 = vld [vmem:[#allocation2 + $0x4a] sm:$0xff]
      %v916 = vld [vmem:[#allocation2 + $0x52] sm:$0xff]
      %v917 = vld [vmem:[#allocation2 + $0x62] sm:$0xff]
      %v918 = vld [vmem:[#allocation2 + $0x6a] sm:$0xff]
      %v919 = vld [vmem:[#allocation2 + $0x7a] sm:$0xff]
      %v920 = vld [vmem:[#allocation2 + $0x82] sm:$0xff]
      %v921 = vld [vmem:[#allocation2 + $0x92] sm:$0xff]
      %v922 = vld [vmem:[#allocation2 + $0x9a] sm:$0xff]
      %v923 = vld [vmem:[#allocation2 + $0xaa] sm:$0xff]
      %v924 = vld [vmem:[#allocation2 + $0xb2] sm:$0xff]
      %v925 = vld [vmem:[#allocation2 + $0xc2] sm:$0xff]
      %v926 = vld [vmem:[#allocation2 + $0xca] sm:$0xff]
      %v927 = vld [vmem:[#allocation2 + $0xda] sm:$0xff]
      %v928 = vld [vmem:[#allocation2 + $0xe2] sm:$0xff]
      %v929 = vld [vmem:[#allocation2 + $0xf2] sm:$0xff]
      %v930 = vld [vmem:[#allocation2 + $0xfa] sm:$0xff]
      %v931 = vld [vmem:[#allocation2 + $0x10a] sm:$0xff]
      %v932 = vld [vmem:[#allocation2 + $0x112] sm:$0xff]
      %v933 = vld [vmem:[#allocation2 + $0x122] sm:$0xff]
      %v934 = vld [vmem:[#allocation2 + $0x12a] sm:$0xff]
      %v935 = vld [vmem:[#allocation2 + $0x13a] sm:$0xff]
      %v936 = vld [vmem:[#allocation2 + $0x142] sm:$0xff]
      %v937 = vld [vmem:[#allocation2 + $0x152] sm:$0xff]
      %v938 = vld [vmem:[#allocation2 + $0x15a] sm:$0xff]
      %v939 = vld [vmem:[#allocation2 + $0x16a] sm:$0xff]
      %v940 = vld [vmem:[#allocation2 + $0x172] sm:$0xff]
      %v941 = vpack.c.bf16 %v909, %v909
      %v942 = vpack.c.bf16 %v910, %v910
      %v943 = vpack.c.bf16 %v911, %v911
      %v944 = vpack.c.bf16 %v912, %v912
      %v945 = vpack.c.bf16 %v913, %v913
      %v946 = vpack.c.bf16 %v914, %v914
      %v947 = vpack.c.bf16 %v915, %v915
      %v948 = vpack.c.bf16 %v916, %v916
      %v949 = vpack.c.bf16 %v917, %v917
      %v950 = vpack.c.bf16 %v918, %v918
      %v951 = vpack.c.bf16 %v919, %v919
      %v952 = vpack.c.bf16 %v920, %v920
      %v953 = vpack.c.bf16 %v921, %v921
      %v954 = vpack.c.bf16 %v922, %v922
      %v955 = vpack.c.bf16 %v923, %v923
      %v956 = vpack.c.bf16 %v924, %v924
      %v957 = vpack.c.bf16 %v925, %v925
      %v958 = vpack.c.bf16 %v926, %v926
      %v959 = vpack.c.bf16 %v927, %v927
      %v960 = vpack.c.bf16 %v928, %v928
      %v961 = vpack.c.bf16 %v929, %v929
      %v962 = vpack.c.bf16 %v930, %v930
      %v963 = vpack.c.bf16 %v931, %v931
      %v964 = vpack.c.bf16 %v932, %v932
      %v965 = vpack.c.bf16 %v933, %v933
      %v966 = vpack.c.bf16 %v934, %v934
      %v967 = vpack.c.bf16 %v935, %v935
      %v968 = vpack.c.bf16 %v936, %v936
      %v969 = vpack.c.bf16 %v937, %v937
      %v970 = vpack.c.bf16 %v938, %v938
      %v971 = vpack.c.bf16 %v939, %v939
      %v972 = vpack.c.bf16 %v940, %v940
      %s973 = scalar_lea.vmem %s1, 4
      %v974 = vld [vmem:[%s973] sm:$0x3]
      %v1007 = vunpack.c.l.b16 %v941
      %v1008 = vunpack.c.l.b16 %v942
      %v1009 = vunpack.c.l.b16 %v943
      %v1010 = vunpack.c.l.b16 %v944
      %v1011 = vunpack.c.l.b16 %v945
      %v1012 = vunpack.c.l.b16 %v946
      %v1013 = vunpack.c.l.b16 %v947
      %v1014 = vunpack.c.l.b16 %v948
      %v1015 = vunpack.c.l.b16 %v949
      %v1016 = vunpack.c.l.b16 %v950
      %v1017 = vunpack.c.l.b16 %v951
      %v1018 = vunpack.c.l.b16 %v952
      %v1019 = vunpack.c.l.b16 %v953
      %v1020 = vunpack.c.l.b16 %v954
      %v1021 = vunpack.c.l.b16 %v955
      %v1022 = vunpack.c.l.b16 %v956
      %v1023 = vunpack.c.l.b16 %v957
      %v1024 = vunpack.c.l.b16 %v958
      %v1025 = vunpack.c.l.b16 %v959
      %v1026 = vunpack.c.l.b16 %v960
      %v1027 = vunpack.c.l.b16 %v961
      %v1028 = vunpack.c.l.b16 %v962
      %v1029 = vunpack.c.l.b16 %v963
      %v1030 = vunpack.c.l.b16 %v964
      %v1031 = vunpack.c.l.b16 %v965
      %v1032 = vunpack.c.l.b16 %v966
      %v1033 = vunpack.c.l.b16 %v967
      %v1034 = vunpack.c.l.b16 %v968
      %v1035 = vunpack.c.l.b16 %v969
      %v1036 = vunpack.c.l.b16 %v970
      %v1037 = vunpack.c.l.b16 %v971
      %v1038 = vunpack.c.l.b16 %v972
      %v1039 = vpack.c.b16 %v1008, %v1007
      %v1040 = vpack.c.b16 %v1010, %v1009
      %v1041 = vpack.c.b16 %v1012, %v1011
      %v1042 = vpack.c.b16 %v1014, %v1013
      %v1043 = vpack.c.b16 %v1016, %v1015
      %v1044 = vpack.c.b16 %v1018, %v1017
      %v1045 = vpack.c.b16 %v1020, %v1019
      %v1046 = vpack.c.b16 %v1022, %v1021
      %v1047 = vpack.c.b16 %v1024, %v1023
      %v1048 = vpack.c.b16 %v1026, %v1025
      %v1049 = vpack.c.b16 %v1028, %v1027
      %v1050 = vpack.c.b16 %v1030, %v1029
      %v1051 = vpack.c.b16 %v1032, %v1031
      %v1052 = vpack.c.b16 %v1034, %v1033
      %v1053 = vpack.c.b16 %v1036, %v1035
      %v1054 = vpack.c.b16 %v1038, %v1037
      %v1056 = vsel %vm226, %v1039, 0
      %v1059 = vsel %vm226, %v1040, 0
      %v1062 = vsel %vm226, %v1041, 0
      %v1065 = vsel %vm226, %v1042, 0
      %v1068 = vsel %vm226, %v1043, 0
      %v1071 = vsel %vm226, %v1044, 0
      %v1074 = vsel %vm226, %v1045, 0
      %v1077 = vsel %vm226, %v1046, 0
      %v1080 = vsel %vm226, %v1047, 0
      %v1083 = vsel %vm226, %v1048, 0
      %v1086 = vsel %vm226, %v1049, 0
      %v1089 = vsel %vm226, %v1050, 0
      %v1092 = vsel %vm226, %v1051, 0
      %v1095 = vsel %vm226, %v1052, 0
      %v1098 = vsel %vm226, %v1053, 0
      %v1101 = vsel %vm226, %v1054, 0
      %v1104 = vsel %vm596, %v974, 0
      %1106 = vmatpush.bf16.msra.mxu0 0
      %1107 = vmatpush.bf16.msra.mxu0 0
      %1108 = vmatpush.bf16.msra.mxu0 0
      %1109 = vmatpush.bf16.msra.mxu0 0
      %1110 = vmatpush.bf16.msra.mxu0 0
      %1111 = vmatpush.bf16.msra.mxu0 0
      %1112 = vmatpush.bf16.msra.mxu0 0
      %1113 = vmatpush.bf16.msra.mxu0 %v1104
      %1114 = vmatmul.bf16.gmra.mxu0 %v1056
      %v1115 = vpop.f32.mrf.mxu0
      %v1116 = vadd.f32 0.0, %v1115
      %v1117 = vpop.f32.mrf.mxu0
      %v1118 = vadd.f32 0.0, %v1117
      %1119 = vmatmul.bf16.gmra.mxu0 %v1059
      %v1120 = vpop.f32.mrf.mxu0
      %v1121 = vadd.f32 0.0, %v1120
      %v1122 = vpop.f32.mrf.mxu0
      %v1123 = vadd.f32 0.0, %v1122
      %1124 = vmatmul.bf16.gmra.mxu0 %v1062
      %v1125 = vpop.f32.mrf.mxu0
      %v1126 = vadd.f32 0.0, %v1125
      %v1127 = vpop.f32.mrf.mxu0
      %v1128 = vadd.f32 0.0, %v1127
      %1129 = vmatmul.bf16.gmra.mxu0 %v1065
      %v1130 = vpop.f32.mrf.mxu0
      %v1131 = vadd.f32 0.0, %v1130
      %v1132 = vpop.f32.mrf.mxu0
      %v1133 = vadd.f32 0.0, %v1132
      %1134 = vmatmul.bf16.gmra.mxu0 %v1068
      %v1135 = vpop.f32.mrf.mxu0
      %v1136 = vadd.f32 0.0, %v1135
      %v1137 = vpop.f32.mrf.mxu0
      %v1138 = vadd.f32 0.0, %v1137
      %1139 = vmatmul.bf16.gmra.mxu0 %v1071
      %v1140 = vpop.f32.mrf.mxu0
      %v1141 = vadd.f32 0.0, %v1140
      %v1142 = vpop.f32.mrf.mxu0
      %v1143 = vadd.f32 0.0, %v1142
      %1144 = vmatmul.bf16.gmra.mxu0 %v1074
      %v1145 = vpop.f32.mrf.mxu0
      %v1146 = vadd.f32 0.0, %v1145
      %v1147 = vpop.f32.mrf.mxu0
      %v1148 = vadd.f32 0.0, %v1147
      %1149 = vmatmul.bf16.gmra.mxu0 %v1077
      %v1150 = vpop.f32.mrf.mxu0
      %v1151 = vadd.f32 0.0, %v1150
      %v1152 = vpop.f32.mrf.mxu0
      %v1153 = vadd.f32 0.0, %v1152
      %1154 = vmatmul.bf16.gmra.mxu0 %v1080
      %v1155 = vpop.f32.mrf.mxu0
      %v1156 = vadd.f32 0.0, %v1155
      %v1157 = vpop.f32.mrf.mxu0
      %v1158 = vadd.f32 0.0, %v1157
      %1159 = vmatmul.bf16.gmra.mxu0 %v1083
      %v1160 = vpop.f32.mrf.mxu0
      %v1161 = vadd.f32 0.0, %v1160
      %v1162 = vpop.f32.mrf.mxu0
      %v1163 = vadd.f32 0.0, %v1162
      %1164 = vmatmul.bf16.gmra.mxu0 %v1086
      %v1165 = vpop.f32.mrf.mxu0
      %v1166 = vadd.f32 0.0, %v1165
      %v1167 = vpop.f32.mrf.mxu0
      %v1168 = vadd.f32 0.0, %v1167
      %1169 = vmatmul.bf16.gmra.mxu0 %v1089
      %v1170 = vpop.f32.mrf.mxu0
      %v1171 = vadd.f32 0.0, %v1170
      %v1172 = vpop.f32.mrf.mxu0
      %v1173 = vadd.f32 0.0, %v1172
      %1174 = vmatmul.bf16.gmra.mxu0 %v1092
      %v1175 = vpop.f32.mrf.mxu0
      %v1176 = vadd.f32 0.0, %v1175
      %v1177 = vpop.f32.mrf.mxu0
      %v1178 = vadd.f32 0.0, %v1177
      %1179 = vmatmul.bf16.gmra.mxu0 %v1095
      %v1180 = vpop.f32.mrf.mxu0
      %v1181 = vadd.f32 0.0, %v1180
      %v1182 = vpop.f32.mrf.mxu0
      %v1183 = vadd.f32 0.0, %v1182
      %1184 = vmatmul.bf16.gmra.mxu0 %v1098
      %v1185 = vpop.f32.mrf.mxu0
      %v1186 = vadd.f32 0.0, %v1185
      %v1187 = vpop.f32.mrf.mxu0
      %v1188 = vadd.f32 0.0, %v1187
      %1189 = vmatmul.bf16.gmra.mxu0 %v1101
      %v1190 = vpop.f32.mrf.mxu0
      %v1191 = vadd.f32 0.0, %v1190
      %v1192 = vpop.f32.mrf.mxu0
      %v1193 = vadd.f32 0.0, %v1192
      %1194 = vdwg.mxu0
      %v1195 = vadd.f32 %v830, %v1116
      %v1196 = vadd.f32 %v832, %v1118
      %v1197 = vadd.f32 %v835, %v1121
      %v1198 = vadd.f32 %v837, %v1123
      %v1199 = vadd.f32 %v840, %v1126
      %v1200 = vadd.f32 %v842, %v1128
      %v1201 = vadd.f32 %v845, %v1131
      %v1202 = vadd.f32 %v847, %v1133
      %v1203 = vadd.f32 %v850, %v1136
      %v1204 = vadd.f32 %v852, %v1138
      %v1205 = vadd.f32 %v855, %v1141
      %v1206 = vadd.f32 %v857, %v1143
      %v1207 = vadd.f32 %v860, %v1146
      %v1208 = vadd.f32 %v862, %v1148
      %v1209 = vadd.f32 %v865, %v1151
      %v1210 = vadd.f32 %v867, %v1153
      %v1211 = vadd.f32 %v870, %v1156
      %v1212 = vadd.f32 %v872, %v1158
      %v1213 = vadd.f32 %v875, %v1161
      %v1214 = vadd.f32 %v877, %v1163
      %v1215 = vadd.f32 %v880, %v1166
      %v1216 = vadd.f32 %v882, %v1168
      %v1217 = vadd.f32 %v885, %v1171
      %v1218 = vadd.f32 %v887, %v1173
      %v1219 = vadd.f32 %v890, %v1176
      %v1220 = vadd.f32 %v892, %v1178
      %v1221 = vadd.f32 %v895, %v1181
      %v1222 = vadd.f32 %v897, %v1183
      %v1223 = vadd.f32 %v900, %v1186
      %v1224 = vadd.f32 %v902, %v1188
      %v1225 = vadd.f32 %v905, %v1191
      %v1226 = vadd.f32 %v907, %v1193
      %v1227 = vld [vmem:[%s304] sm:$0xff]
      %v1228 = vld [vmem:[%s304 + $0x8] sm:$0xff]
      %v1229 = vld [vmem:[%s304 + $0x18] sm:$0xff]
      %v1230 = vld [vmem:[%s304 + $0x20] sm:$0xff]
      %v1231 = vld [vmem:[%s304 + $0x30] sm:$0xff]
      %v1232 = vld [vmem:[%s304 + $0x38] sm:$0xff]
      %v1233 = vld [vmem:[%s304 + $0x48] sm:$0xff]
      %v1234 = vld [vmem:[%s304 + $0x50] sm:$0xff]
      %v1235 = vld [vmem:[%s304 + $0x60] sm:$0xff]
      %v1236 = vld [vmem:[%s304 + $0x68] sm:$0xff]
      %v1237 = vld [vmem:[%s304 + $0x78] sm:$0xff]
      %v1238 = vld [vmem:[%s304 + $0x80] sm:$0xff]
      %v1239 = vld [vmem:[%s304 + $0x90] sm:$0xff]
      %v1240 = vld [vmem:[%s304 + $0x98] sm:$0xff]
      %v1241 = vld [vmem:[%s304 + $0xa8] sm:$0xff]
      %v1242 = vld [vmem:[%s304 + $0xb0] sm:$0xff]
      %v1243 = vld [vmem:[%s304 + $0xc0] sm:$0xff]
      %v1244 = vld [vmem:[%s304 + $0xc8] sm:$0xff]
      %v1245 = vld [vmem:[%s304 + $0xd8] sm:$0xff]
      %v1246 = vld [vmem:[%s304 + $0xe0] sm:$0xff]
      %v1247 = vld [vmem:[%s304 + $0xf0] sm:$0xff]
      %v1248 = vld [vmem:[%s304 + $0xf8] sm:$0xff]
      %v1249 = vld [vmem:[%s304 + $0x108] sm:$0xff]
      %v1250 = vld [vmem:[%s304 + $0x110] sm:$0xff]
      %v1251 = vld [vmem:[%s304 + $0x120] sm:$0xff]
      %v1252 = vld [vmem:[%s304 + $0x128] sm:$0xff]
      %v1253 = vld [vmem:[%s304 + $0x138] sm:$0xff]
      %v1254 = vld [vmem:[%s304 + $0x140] sm:$0xff]
      %v1255 = vld [vmem:[%s304 + $0x150] sm:$0xff]
      %v1256 = vld [vmem:[%s304 + $0x158] sm:$0xff]
      %v1257 = vld [vmem:[%s304 + $0x168] sm:$0xff]
      %v1258 = vld [vmem:[%s304 + $0x170] sm:$0xff]
      %v1259 = vpack.c.bf16 %v1227, %v1227
      %v1260 = vpack.c.bf16 %v1228, %v1228
      %v1261 = vpack.c.bf16 %v1229, %v1229
      %v1262 = vpack.c.bf16 %v1230, %v1230
      %v1263 = vpack.c.bf16 %v1231, %v1231
      %v1264 = vpack.c.bf16 %v1232, %v1232
      %v1265 = vpack.c.bf16 %v1233, %v1233
      %v1266 = vpack.c.bf16 %v1234, %v1234
      %v1267 = vpack.c.bf16 %v1235, %v1235
      %v1268 = vpack.c.bf16 %v1236, %v1236
      %v1269 = vpack.c.bf16 %v1237, %v1237
      %v1270 = vpack.c.bf16 %v1238, %v1238
      %v1271 = vpack.c.bf16 %v1239, %v1239
      %v1272 = vpack.c.bf16 %v1240, %v1240
      %v1273 = vpack.c.bf16 %v1241, %v1241
      %v1274 = vpack.c.bf16 %v1242, %v1242
      %v1275 = vpack.c.bf16 %v1243, %v1243
      %v1276 = vpack.c.bf16 %v1244, %v1244
      %v1277 = vpack.c.bf16 %v1245, %v1245
      %v1278 = vpack.c.bf16 %v1246, %v1246
      %v1279 = vpack.c.bf16 %v1247, %v1247
      %v1280 = vpack.c.bf16 %v1248, %v1248
      %v1281 = vpack.c.bf16 %v1249, %v1249
      %v1282 = vpack.c.bf16 %v1250, %v1250
      %v1283 = vpack.c.bf16 %v1251, %v1251
      %v1284 = vpack.c.bf16 %v1252, %v1252
      %v1285 = vpack.c.bf16 %v1253, %v1253
      %v1286 = vpack.c.bf16 %v1254, %v1254
      %v1287 = vpack.c.bf16 %v1255, %v1255
      %v1288 = vpack.c.bf16 %v1256, %v1256
      %v1289 = vpack.c.bf16 %v1257, %v1257
      %v1290 = vpack.c.bf16 %v1258, %v1258
      %s1291 = scalar_lea.vmem %s1, 6
      %v1292 = vld [vmem:[%s1291] sm:$0x3]
      %v1325 = vunpack.c.l.b16 %v1259
      %v1326 = vunpack.c.l.b16 %v1260
      %v1327 = vunpack.c.l.b16 %v1261
      %v1328 = vunpack.c.l.b16 %v1262
      %v1329 = vunpack.c.l.b16 %v1263
      %v1330 = vunpack.c.l.b16 %v1264
      %v1331 = vunpack.c.l.b16 %v1265
      %v1332 = vunpack.c.l.b16 %v1266
      %v1333 = vunpack.c.l.b16 %v1267
      %v1334 = vunpack.c.l.b16 %v1268
      %v1335 = vunpack.c.l.b16 %v1269
      %v1336 = vunpack.c.l.b16 %v1270
      %v1337 = vunpack.c.l.b16 %v1271
      %v1338 = vunpack.c.l.b16 %v1272
      %v1339 = vunpack.c.l.b16 %v1273
      %v1340 = vunpack.c.l.b16 %v1274
      %v1341 = vunpack.c.l.b16 %v1275
      %v1342 = vunpack.c.l.b16 %v1276
      %v1343 = vunpack.c.l.b16 %v1277
      %v1344 = vunpack.c.l.b16 %v1278
      %v1345 = vunpack.c.l.b16 %v1279
      %v1346 = vunpack.c.l.b16 %v1280
      %v1347 = vunpack.c.l.b16 %v1281
      %v1348 = vunpack.c.l.b16 %v1282
      %v1349 = vunpack.c.l.b16 %v1283
      %v1350 = vunpack.c.l.b16 %v1284
      %v1351 = vunpack.c.l.b16 %v1285
      %v1352 = vunpack.c.l.b16 %v1286
      %v1353 = vunpack.c.l.b16 %v1287
      %v1354 = vunpack.c.l.b16 %v1288
      %v1355 = vunpack.c.l.b16 %v1289
      %v1356 = vunpack.c.l.b16 %v1290
      %v1357 = vpack.c.b16 %v1326, %v1325
      %v1358 = vpack.c.b16 %v1328, %v1327
      %v1359 = vpack.c.b16 %v1330, %v1329
      %v1360 = vpack.c.b16 %v1332, %v1331
      %v1361 = vpack.c.b16 %v1334, %v1333
      %v1362 = vpack.c.b16 %v1336, %v1335
      %v1363 = vpack.c.b16 %v1338, %v1337
      %v1364 = vpack.c.b16 %v1340, %v1339
      %v1365 = vpack.c.b16 %v1342, %v1341
      %v1366 = vpack.c.b16 %v1344, %v1343
      %v1367 = vpack.c.b16 %v1346, %v1345
      %v1368 = vpack.c.b16 %v1348, %v1347
      %v1369 = vpack.c.b16 %v1350, %v1349
      %v1370 = vpack.c.b16 %v1352, %v1351
      %v1371 = vpack.c.b16 %v1354, %v1353
      %v1372 = vpack.c.b16 %v1356, %v1355
      %v1374 = vsel %vm226, %v1357, 0
      %v1377 = vsel %vm226, %v1358, 0
      %v1380 = vsel %vm226, %v1359, 0
      %v1383 = vsel %vm226, %v1360, 0
      %v1386 = vsel %vm226, %v1361, 0
      %v1389 = vsel %vm226, %v1362, 0
      %v1392 = vsel %vm226, %v1363, 0
      %v1395 = vsel %vm226, %v1364, 0
      %v1398 = vsel %vm226, %v1365, 0
      %v1401 = vsel %vm226, %v1366, 0
      %v1404 = vsel %vm226, %v1367, 0
      %v1407 = vsel %vm226, %v1368, 0
      %v1410 = vsel %vm226, %v1369, 0
      %v1413 = vsel %vm226, %v1370, 0
      %v1416 = vsel %vm226, %v1371, 0
      %v1419 = vsel %vm226, %v1372, 0
      %v1422 = vsel %vm596, %v1292, 0
      %1424 = vmatpush.bf16.msra.mxu0 0
      %1425 = vmatpush.bf16.msra.mxu0 0
      %1426 = vmatpush.bf16.msra.mxu0 0
      %1427 = vmatpush.bf16.msra.mxu0 0
      %1428 = vmatpush.bf16.msra.mxu0 0
      %1429 = vmatpush.bf16.msra.mxu0 0
      %1430 = vmatpush.bf16.msra.mxu0 0
      %1431 = vmatpush.bf16.msra.mxu0 %v1422
      %1432 = vmatmul.bf16.gmra.mxu0 %v1374
      %v1433 = vpop.f32.mrf.mxu0
      %v1434 = vadd.f32 0.0, %v1433
      %v1435 = vpop.f32.mrf.mxu0
      %v1436 = vadd.f32 0.0, %v1435
      %1437 = vmatmul.bf16.gmra.mxu0 %v1377
      %v1438 = vpop.f32.mrf.mxu0
      %v1439 = vadd.f32 0.0, %v1438
      %v1440 = vpop.f32.mrf.mxu0
      %v1441 = vadd.f32 0.0, %v1440
      %1442 = vmatmul.bf16.gmra.mxu0 %v1380
      %v1443 = vpop.f32.mrf.mxu0
      %v1444 = vadd.f32 0.0, %v1443
      %v1445 = vpop.f32.mrf.mxu0
      %v1446 = vadd.f32 0.0, %v1445
      %1447 = vmatmul.bf16.gmra.mxu0 %v1383
      %v1448 = vpop.f32.mrf.mxu0
      %v1449 = vadd.f32 0.0, %v1448
      %v1450 = vpop.f32.mrf.mxu0
      %v1451 = vadd.f32 0.0, %v1450
      %1452 = vmatmul.bf16.gmra.mxu0 %v1386
      %v1453 = vpop.f32.mrf.mxu0
      %v1454 = vadd.f32 0.0, %v1453
      %v1455 = vpop.f32.mrf.mxu0
      %v1456 = vadd.f32 0.0, %v1455
      %1457 = vmatmul.bf16.gmra.mxu0 %v1389
      %v1458 = vpop.f32.mrf.mxu0
      %v1459 = vadd.f32 0.0, %v1458
      %v1460 = vpop.f32.mrf.mxu0
      %v1461 = vadd.f32 0.0, %v1460
      %1462 = vmatmul.bf16.gmra.mxu0 %v1392
      %v1463 = vpop.f32.mrf.mxu0
      %v1464 = vadd.f32 0.0, %v1463
      %v1465 = vpop.f32.mrf.mxu0
      %v1466 = vadd.f32 0.0, %v1465
      %1467 = vmatmul.bf16.gmra.mxu0 %v1395
      %v1468 = vpop.f32.mrf.mxu0
      %v1469 = vadd.f32 0.0, %v1468
      %v1470 = vpop.f32.mrf.mxu0
      %v1471 = vadd.f32 0.0, %v1470
      %1472 = vmatmul.bf16.gmra.mxu0 %v1398
      %v1473 = vpop.f32.mrf.mxu0
      %v1474 = vadd.f32 0.0, %v1473
      %v1475 = vpop.f32.mrf.mxu0
      %v1476 = vadd.f32 0.0, %v1475
      %1477 = vmatmul.bf16.gmra.mxu0 %v1401
      %v1478 = vpop.f32.mrf.mxu0
      %v1479 = vadd.f32 0.0, %v1478
      %v1480 = vpop.f32.mrf.mxu0
      %v1481 = vadd.f32 0.0, %v1480
      %1482 = vmatmul.bf16.gmra.mxu0 %v1404
      %v1483 = vpop.f32.mrf.mxu0
      %v1484 = vadd.f32 0.0, %v1483
      %v1485 = vpop.f32.mrf.mxu0
      %v1486 = vadd.f32 0.0, %v1485
      %1487 = vmatmul.bf16.gmra.mxu0 %v1407
      %v1488 = vpop.f32.mrf.mxu0
      %v1489 = vadd.f32 0.0, %v1488
      %v1490 = vpop.f32.mrf.mxu0
      %v1491 = vadd.f32 0.0, %v1490
      %1492 = vmatmul.bf16.gmra.mxu0 %v1410
      %v1493 = vpop.f32.mrf.mxu0
      %v1494 = vadd.f32 0.0, %v1493
      %v1495 = vpop.f32.mrf.mxu0
      %v1496 = vadd.f32 0.0, %v1495
      %1497 = vmatmul.bf16.gmra.mxu0 %v1413
      %v1498 = vpop.f32.mrf.mxu0
      %v1499 = vadd.f32 0.0, %v1498
      %v1500 = vpop.f32.mrf.mxu0
      %v1501 = vadd.f32 0.0, %v1500
      %1502 = vmatmul.bf16.gmra.mxu0 %v1416
      %v1503 = vpop.f32.mrf.mxu0
      %v1504 = vadd.f32 0.0, %v1503
      %v1505 = vpop.f32.mrf.mxu0
      %v1506 = vadd.f32 0.0, %v1505
      %1507 = vmatmul.bf16.gmra.mxu0 %v1419
      %v1508 = vpop.f32.mrf.mxu0
      %v1509 = vadd.f32 0.0, %v1508
      %v1510 = vpop.f32.mrf.mxu0
      %v1511 = vadd.f32 0.0, %v1510
      %1512 = vdwg.mxu0
      %v1513 = vadd.f32 %v1195, %v1434
      %v1514 = vadd.f32 %v1196, %v1436
      %v1515 = vadd.f32 %v1197, %v1439
      %v1516 = vadd.f32 %v1198, %v1441
      %v1517 = vadd.f32 %v1199, %v1444
      %v1518 = vadd.f32 %v1200, %v1446
      %v1519 = vadd.f32 %v1201, %v1449
      %v1520 = vadd.f32 %v1202, %v1451
      %v1521 = vadd.f32 %v1203, %v1454
      %v1522 = vadd.f32 %v1204, %v1456
      %v1523 = vadd.f32 %v1205, %v1459
      %v1524 = vadd.f32 %v1206, %v1461
      %v1525 = vadd.f32 %v1207, %v1464
      %v1526 = vadd.f32 %v1208, %v1466
      %v1527 = vadd.f32 %v1209, %v1469
      %v1528 = vadd.f32 %v1210, %v1471
      %v1529 = vadd.f32 %v1211, %v1474
      %v1530 = vadd.f32 %v1212, %v1476
      %v1531 = vadd.f32 %v1213, %v1479
      %v1532 = vadd.f32 %v1214, %v1481
      %v1533 = vadd.f32 %v1215, %v1484
      %v1534 = vadd.f32 %v1216, %v1486
      %v1535 = vadd.f32 %v1217, %v1489
      %v1536 = vadd.f32 %v1218, %v1491
      %v1537 = vadd.f32 %v1219, %v1494
      %v1538 = vadd.f32 %v1220, %v1496
      %v1539 = vadd.f32 %v1221, %v1499
      %v1540 = vadd.f32 %v1222, %v1501
      %v1541 = vadd.f32 %v1223, %v1504
      %v1542 = vadd.f32 %v1224, %v1506
      %v1543 = vadd.f32 %v1225, %v1509
      %v1544 = vadd.f32 %v1226, %v1511
      %v1545 = vld [vmem:[%s304 + $0x1] sm:$0xff]
      %v1546 = vld [vmem:[%s304 + $0x9] sm:$0xff]
      %v1547 = vld [vmem:[%s304 + $0x19] sm:$0xff]
      %v1548 = vld [vmem:[%s304 + $0x21] sm:$0xff]
      %v1549 = vld [vmem:[%s304 + $0x31] sm:$0xff]
      %v1550 = vld [vmem:[%s304 + $0x39] sm:$0xff]
      %v1551 = vld [vmem:[%s304 + $0x49] sm:$0xff]
      %v1552 = vld [vmem:[%s304 + $0x51] sm:$0xff]
      %v1553 = vld [vmem:[%s304 + $0x61] sm:$0xff]
      %v1554 = vld [vmem:[%s304 + $0x69] sm:$0xff]
      %v1555 = vld [vmem:[%s304 + $0x79] sm:$0xff]
      %v1556 = vld [vmem:[%s304 + $0x81] sm:$0xff]
      %v1557 = vld [vmem:[%s304 + $0x91] sm:$0xff]
      %v1558 = vld [vmem:[%s304 + $0x99] sm:$0xff]
      %v1559 = vld [vmem:[%s304 + $0xa9] sm:$0xff]
      %v1560 = vld [vmem:[%s304 + $0xb1] sm:$0xff]
      %v1561 = vld [vmem:[%s304 + $0xc1] sm:$0xff]
      %v1562 = vld [vmem:[%s304 + $0xc9] sm:$0xff]
      %v1563 = vld [vmem:[%s304 + $0xd9] sm:$0xff]
      %v1564 = vld [vmem:[%s304 + $0xe1] sm:$0xff]
      %v1565 = vld [vmem:[%s304 + $0xf1] sm:$0xff]
      %v1566 = vld [vmem:[%s304 + $0xf9] sm:$0xff]
      %v1567 = vld [vmem:[%s304 + $0x109] sm:$0xff]
      %v1568 = vld [vmem:[%s304 + $0x111] sm:$0xff]
      %v1569 = vld [vmem:[%s304 + $0x121] sm:$0xff]
      %v1570 = vld [vmem:[%s304 + $0x129] sm:$0xff]
      %v1571 = vld [vmem:[%s304 + $0x139] sm:$0xff]
      %v1572 = vld [vmem:[%s304 + $0x141] sm:$0xff]
      %v1573 = vld [vmem:[%s304 + $0x151] sm:$0xff]
      %v1574 = vld [vmem:[%s304 + $0x159] sm:$0xff]
      %v1575 = vld [vmem:[%s304 + $0x169] sm:$0xff]
      %v1576 = vld [vmem:[%s304 + $0x171] sm:$0xff]
      %v1577 = vpack.c.bf16 %v1545, %v1545
      %v1578 = vpack.c.bf16 %v1546, %v1546
      %v1579 = vpack.c.bf16 %v1547, %v1547
      %v1580 = vpack.c.bf16 %v1548, %v1548
      %v1581 = vpack.c.bf16 %v1549, %v1549
      %v1582 = vpack.c.bf16 %v1550, %v1550
      %v1583 = vpack.c.bf16 %v1551, %v1551
      %v1584 = vpack.c.bf16 %v1552, %v1552
      %v1585 = vpack.c.bf16 %v1553, %v1553
      %v1586 = vpack.c.bf16 %v1554, %v1554
      %v1587 = vpack.c.bf16 %v1555, %v1555
      %v1588 = vpack.c.bf16 %v1556, %v1556
      %v1589 = vpack.c.bf16 %v1557, %v1557
      %v1590 = vpack.c.bf16 %v1558, %v1558
      %v1591 = vpack.c.bf16 %v1559, %v1559
      %v1592 = vpack.c.bf16 %v1560, %v1560
      %v1593 = vpack.c.bf16 %v1561, %v1561
      %v1594 = vpack.c.bf16 %v1562, %v1562
      %v1595 = vpack.c.bf16 %v1563, %v1563
      %v1596 = vpack.c.bf16 %v1564, %v1564
      %v1597 = vpack.c.bf16 %v1565, %v1565
      %v1598 = vpack.c.bf16 %v1566, %v1566
      %v1599 = vpack.c.bf16 %v1567, %v1567
      %v1600 = vpack.c.bf16 %v1568, %v1568
      %v1601 = vpack.c.bf16 %v1569, %v1569
      %v1602 = vpack.c.bf16 %v1570, %v1570
      %v1603 = vpack.c.bf16 %v1571, %v1571
      %v1604 = vpack.c.bf16 %v1572, %v1572
      %v1605 = vpack.c.bf16 %v1573, %v1573
      %v1606 = vpack.c.bf16 %v1574, %v1574
      %v1607 = vpack.c.bf16 %v1575, %v1575
      %v1608 = vpack.c.bf16 %v1576, %v1576
      %s1609 = scalar_lea.vmem %s1, 8
      %v1610 = vld [vmem:[%s1609] sm:$0x3]
      %v1643 = vunpack.c.l.b16 %v1577
      %v1644 = vunpack.c.l.b16 %v1578
      %v1645 = vunpack.c.l.b16 %v1579
      %v1646 = vunpack.c.l.b16 %v1580
      %v1647 = vunpack.c.l.b16 %v1581
      %v1648 = vunpack.c.l.b16 %v1582
      %v1649 = vunpack.c.l.b16 %v1583
      %v1650 = vunpack.c.l.b16 %v1584
      %v1651 = vunpack.c.l.b16 %v1585
      %v1652 = vunpack.c.l.b16 %v1586
      %v1653 = vunpack.c.l.b16 %v1587
      %v1654 = vunpack.c.l.b16 %v1588
      %v1655 = vunpack.c.l.b16 %v1589
      %v1656 = vunpack.c.l.b16 %v1590
      %v1657 = vunpack.c.l.b16 %v1591
      %v1658 = vunpack.c.l.b16 %v1592
      %v1659 = vunpack.c.l.b16 %v1593
      %v1660 = vunpack.c.l.b16 %v1594
      %v1661 = vunpack.c.l.b16 %v1595
      %v1662 = vunpack.c.l.b16 %v1596
      %v1663 = vunpack.c.l.b16 %v1597
      %v1664 = vunpack.c.l.b16 %v1598
      %v1665 = vunpack.c.l.b16 %v1599
      %v1666 = vunpack.c.l.b16 %v1600
      %v1667 = vunpack.c.l.b16 %v1601
      %v1668 = vunpack.c.l.b16 %v1602
      %v1669 = vunpack.c.l.b16 %v1603
      %v1670 = vunpack.c.l.b16 %v1604
      %v1671 = vunpack.c.l.b16 %v1605
      %v1672 = vunpack.c.l.b16 %v1606
      %v1673 = vunpack.c.l.b16 %v1607
      %v1674 = vunpack.c.l.b16 %v1608
      %v1675 = vpack.c.b16 %v1644, %v1643
      %v1676 = vpack.c.b16 %v1646, %v1645
      %v1677 = vpack.c.b16 %v1648, %v1647
      %v1678 = vpack.c.b16 %v1650, %v1649
      %v1679 = vpack.c.b16 %v1652, %v1651
      %v1680 = vpack.c.b16 %v1654, %v1653
      %v1681 = vpack.c.b16 %v1656, %v1655
      %v1682 = vpack.c.b16 %v1658, %v1657
      %v1683 = vpack.c.b16 %v1660, %v1659
      %v1684 = vpack.c.b16 %v1662, %v1661
      %v1685 = vpack.c.b16 %v1664, %v1663
      %v1686 = vpack.c.b16 %v1666, %v1665
      %v1687 = vpack.c.b16 %v1668, %v1667
      %v1688 = vpack.c.b16 %v1670, %v1669
      %v1689 = vpack.c.b16 %v1672, %v1671
      %v1690 = vpack.c.b16 %v1674, %v1673
      %v1692 = vsel %vm226, %v1675, 0
      %v1695 = vsel %vm226, %v1676, 0
      %v1698 = vsel %vm226, %v1677, 0
      %v1701 = vsel %vm226, %v1678, 0
      %v1704 = vsel %vm226, %v1679, 0
      %v1707 = vsel %vm226, %v1680, 0
      %v1710 = vsel %vm226, %v1681, 0
      %v1713 = vsel %vm226, %v1682, 0
      %v1716 = vsel %vm226, %v1683, 0
      %v1719 = vsel %vm226, %v1684, 0
      %v1722 = vsel %vm226, %v1685, 0
      %v1725 = vsel %vm226, %v1686, 0
      %v1728 = vsel %vm226, %v1687, 0
      %v1731 = vsel %vm226, %v1688, 0
      %v1734 = vsel %vm226, %v1689, 0
      %v1737 = vsel %vm226, %v1690, 0
      %v1740 = vsel %vm596, %v1610, 0
      %1742 = vmatpush.bf16.msra.mxu0 0
      %1743 = vmatpush.bf16.msra.mxu0 0
      %1744 = vmatpush.bf16.msra.mxu0 0
      %1745 = vmatpush.bf16.msra.mxu0 0
      %1746 = vmatpush.bf16.msra.mxu0 0
      %1747 = vmatpush.bf16.msra.mxu0 0
      %1748 = vmatpush.bf16.msra.mxu0 0
      %1749 = vmatpush.bf16.msra.mxu0 %v1740
      %1750 = vmatmul.bf16.gmra.mxu0 %v1692
      %v1751 = vpop.f32.mrf.mxu0
      %v1752 = vadd.f32 0.0, %v1751
      %v1753 = vpop.f32.mrf.mxu0
      %v1754 = vadd.f32 0.0, %v1753
      %1755 = vmatmul.bf16.gmra.mxu0 %v1695
      %v1756 = vpop.f32.mrf.mxu0
      %v1757 = vadd.f32 0.0, %v1756
      %v1758 = vpop.f32.mrf.mxu0
      %v1759 = vadd.f32 0.0, %v1758
      %1760 = vmatmul.bf16.gmra.mxu0 %v1698
      %v1761 = vpop.f32.mrf.mxu0
      %v1762 = vadd.f32 0.0, %v1761
      %v1763 = vpop.f32.mrf.mxu0
      %v1764 = vadd.f32 0.0, %v1763
      %1765 = vmatmul.bf16.gmra.mxu0 %v1701
      %v1766 = vpop.f32.mrf.mxu0
      %v1767 = vadd.f32 0.0, %v1766
      %v1768 = vpop.f32.mrf.mxu0
      %v1769 = vadd.f32 0.0, %v1768
      %1770 = vmatmul.bf16.gmra.mxu0 %v1704
      %v1771 = vpop.f32.mrf.mxu0
      %v1772 = vadd.f32 0.0, %v1771
      %v1773 = vpop.f32.mrf.mxu0
      %v1774 = vadd.f32 0.0, %v1773
      %1775 = vmatmul.bf16.gmra.mxu0 %v1707
      %v1776 = vpop.f32.mrf.mxu0
      %v1777 = vadd.f32 0.0, %v1776
      %v1778 = vpop.f32.mrf.mxu0
      %v1779 = vadd.f32 0.0, %v1778
      %1780 = vmatmul.bf16.gmra.mxu0 %v1710
      %v1781 = vpop.f32.mrf.mxu0
      %v1782 = vadd.f32 0.0, %v1781
      %v1783 = vpop.f32.mrf.mxu0
      %v1784 = vadd.f32 0.0, %v1783
      %1785 = vmatmul.bf16.gmra.mxu0 %v1713
      %v1786 = vpop.f32.mrf.mxu0
      %v1787 = vadd.f32 0.0, %v1786
      %v1788 = vpop.f32.mrf.mxu0
      %v1789 = vadd.f32 0.0, %v1788
      %1790 = vmatmul.bf16.gmra.mxu0 %v1716
      %v1791 = vpop.f32.mrf.mxu0
      %v1792 = vadd.f32 0.0, %v1791
      %v1793 = vpop.f32.mrf.mxu0
      %v1794 = vadd.f32 0.0, %v1793
      %1795 = vmatmul.bf16.gmra.mxu0 %v1719
      %v1796 = vpop.f32.mrf.mxu0
      %v1797 = vadd.f32 0.0, %v1796
      %v1798 = vpop.f32.mrf.mxu0
      %v1799 = vadd.f32 0.0, %v1798
      %1800 = vmatmul.bf16.gmra.mxu0 %v1722
      %v1801 = vpop.f32.mrf.mxu0
      %v1802 = vadd.f32 0.0, %v1801
      %v1803 = vpop.f32.mrf.mxu0
      %v1804 = vadd.f32 0.0, %v1803
      %1805 = vmatmul.bf16.gmra.mxu0 %v1725
      %v1806 = vpop.f32.mrf.mxu0
      %v1807 = vadd.f32 0.0, %v1806
      %v1808 = vpop.f32.mrf.mxu0
      %v1809 = vadd.f32 0.0, %v1808
      %1810 = vmatmul.bf16.gmra.mxu0 %v1728
      %v1811 = vpop.f32.mrf.mxu0
      %v1812 = vadd.f32 0.0, %v1811
      %v1813 = vpop.f32.mrf.mxu0
      %v1814 = vadd.f32 0.0, %v1813
      %1815 = vmatmul.bf16.gmra.mxu0 %v1731
      %v1816 = vpop.f32.mrf.mxu0
      %v1817 = vadd.f32 0.0, %v1816
      %v1818 = vpop.f32.mrf.mxu0
      %v1819 = vadd.f32 0.0, %v1818
      %1820 = vmatmul.bf16.gmra.mxu0 %v1734
      %v1821 = vpop.f32.mrf.mxu0
      %v1822 = vadd.f32 0.0, %v1821
      %v1823 = vpop.f32.mrf.mxu0
      %v1824 = vadd.f32 0.0, %v1823
      %1825 = vmatmul.bf16.gmra.mxu0 %v1737
      %v1826 = vpop.f32.mrf.mxu0
      %v1827 = vadd.f32 0.0, %v1826
      %v1828 = vpop.f32.mrf.mxu0
      %v1829 = vadd.f32 0.0, %v1828
      %1830 = vdwg.mxu0
      %v1831 = vadd.f32 %v1513, %v1752
      %v1832 = vadd.f32 %v1514, %v1754
      %v1833 = vadd.f32 %v1515, %v1757
      %v1834 = vadd.f32 %v1516, %v1759
      %v1835 = vadd.f32 %v1517, %v1762
      %v1836 = vadd.f32 %v1518, %v1764
      %v1837 = vadd.f32 %v1519, %v1767
      %v1838 = vadd.f32 %v1520, %v1769
      %v1839 = vadd.f32 %v1521, %v1772
      %v1840 = vadd.f32 %v1522, %v1774
      %v1841 = vadd.f32 %v1523, %v1777
      %v1842 = vadd.f32 %v1524, %v1779
      %v1843 = vadd.f32 %v1525, %v1782
      %v1844 = vadd.f32 %v1526, %v1784
      %v1845 = vadd.f32 %v1527, %v1787
      %v1846 = vadd.f32 %v1528, %v1789
      %v1847 = vadd.f32 %v1529, %v1792
      %v1848 = vadd.f32 %v1530, %v1794
      %v1849 = vadd.f32 %v1531, %v1797
      %v1850 = vadd.f32 %v1532, %v1799
      %v1851 = vadd.f32 %v1533, %v1802
      %v1852 = vadd.f32 %v1534, %v1804
      %v1853 = vadd.f32 %v1535, %v1807
      %v1854 = vadd.f32 %v1536, %v1809
      %v1855 = vadd.f32 %v1537, %v1812
      %v1856 = vadd.f32 %v1538, %v1814
      %v1857 = vadd.f32 %v1539, %v1817
      %v1858 = vadd.f32 %v1540, %v1819
      %v1859 = vadd.f32 %v1541, %v1822
      %v1860 = vadd.f32 %v1542, %v1824
      %v1861 = vadd.f32 %v1543, %v1827
      %v1862 = vadd.f32 %v1544, %v1829
      %v1863 = vld [vmem:[%s304 + $0x2] sm:$0xff]
      %v1864 = vld [vmem:[%s304 + $0xa] sm:$0xff]
      %v1865 = vld [vmem:[%s304 + $0x1a] sm:$0xff]
      %v1866 = vld [vmem:[%s304 + $0x22] sm:$0xff]
      %v1867 = vld [vmem:[%s304 + $0x32] sm:$0xff]
      %v1868 = vld [vmem:[%s304 + $0x3a] sm:$0xff]
      %v1869 = vld [vmem:[%s304 + $0x4a] sm:$0xff]
      %v1870 = vld [vmem:[%s304 + $0x52] sm:$0xff]
      %v1871 = vld [vmem:[%s304 + $0x62] sm:$0xff]
      %v1872 = vld [vmem:[%s304 + $0x6a] sm:$0xff]
      %v1873 = vld [vmem:[%s304 + $0x7a] sm:$0xff]
      %v1874 = vld [vmem:[%s304 + $0x82] sm:$0xff]
      %v1875 = vld [vmem:[%s304 + $0x92] sm:$0xff]
      %v1876 = vld [vmem:[%s304 + $0x9a] sm:$0xff]
      %v1877 = vld [vmem:[%s304 + $0xaa] sm:$0xff]
      %v1878 = vld [vmem:[%s304 + $0xb2] sm:$0xff]
      %v1879 = vld [vmem:[%s304 + $0xc2] sm:$0xff]
      %v1880 = vld [vmem:[%s304 + $0xca] sm:$0xff]
      %v1881 = vld [vmem:[%s304 + $0xda] sm:$0xff]
      %v1882 = vld [vmem:[%s304 + $0xe2] sm:$0xff]
      %v1883 = vld [vmem:[%s304 + $0xf2] sm:$0xff]
      %v1884 = vld [vmem:[%s304 + $0xfa] sm:$0xff]
      %v1885 = vld [vmem:[%s304 + $0x10a] sm:$0xff]
      %v1886 = vld [vmem:[%s304 + $0x112] sm:$0xff]
      %v1887 = vld [vmem:[%s304 + $0x122] sm:$0xff]
      %v1888 = vld [vmem:[%s304 + $0x12a] sm:$0xff]
      %v1889 = vld [vmem:[%s304 + $0x13a] sm:$0xff]
      %v1890 = vld [vmem:[%s304 + $0x142] sm:$0xff]
      %v1891 = vld [vmem:[%s304 + $0x152] sm:$0xff]
      %v1892 = vld [vmem:[%s304 + $0x15a] sm:$0xff]
      %v1893 = vld [vmem:[%s304 + $0x16a] sm:$0xff]
      %v1894 = vld [vmem:[%s304 + $0x172] sm:$0xff]
      %v1895 = vpack.c.bf16 %v1863, %v1863
      %v1896 = vpack.c.bf16 %v1864, %v1864
      %v1897 = vpack.c.bf16 %v1865, %v1865
      %v1898 = vpack.c.bf16 %v1866, %v1866
      %v1899 = vpack.c.bf16 %v1867, %v1867
      %v1900 = vpack.c.bf16 %v1868, %v1868
      %v1901 = vpack.c.bf16 %v1869, %v1869
      %v1902 = vpack.c.bf16 %v1870, %v1870
      %v1903 = vpack.c.bf16 %v1871, %v1871
      %v1904 = vpack.c.bf16 %v1872, %v1872
      %v1905 = vpack.c.bf16 %v1873, %v1873
      %v1906 = vpack.c.bf16 %v1874, %v1874
      %v1907 = vpack.c.bf16 %v1875, %v1875
      %v1908 = vpack.c.bf16 %v1876, %v1876
      %v1909 = vpack.c.bf16 %v1877, %v1877
      %v1910 = vpack.c.bf16 %v1878, %v1878
      %v1911 = vpack.c.bf16 %v1879, %v1879
      %v1912 = vpack.c.bf16 %v1880, %v1880
      %v1913 = vpack.c.bf16 %v1881, %v1881
      %v1914 = vpack.c.bf16 %v1882, %v1882
      %v1915 = vpack.c.bf16 %v1883, %v1883
      %v1916 = vpack.c.bf16 %v1884, %v1884
      %v1917 = vpack.c.bf16 %v1885, %v1885
      %v1918 = vpack.c.bf16 %v1886, %v1886
      %v1919 = vpack.c.bf16 %v1887, %v1887
      %v1920 = vpack.c.bf16 %v1888, %v1888
      %v1921 = vpack.c.bf16 %v1889, %v1889
      %v1922 = vpack.c.bf16 %v1890, %v1890
      %v1923 = vpack.c.bf16 %v1891, %v1891
      %v1924 = vpack.c.bf16 %v1892, %v1892
      %v1925 = vpack.c.bf16 %v1893, %v1893
      %v1926 = vpack.c.bf16 %v1894, %v1894
      %s1927 = scalar_lea.vmem %s1, 10
      %v1928 = vld [vmem:[%s1927] sm:$0x3]
      %v1961 = vunpack.c.l.b16 %v1895
      %v1962 = vunpack.c.l.b16 %v1896
      %v1963 = vunpack.c.l.b16 %v1897
      %v1964 = vunpack.c.l.b16 %v1898
      %v1965 = vunpack.c.l.b16 %v1899
      %v1966 = vunpack.c.l.b16 %v1900
      %v1967 = vunpack.c.l.b16 %v1901
      %v1968 = vunpack.c.l.b16 %v1902
      %v1969 = vunpack.c.l.b16 %v1903
      %v1970 = vunpack.c.l.b16 %v1904
      %v1971 = vunpack.c.l.b16 %v1905
      %v1972 = vunpack.c.l.b16 %v1906
      %v1973 = vunpack.c.l.b16 %v1907
      %v1974 = vunpack.c.l.b16 %v1908
      %v1975 = vunpack.c.l.b16 %v1909
      %v1976 = vunpack.c.l.b16 %v1910
      %v1977 = vunpack.c.l.b16 %v1911
      %v1978 = vunpack.c.l.b16 %v1912
      %v1979 = vunpack.c.l.b16 %v1913
      %v1980 = vunpack.c.l.b16 %v1914
      %v1981 = vunpack.c.l.b16 %v1915
      %v1982 = vunpack.c.l.b16 %v1916
      %v1983 = vunpack.c.l.b16 %v1917
      %v1984 = vunpack.c.l.b16 %v1918
      %v1985 = vunpack.c.l.b16 %v1919
      %v1986 = vunpack.c.l.b16 %v1920
      %v1987 = vunpack.c.l.b16 %v1921
      %v1988 = vunpack.c.l.b16 %v1922
      %v1989 = vunpack.c.l.b16 %v1923
      %v1990 = vunpack.c.l.b16 %v1924
      %v1991 = vunpack.c.l.b16 %v1925
      %v1992 = vunpack.c.l.b16 %v1926
      %v1993 = vpack.c.b16 %v1962, %v1961
      %v1994 = vpack.c.b16 %v1964, %v1963
      %v1995 = vpack.c.b16 %v1966, %v1965
      %v1996 = vpack.c.b16 %v1968, %v1967
      %v1997 = vpack.c.b16 %v1970, %v1969
      %v1998 = vpack.c.b16 %v1972, %v1971
      %v1999 = vpack.c.b16 %v1974, %v1973
      %v2000 = vpack.c.b16 %v1976, %v1975
      %v2001 = vpack.c.b16 %v1978, %v1977
      %v2002 = vpack.c.b16 %v1980, %v1979
      %v2003 = vpack.c.b16 %v1982, %v1981
      %v2004 = vpack.c.b16 %v1984, %v1983
      %v2005 = vpack.c.b16 %v1986, %v1985
      %v2006 = vpack.c.b16 %v1988, %v1987
      %v2007 = vpack.c.b16 %v1990, %v1989
      %v2008 = vpack.c.b16 %v1992, %v1991
      %v2010 = vsel %vm226, %v1993, 0
      %v2013 = vsel %vm226, %v1994, 0
      %v2016 = vsel %vm226, %v1995, 0
      %v2019 = vsel %vm226, %v1996, 0
      %v2022 = vsel %vm226, %v1997, 0
      %v2025 = vsel %vm226, %v1998, 0
      %v2028 = vsel %vm226, %v1999, 0
      %v2031 = vsel %vm226, %v2000, 0
      %v2034 = vsel %vm226, %v2001, 0
      %v2037 = vsel %vm226, %v2002, 0
      %v2040 = vsel %vm226, %v2003, 0
      %v2043 = vsel %vm226, %v2004, 0
      %v2046 = vsel %vm226, %v2005, 0
      %v2049 = vsel %vm226, %v2006, 0
      %v2052 = vsel %vm226, %v2007, 0
      %v2055 = vsel %vm226, %v2008, 0
      %v2058 = vsel %vm596, %v1928, 0
      %2060 = vmatpush.bf16.msra.mxu0 0
      %2061 = vmatpush.bf16.msra.mxu0 0
      %2062 = vmatpush.bf16.msra.mxu0 0
      %2063 = vmatpush.bf16.msra.mxu0 0
      %2064 = vmatpush.bf16.msra.mxu0 0
      %2065 = vmatpush.bf16.msra.mxu0 0
      %2066 = vmatpush.bf16.msra.mxu0 0
      %2067 = vmatpush.bf16.msra.mxu0 %v2058
      %2068 = vmatmul.bf16.gmra.mxu0 %v2010
      %v2069 = vpop.f32.mrf.mxu0
      %v2070 = vadd.f32 0.0, %v2069
      %v2071 = vpop.f32.mrf.mxu0
      %v2072 = vadd.f32 0.0, %v2071
      %2073 = vmatmul.bf16.gmra.mxu0 %v2013
      %v2074 = vpop.f32.mrf.mxu0
      %v2075 = vadd.f32 0.0, %v2074
      %v2076 = vpop.f32.mrf.mxu0
      %v2077 = vadd.f32 0.0, %v2076
      %2078 = vmatmul.bf16.gmra.mxu0 %v2016
      %v2079 = vpop.f32.mrf.mxu0
      %v2080 = vadd.f32 0.0, %v2079
      %v2081 = vpop.f32.mrf.mxu0
      %v2082 = vadd.f32 0.0, %v2081
      %2083 = vmatmul.bf16.gmra.mxu0 %v2019
      %v2084 = vpop.f32.mrf.mxu0
      %v2085 = vadd.f32 0.0, %v2084
      %v2086 = vpop.f32.mrf.mxu0
      %v2087 = vadd.f32 0.0, %v2086
      %2088 = vmatmul.bf16.gmra.mxu0 %v2022
      %v2089 = vpop.f32.mrf.mxu0
      %v2090 = vadd.f32 0.0, %v2089
      %v2091 = vpop.f32.mrf.mxu0
      %v2092 = vadd.f32 0.0, %v2091
      %2093 = vmatmul.bf16.gmra.mxu0 %v2025
      %v2094 = vpop.f32.mrf.mxu0
      %v2095 = vadd.f32 0.0, %v2094
      %v2096 = vpop.f32.mrf.mxu0
      %v2097 = vadd.f32 0.0, %v2096
      %2098 = vmatmul.bf16.gmra.mxu0 %v2028
      %v2099 = vpop.f32.mrf.mxu0
      %v2100 = vadd.f32 0.0, %v2099
      %v2101 = vpop.f32.mrf.mxu0
      %v2102 = vadd.f32 0.0, %v2101
      %2103 = vmatmul.bf16.gmra.mxu0 %v2031
      %v2104 = vpop.f32.mrf.mxu0
      %v2105 = vadd.f32 0.0, %v2104
      %v2106 = vpop.f32.mrf.mxu0
      %v2107 = vadd.f32 0.0, %v2106
      %2108 = vmatmul.bf16.gmra.mxu0 %v2034
      %v2109 = vpop.f32.mrf.mxu0
      %v2110 = vadd.f32 0.0, %v2109
      %v2111 = vpop.f32.mrf.mxu0
      %v2112 = vadd.f32 0.0, %v2111
      %2113 = vmatmul.bf16.gmra.mxu0 %v2037
      %v2114 = vpop.f32.mrf.mxu0
      %v2115 = vadd.f32 0.0, %v2114
      %v2116 = vpop.f32.mrf.mxu0
      %v2117 = vadd.f32 0.0, %v2116
      %2118 = vmatmul.bf16.gmra.mxu0 %v2040
      %v2119 = vpop.f32.mrf.mxu0
      %v2120 = vadd.f32 0.0, %v2119
      %v2121 = vpop.f32.mrf.mxu0
      %v2122 = vadd.f32 0.0, %v2121
      %2123 = vmatmul.bf16.gmra.mxu0 %v2043
      %v2124 = vpop.f32.mrf.mxu0
      %v2125 = vadd.f32 0.0, %v2124
      %v2126 = vpop.f32.mrf.mxu0
      %v2127 = vadd.f32 0.0, %v2126
      %2128 = vmatmul.bf16.gmra.mxu0 %v2046
      %v2129 = vpop.f32.mrf.mxu0
      %v2130 = vadd.f32 0.0, %v2129
      %v2131 = vpop.f32.mrf.mxu0
      %v2132 = vadd.f32 0.0, %v2131
      %2133 = vmatmul.bf16.gmra.mxu0 %v2049
      %v2134 = vpop.f32.mrf.mxu0
      %v2135 = vadd.f32 0.0, %v2134
      %v2136 = vpop.f32.mrf.mxu0
      %v2137 = vadd.f32 0.0, %v2136
      %2138 = vmatmul.bf16.gmra.mxu0 %v2052
      %v2139 = vpop.f32.mrf.mxu0
      %v2140 = vadd.f32 0.0, %v2139
      %v2141 = vpop.f32.mrf.mxu0
      %v2142 = vadd.f32 0.0, %v2141
      %2143 = vmatmul.bf16.gmra.mxu0 %v2055
      %v2144 = vpop.f32.mrf.mxu0
      %v2145 = vadd.f32 0.0, %v2144
      %v2146 = vpop.f32.mrf.mxu0
      %v2147 = vadd.f32 0.0, %v2146
      %2148 = vdwg.mxu0
      %v2149 = vadd.f32 %v1831, %v2070
      %v2150 = vadd.f32 %v1832, %v2072
      %v2151 = vadd.f32 %v1833, %v2075
      %v2152 = vadd.f32 %v1834, %v2077
      %v2153 = vadd.f32 %v1835, %v2080
      %v2154 = vadd.f32 %v1836, %v2082
      %v2155 = vadd.f32 %v1837, %v2085
      %v2156 = vadd.f32 %v1838, %v2087
      %v2157 = vadd.f32 %v1839, %v2090
      %v2158 = vadd.f32 %v1840, %v2092
      %v2159 = vadd.f32 %v1841, %v2095
      %v2160 = vadd.f32 %v1842, %v2097
      %v2161 = vadd.f32 %v1843, %v2100
      %v2162 = vadd.f32 %v1844, %v2102
      %v2163 = vadd.f32 %v1845, %v2105
      %v2164 = vadd.f32 %v1846, %v2107
      %v2165 = vadd.f32 %v1847, %v2110
      %v2166 = vadd.f32 %v1848, %v2112
      %v2167 = vadd.f32 %v1849, %v2115
      %v2168 = vadd.f32 %v1850, %v2117
      %v2169 = vadd.f32 %v1851, %v2120
      %v2170 = vadd.f32 %v1852, %v2122
      %v2171 = vadd.f32 %v1853, %v2125
      %v2172 = vadd.f32 %v1854, %v2127
      %v2173 = vadd.f32 %v1855, %v2130
      %v2174 = vadd.f32 %v1856, %v2132
      %v2175 = vadd.f32 %v1857, %v2135
      %v2176 = vadd.f32 %v1858, %v2137
      %v2177 = vadd.f32 %v1859, %v2140
      %v2178 = vadd.f32 %v1860, %v2142
      %v2179 = vadd.f32 %v1861, %v2145
      %v2180 = vadd.f32 %v1862, %v2147
      %s2181 = scalar_lea.vmem [#allocation2], 48
      %v2182 = vld [vmem:[%s2181] sm:$0xff]
      %v2183 = vld [vmem:[%s2181 + $0x8] sm:$0xff]
      %v2184 = vld [vmem:[%s2181 + $0x18] sm:$0xff]
      %v2185 = vld [vmem:[%s2181 + $0x20] sm:$0xff]
      %v2186 = vld [vmem:[%s2181 + $0x30] sm:$0xff]
      %v2187 = vld [vmem:[%s2181 + $0x38] sm:$0xff]
      %v2188 = vld [vmem:[%s2181 + $0x48] sm:$0xff]
      %v2189 = vld [vmem:[%s2181 + $0x50] sm:$0xff]
      %v2190 = vld [vmem:[%s2181 + $0x60] sm:$0xff]
      %v2191 = vld [vmem:[%s2181 + $0x68] sm:$0xff]
      %v2192 = vld [vmem:[%s2181 + $0x78] sm:$0xff]
      %v2193 = vld [vmem:[%s2181 + $0x80] sm:$0xff]
      %v2194 = vld [vmem:[%s2181 + $0x90] sm:$0xff]
      %v2195 = vld [vmem:[%s2181 + $0x98] sm:$0xff]
      %v2196 = vld [vmem:[%s2181 + $0xa8] sm:$0xff]
      %v2197 = vld [vmem:[%s2181 + $0xb0] sm:$0xff]
      %v2198 = vld [vmem:[%s2181 + $0xc0] sm:$0xff]
      %v2199 = vld [vmem:[%s2181 + $0xc8] sm:$0xff]
      %v2200 = vld [vmem:[%s2181 + $0xd8] sm:$0xff]
      %v2201 = vld [vmem:[%s2181 + $0xe0] sm:$0xff]
      %v2202 = vld [vmem:[%s2181 + $0xf0] sm:$0xff]
      %v2203 = vld [vmem:[%s2181 + $0xf8] sm:$0xff]
      %v2204 = vld [vmem:[%s2181 + $0x108] sm:$0xff]
      %v2205 = vld [vmem:[%s2181 + $0x110] sm:$0xff]
      %v2206 = vld [vmem:[%s2181 + $0x120] sm:$0xff]
      %v2207 = vld [vmem:[%s2181 + $0x128] sm:$0xff]
      %v2208 = vld [vmem:[%s2181 + $0x138] sm:$0xff]
      %v2209 = vld [vmem:[%s2181 + $0x140] sm:$0xff]
      %v2210 = vld [vmem:[%s2181 + $0x150] sm:$0xff]
      %v2211 = vld [vmem:[%s2181 + $0x158] sm:$0xff]
      %v2212 = vld [vmem:[%s2181 + $0x168] sm:$0xff]
      %v2213 = vld [vmem:[%s2181 + $0x170] sm:$0xff]
      %v2214 = vpack.c.bf16 %v2182, %v2182
      %v2215 = vpack.c.bf16 %v2183, %v2183
      %v2216 = vpack.c.bf16 %v2184, %v2184
      %v2217 = vpack.c.bf16 %v2185, %v2185
      %v2218 = vpack.c.bf16 %v2186, %v2186
      %v2219 = vpack.c.bf16 %v2187, %v2187
      %v2220 = vpack.c.bf16 %v2188, %v2188
      %v2221 = vpack.c.bf16 %v2189, %v2189
      %v2222 = vpack.c.bf16 %v2190, %v2190
      %v2223 = vpack.c.bf16 %v2191, %v2191
      %v2224 = vpack.c.bf16 %v2192, %v2192
      %v2225 = vpack.c.bf16 %v2193, %v2193
      %v2226 = vpack.c.bf16 %v2194, %v2194
      %v2227 = vpack.c.bf16 %v2195, %v2195
      %v2228 = vpack.c.bf16 %v2196, %v2196
      %v2229 = vpack.c.bf16 %v2197, %v2197
      %v2230 = vpack.c.bf16 %v2198, %v2198
      %v2231 = vpack.c.bf16 %v2199, %v2199
      %v2232 = vpack.c.bf16 %v2200, %v2200
      %v2233 = vpack.c.bf16 %v2201, %v2201
      %v2234 = vpack.c.bf16 %v2202, %v2202
      %v2235 = vpack.c.bf16 %v2203, %v2203
      %v2236 = vpack.c.bf16 %v2204, %v2204
      %v2237 = vpack.c.bf16 %v2205, %v2205
      %v2238 = vpack.c.bf16 %v2206, %v2206
      %v2239 = vpack.c.bf16 %v2207, %v2207
      %v2240 = vpack.c.bf16 %v2208, %v2208
      %v2241 = vpack.c.bf16 %v2209, %v2209
      %v2242 = vpack.c.bf16 %v2210, %v2210
      %v2243 = vpack.c.bf16 %v2211, %v2211
      %v2244 = vpack.c.bf16 %v2212, %v2212
      %v2245 = vpack.c.bf16 %v2213, %v2213
      %s2246 = scalar_lea.vmem %s1, 12
      %v2247 = vld [vmem:[%s2246] sm:$0x3]
      %v2280 = vunpack.c.l.b16 %v2214
      %v2281 = vunpack.c.l.b16 %v2215
      %v2282 = vunpack.c.l.b16 %v2216
      %v2283 = vunpack.c.l.b16 %v2217
      %v2284 = vunpack.c.l.b16 %v2218
      %v2285 = vunpack.c.l.b16 %v2219
      %v2286 = vunpack.c.l.b16 %v2220
      %v2287 = vunpack.c.l.b16 %v2221
      %v2288 = vunpack.c.l.b16 %v2222
      %v2289 = vunpack.c.l.b16 %v2223
      %v2290 = vunpack.c.l.b16 %v2224
      %v2291 = vunpack.c.l.b16 %v2225
      %v2292 = vunpack.c.l.b16 %v2226
      %v2293 = vunpack.c.l.b16 %v2227
      %v2294 = vunpack.c.l.b16 %v2228
      %v2295 = vunpack.c.l.b16 %v2229
      %v2296 = vunpack.c.l.b16 %v2230
      %v2297 = vunpack.c.l.b16 %v2231
      %v2298 = vunpack.c.l.b16 %v2232
      %v2299 = vunpack.c.l.b16 %v2233
      %v2300 = vunpack.c.l.b16 %v2234
      %v2301 = vunpack.c.l.b16 %v2235
      %v2302 = vunpack.c.l.b16 %v2236
      %v2303 = vunpack.c.l.b16 %v2237
      %v2304 = vunpack.c.l.b16 %v2238
      %v2305 = vunpack.c.l.b16 %v2239
      %v2306 = vunpack.c.l.b16 %v2240
      %v2307 = vunpack.c.l.b16 %v2241
      %v2308 = vunpack.c.l.b16 %v2242
      %v2309 = vunpack.c.l.b16 %v2243
      %v2310 = vunpack.c.l.b16 %v2244
      %v2311 = vunpack.c.l.b16 %v2245
      %v2312 = vpack.c.b16 %v2281, %v2280
      %v2313 = vpack.c.b16 %v2283, %v2282
      %v2314 = vpack.c.b16 %v2285, %v2284
      %v2315 = vpack.c.b16 %v2287, %v2286
      %v2316 = vpack.c.b16 %v2289, %v2288
      %v2317 = vpack.c.b16 %v2291, %v2290
      %v2318 = vpack.c.b16 %v2293, %v2292
      %v2319 = vpack.c.b16 %v2295, %v2294
      %v2320 = vpack.c.b16 %v2297, %v2296
      %v2321 = vpack.c.b16 %v2299, %v2298
      %v2322 = vpack.c.b16 %v2301, %v2300
      %v2323 = vpack.c.b16 %v2303, %v2302
      %v2324 = vpack.c.b16 %v2305, %v2304
      %v2325 = vpack.c.b16 %v2307, %v2306
      %v2326 = vpack.c.b16 %v2309, %v2308
      %v2327 = vpack.c.b16 %v2311, %v2310
      %v2329 = vsel %vm226, %v2312, 0
      %v2332 = vsel %vm226, %v2313, 0
      %v2335 = vsel %vm226, %v2314, 0
      %v2338 = vsel %vm226, %v2315, 0
      %v2341 = vsel %vm226, %v2316, 0
      %v2344 = vsel %vm226, %v2317, 0
      %v2347 = vsel %vm226, %v2318, 0
      %v2350 = vsel %vm226, %v2319, 0
      %v2353 = vsel %vm226, %v2320, 0
      %v2356 = vsel %vm226, %v2321, 0
      %v2359 = vsel %vm226, %v2322, 0
      %v2362 = vsel %vm226, %v2323, 0
      %v2365 = vsel %vm226, %v2324, 0
      %v2368 = vsel %vm226, %v2325, 0
      %v2371 = vsel %vm226, %v2326, 0
      %v2374 = vsel %vm226, %v2327, 0
      %v2377 = vsel %vm596, %v2247, 0
      %2379 = vmatpush.bf16.msra.mxu0 0
      %2380 = vmatpush.bf16.msra.mxu0 0
      %2381 = vmatpush.bf16.msra.mxu0 0
      %2382 = vmatpush.bf16.msra.mxu0 0
      %2383 = vmatpush.bf16.msra.mxu0 0
      %2384 = vmatpush.bf16.msra.mxu0 0
      %2385 = vmatpush.bf16.msra.mxu0 0
      %2386 = vmatpush.bf16.msra.mxu0 %v2377
      %2387 = vmatmul.bf16.gmra.mxu0 %v2329
      %v2388 = vpop.f32.mrf.mxu0
      %v2389 = vadd.f32 0.0, %v2388
      %v2390 = vpop.f32.mrf.mxu0
      %v2391 = vadd.f32 0.0, %v2390
      %2392 = vmatmul.bf16.gmra.mxu0 %v2332
      %v2393 = vpop.f32.mrf.mxu0
      %v2394 = vadd.f32 0.0, %v2393
      %v2395 = vpop.f32.mrf.mxu0
      %v2396 = vadd.f32 0.0, %v2395
      %2397 = vmatmul.bf16.gmra.mxu0 %v2335
      %v2398 = vpop.f32.mrf.mxu0
      %v2399 = vadd.f32 0.0, %v2398
      %v2400 = vpop.f32.mrf.mxu0
      %v2401 = vadd.f32 0.0, %v2400
      %2402 = vmatmul.bf16.gmra.mxu0 %v2338
      %v2403 = vpop.f32.mrf.mxu0
      %v2404 = vadd.f32 0.0, %v2403
      %v2405 = vpop.f32.mrf.mxu0
      %v2406 = vadd.f32 0.0, %v2405
      %2407 = vmatmul.bf16.gmra.mxu0 %v2341
      %v2408 = vpop.f32.mrf.mxu0
      %v2409 = vadd.f32 0.0, %v2408
      %v2410 = vpop.f32.mrf.mxu0
      %v2411 = vadd.f32 0.0, %v2410
      %2412 = vmatmul.bf16.gmra.mxu0 %v2344
      %v2413 = vpop.f32.mrf.mxu0
      %v2414 = vadd.f32 0.0, %v2413
      %v2415 = vpop.f32.mrf.mxu0
      %v2416 = vadd.f32 0.0, %v2415
      %2417 = vmatmul.bf16.gmra.mxu0 %v2347
      %v2418 = vpop.f32.mrf.mxu0
      %v2419 = vadd.f32 0.0, %v2418
      %v2420 = vpop.f32.mrf.mxu0
      %v2421 = vadd.f32 0.0, %v2420
      %2422 = vmatmul.bf16.gmra.mxu0 %v2350
      %v2423 = vpop.f32.mrf.mxu0
      %v2424 = vadd.f32 0.0, %v2423
      %v2425 = vpop.f32.mrf.mxu0
      %v2426 = vadd.f32 0.0, %v2425
      %2427 = vmatmul.bf16.gmra.mxu0 %v2353
      %v2428 = vpop.f32.mrf.mxu0
      %v2429 = vadd.f32 0.0, %v2428
      %v2430 = vpop.f32.mrf.mxu0
      %v2431 = vadd.f32 0.0, %v2430
      %2432 = vmatmul.bf16.gmra.mxu0 %v2356
      %v2433 = vpop.f32.mrf.mxu0
      %v2434 = vadd.f32 0.0, %v2433
      %v2435 = vpop.f32.mrf.mxu0
      %v2436 = vadd.f32 0.0, %v2435
      %2437 = vmatmul.bf16.gmra.mxu0 %v2359
      %v2438 = vpop.f32.mrf.mxu0
      %v2439 = vadd.f32 0.0, %v2438
      %v2440 = vpop.f32.mrf.mxu0
      %v2441 = vadd.f32 0.0, %v2440
      %2442 = vmatmul.bf16.gmra.mxu0 %v2362
      %v2443 = vpop.f32.mrf.mxu0
      %v2444 = vadd.f32 0.0, %v2443
      %v2445 = vpop.f32.mrf.mxu0
      %v2446 = vadd.f32 0.0, %v2445
      %2447 = vmatmul.bf16.gmra.mxu0 %v2365
      %v2448 = vpop.f32.mrf.mxu0
      %v2449 = vadd.f32 0.0, %v2448
      %v2450 = vpop.f32.mrf.mxu0
      %v2451 = vadd.f32 0.0, %v2450
      %2452 = vmatmul.bf16.gmra.mxu0 %v2368
      %v2453 = vpop.f32.mrf.mxu0
      %v2454 = vadd.f32 0.0, %v2453
      %v2455 = vpop.f32.mrf.mxu0
      %v2456 = vadd.f32 0.0, %v2455
      %2457 = vmatmul.bf16.gmra.mxu0 %v2371
      %v2458 = vpop.f32.mrf.mxu0
      %v2459 = vadd.f32 0.0, %v2458
      %v2460 = vpop.f32.mrf.mxu0
      %v2461 = vadd.f32 0.0, %v2460
      %2462 = vmatmul.bf16.gmra.mxu0 %v2374
      %v2463 = vpop.f32.mrf.mxu0
      %v2464 = vadd.f32 0.0, %v2463
      %v2465 = vpop.f32.mrf.mxu0
      %v2466 = vadd.f32 0.0, %v2465
      %2467 = vdwg.mxu0
      %v2468 = vadd.f32 %v2149, %v2389
      %v2469 = vadd.f32 %v2150, %v2391
      %v2470 = vadd.f32 %v2151, %v2394
      %v2471 = vadd.f32 %v2152, %v2396
      %v2472 = vadd.f32 %v2153, %v2399
      %v2473 = vadd.f32 %v2154, %v2401
      %v2474 = vadd.f32 %v2155, %v2404
      %v2475 = vadd.f32 %v2156, %v2406
      %v2476 = vadd.f32 %v2157, %v2409
      %v2477 = vadd.f32 %v2158, %v2411
      %v2478 = vadd.f32 %v2159, %v2414
      %v2479 = vadd.f32 %v2160, %v2416
      %v2480 = vadd.f32 %v2161, %v2419
      %v2481 = vadd.f32 %v2162, %v2421
      %v2482 = vadd.f32 %v2163, %v2424
      %v2483 = vadd.f32 %v2164, %v2426
      %v2484 = vadd.f32 %v2165, %v2429
      %v2485 = vadd.f32 %v2166, %v2431
      %v2486 = vadd.f32 %v2167, %v2434
      %v2487 = vadd.f32 %v2168, %v2436
      %v2488 = vadd.f32 %v2169, %v2439
      %v2489 = vadd.f32 %v2170, %v2441
      %v2490 = vadd.f32 %v2171, %v2444
      %v2491 = vadd.f32 %v2172, %v2446
      %v2492 = vadd.f32 %v2173, %v2449
      %v2493 = vadd.f32 %v2174, %v2451
      %v2494 = vadd.f32 %v2175, %v2454
      %v2495 = vadd.f32 %v2176, %v2456
      %v2496 = vadd.f32 %v2177, %v2459
      %v2497 = vadd.f32 %v2178, %v2461
      %v2498 = vadd.f32 %v2179, %v2464
      %v2499 = vadd.f32 %v2180, %v2466
      %v2500 = vld [vmem:[%s2181 + $0x1] sm:$0xff]
      %v2501 = vld [vmem:[%s2181 + $0x9] sm:$0xff]
      %v2502 = vld [vmem:[%s2181 + $0x19] sm:$0xff]
      %v2503 = vld [vmem:[%s2181 + $0x21] sm:$0xff]
      %v2504 = vld [vmem:[%s2181 + $0x31] sm:$0xff]
      %v2505 = vld [vmem:[%s2181 + $0x39] sm:$0xff]
      %v2506 = vld [vmem:[%s2181 + $0x49] sm:$0xff]
      %v2507 = vld [vmem:[%s2181 + $0x51] sm:$0xff]
      %v2508 = vld [vmem:[%s2181 + $0x61] sm:$0xff]
      %v2509 = vld [vmem:[%s2181 + $0x69] sm:$0xff]
      %v2510 = vld [vmem:[%s2181 + $0x79] sm:$0xff]
      %v2511 = vld [vmem:[%s2181 + $0x81] sm:$0xff]
      %v2512 = vld [vmem:[%s2181 + $0x91] sm:$0xff]
      %v2513 = vld [vmem:[%s2181 + $0x99] sm:$0xff]
      %v2514 = vld [vmem:[%s2181 + $0xa9] sm:$0xff]
      %v2515 = vld [vmem:[%s2181 + $0xb1] sm:$0xff]
      %v2516 = vld [vmem:[%s2181 + $0xc1] sm:$0xff]
      %v2517 = vld [vmem:[%s2181 + $0xc9] sm:$0xff]
      %v2518 = vld [vmem:[%s2181 + $0xd9] sm:$0xff]
      %v2519 = vld [vmem:[%s2181 + $0xe1] sm:$0xff]
      %v2520 = vld [vmem:[%s2181 + $0xf1] sm:$0xff]
      %v2521 = vld [vmem:[%s2181 + $0xf9] sm:$0xff]
      %v2522 = vld [vmem:[%s2181 + $0x109] sm:$0xff]
      %v2523 = vld [vmem:[%s2181 + $0x111] sm:$0xff]
      %v2524 = vld [vmem:[%s2181 + $0x121] sm:$0xff]
      %v2525 = vld [vmem:[%s2181 + $0x129] sm:$0xff]
      %v2526 = vld [vmem:[%s2181 + $0x139] sm:$0xff]
      %v2527 = vld [vmem:[%s2181 + $0x141] sm:$0xff]
      %v2528 = vld [vmem:[%s2181 + $0x151] sm:$0xff]
      %v2529 = vld [vmem:[%s2181 + $0x159] sm:$0xff]
      %v2530 = vld [vmem:[%s2181 + $0x169] sm:$0xff]
      %v2531 = vld [vmem:[%s2181 + $0x171] sm:$0xff]
      %v2532 = vpack.c.bf16 %v2500, %v2500
      %v2533 = vpack.c.bf16 %v2501, %v2501
      %v2534 = vpack.c.bf16 %v2502, %v2502
      %v2535 = vpack.c.bf16 %v2503, %v2503
      %v2536 = vpack.c.bf16 %v2504, %v2504
      %v2537 = vpack.c.bf16 %v2505, %v2505
      %v2538 = vpack.c.bf16 %v2506, %v2506
      %v2539 = vpack.c.bf16 %v2507, %v2507
      %v2540 = vpack.c.bf16 %v2508, %v2508
      %v2541 = vpack.c.bf16 %v2509, %v2509
      %v2542 = vpack.c.bf16 %v2510, %v2510
      %v2543 = vpack.c.bf16 %v2511, %v2511
      %v2544 = vpack.c.bf16 %v2512, %v2512
      %v2545 = vpack.c.bf16 %v2513, %v2513
      %v2546 = vpack.c.bf16 %v2514, %v2514
      %v2547 = vpack.c.bf16 %v2515, %v2515
      %v2548 = vpack.c.bf16 %v2516, %v2516
      %v2549 = vpack.c.bf16 %v2517, %v2517
      %v2550 = vpack.c.bf16 %v2518, %v2518
      %v2551 = vpack.c.bf16 %v2519, %v2519
      %v2552 = vpack.c.bf16 %v2520, %v2520
      %v2553 = vpack.c.bf16 %v2521, %v2521
      %v2554 = vpack.c.bf16 %v2522, %v2522
      %v2555 = vpack.c.bf16 %v2523, %v2523
      %v2556 = vpack.c.bf16 %v2524, %v2524
      %v2557 = vpack.c.bf16 %v2525, %v2525
      %v2558 = vpack.c.bf16 %v2526, %v2526
      %v2559 = vpack.c.bf16 %v2527, %v2527
      %v2560 = vpack.c.bf16 %v2528, %v2528
      %v2561 = vpack.c.bf16 %v2529, %v2529
      %v2562 = vpack.c.bf16 %v2530, %v2530
      %v2563 = vpack.c.bf16 %v2531, %v2531
      %s2564 = scalar_lea.vmem %s1, 14
      %v2565 = vld [vmem:[%s2564] sm:$0x3]
      %v2598 = vunpack.c.l.b16 %v2532
      %v2599 = vunpack.c.l.b16 %v2533
      %v2600 = vunpack.c.l.b16 %v2534
      %v2601 = vunpack.c.l.b16 %v2535
      %v2602 = vunpack.c.l.b16 %v2536
      %v2603 = vunpack.c.l.b16 %v2537
      %v2604 = vunpack.c.l.b16 %v2538
      %v2605 = vunpack.c.l.b16 %v2539
      %v2606 = vunpack.c.l.b16 %v2540
      %v2607 = vunpack.c.l.b16 %v2541
      %v2608 = vunpack.c.l.b16 %v2542
      %v2609 = vunpack.c.l.b16 %v2543
      %v2610 = vunpack.c.l.b16 %v2544
      %v2611 = vunpack.c.l.b16 %v2545
      %v2612 = vunpack.c.l.b16 %v2546
      %v2613 = vunpack.c.l.b16 %v2547
      %v2614 = vunpack.c.l.b16 %v2548
      %v2615 = vunpack.c.l.b16 %v2549
      %v2616 = vunpack.c.l.b16 %v2550
      %v2617 = vunpack.c.l.b16 %v2551
      %v2618 = vunpack.c.l.b16 %v2552
      %v2619 = vunpack.c.l.b16 %v2553
      %v2620 = vunpack.c.l.b16 %v2554
      %v2621 = vunpack.c.l.b16 %v2555
      %v2622 = vunpack.c.l.b16 %v2556
      %v2623 = vunpack.c.l.b16 %v2557
      %v2624 = vunpack.c.l.b16 %v2558
      %v2625 = vunpack.c.l.b16 %v2559
      %v2626 = vunpack.c.l.b16 %v2560
      %v2627 = vunpack.c.l.b16 %v2561
      %v2628 = vunpack.c.l.b16 %v2562
      %v2629 = vunpack.c.l.b16 %v2563
      %v2630 = vpack.c.b16 %v2599, %v2598
      %v2631 = vpack.c.b16 %v2601, %v2600
      %v2632 = vpack.c.b16 %v2603, %v2602
      %v2633 = vpack.c.b16 %v2605, %v2604
      %v2634 = vpack.c.b16 %v2607, %v2606
      %v2635 = vpack.c.b16 %v2609, %v2608
      %v2636 = vpack.c.b16 %v2611, %v2610
      %v2637 = vpack.c.b16 %v2613, %v2612
      %v2638 = vpack.c.b16 %v2615, %v2614
      %v2639 = vpack.c.b16 %v2617, %v2616
      %v2640 = vpack.c.b16 %v2619, %v2618
      %v2641 = vpack.c.b16 %v2621, %v2620
      %v2642 = vpack.c.b16 %v2623, %v2622
      %v2643 = vpack.c.b16 %v2625, %v2624
      %v2644 = vpack.c.b16 %v2627, %v2626
      %v2645 = vpack.c.b16 %v2629, %v2628
      %v2647 = vsel %vm226, %v2630, 0
      %v2650 = vsel %vm226, %v2631, 0
      %v2653 = vsel %vm226, %v2632, 0
      %v2656 = vsel %vm226, %v2633, 0
      %v2659 = vsel %vm226, %v2634, 0
      %v2662 = vsel %vm226, %v2635, 0
      %v2665 = vsel %vm226, %v2636, 0
      %v2668 = vsel %vm226, %v2637, 0
      %v2671 = vsel %vm226, %v2638, 0
      %v2674 = vsel %vm226, %v2639, 0
      %v2677 = vsel %vm226, %v2640, 0
      %v2680 = vsel %vm226, %v2641, 0
      %v2683 = vsel %vm226, %v2642, 0
      %v2686 = vsel %vm226, %v2643, 0
      %v2689 = vsel %vm226, %v2644, 0
      %v2692 = vsel %vm226, %v2645, 0
      %v2695 = vsel %vm596, %v2565, 0
      %2697 = vmatpush.bf16.msra.mxu0 0
      %2698 = vmatpush.bf16.msra.mxu0 0
      %2699 = vmatpush.bf16.msra.mxu0 0
      %2700 = vmatpush.bf16.msra.mxu0 0
      %2701 = vmatpush.bf16.msra.mxu0 0
      %2702 = vmatpush.bf16.msra.mxu0 0
      %2703 = vmatpush.bf16.msra.mxu0 0
      %2704 = vmatpush.bf16.msra.mxu0 %v2695
      %2705 = vmatmul.bf16.gmra.mxu0 %v2647
      %v2706 = vpop.f32.mrf.mxu0
      %v2707 = vadd.f32 0.0, %v2706
      %v2708 = vpop.f32.mrf.mxu0
      %v2709 = vadd.f32 0.0, %v2708
      %2710 = vmatmul.bf16.gmra.mxu0 %v2650
      %v2711 = vpop.f32.mrf.mxu0
      %v2712 = vadd.f32 0.0, %v2711
      %v2713 = vpop.f32.mrf.mxu0
      %v2714 = vadd.f32 0.0, %v2713
      %2715 = vmatmul.bf16.gmra.mxu0 %v2653
      %v2716 = vpop.f32.mrf.mxu0
      %v2717 = vadd.f32 0.0, %v2716
      %v2718 = vpop.f32.mrf.mxu0
      %v2719 = vadd.f32 0.0, %v2718
      %2720 = vmatmul.bf16.gmra.mxu0 %v2656
      %v2721 = vpop.f32.mrf.mxu0
      %v2722 = vadd.f32 0.0, %v2721
      %v2723 = vpop.f32.mrf.mxu0
      %v2724 = vadd.f32 0.0, %v2723
      %2725 = vmatmul.bf16.gmra.mxu0 %v2659
      %v2726 = vpop.f32.mrf.mxu0
      %v2727 = vadd.f32 0.0, %v2726
      %v2728 = vpop.f32.mrf.mxu0
      %v2729 = vadd.f32 0.0, %v2728
      %2730 = vmatmul.bf16.gmra.mxu0 %v2662
      %v2731 = vpop.f32.mrf.mxu0
      %v2732 = vadd.f32 0.0, %v2731
      %v2733 = vpop.f32.mrf.mxu0
      %v2734 = vadd.f32 0.0, %v2733
      %2735 = vmatmul.bf16.gmra.mxu0 %v2665
      %v2736 = vpop.f32.mrf.mxu0
      %v2737 = vadd.f32 0.0, %v2736
      %v2738 = vpop.f32.mrf.mxu0
      %v2739 = vadd.f32 0.0, %v2738
      %2740 = vmatmul.bf16.gmra.mxu0 %v2668
      %v2741 = vpop.f32.mrf.mxu0
      %v2742 = vadd.f32 0.0, %v2741
      %v2743 = vpop.f32.mrf.mxu0
      %v2744 = vadd.f32 0.0, %v2743
      %2745 = vmatmul.bf16.gmra.mxu0 %v2671
      %v2746 = vpop.f32.mrf.mxu0
      %v2747 = vadd.f32 0.0, %v2746
      %v2748 = vpop.f32.mrf.mxu0
      %v2749 = vadd.f32 0.0, %v2748
      %2750 = vmatmul.bf16.gmra.mxu0 %v2674
      %v2751 = vpop.f32.mrf.mxu0
      %v2752 = vadd.f32 0.0, %v2751
      %v2753 = vpop.f32.mrf.mxu0
      %v2754 = vadd.f32 0.0, %v2753
      %2755 = vmatmul.bf16.gmra.mxu0 %v2677
      %v2756 = vpop.f32.mrf.mxu0
      %v2757 = vadd.f32 0.0, %v2756
      %v2758 = vpop.f32.mrf.mxu0
      %v2759 = vadd.f32 0.0, %v2758
      %2760 = vmatmul.bf16.gmra.mxu0 %v2680
      %v2761 = vpop.f32.mrf.mxu0
      %v2762 = vadd.f32 0.0, %v2761
      %v2763 = vpop.f32.mrf.mxu0
      %v2764 = vadd.f32 0.0, %v2763
      %2765 = vmatmul.bf16.gmra.mxu0 %v2683
      %v2766 = vpop.f32.mrf.mxu0
      %v2767 = vadd.f32 0.0, %v2766
      %v2768 = vpop.f32.mrf.mxu0
      %v2769 = vadd.f32 0.0, %v2768
      %2770 = vmatmul.bf16.gmra.mxu0 %v2686
      %v2771 = vpop.f32.mrf.mxu0
      %v2772 = vadd.f32 0.0, %v2771
      %v2773 = vpop.f32.mrf.mxu0
      %v2774 = vadd.f32 0.0, %v2773
      %2775 = vmatmul.bf16.gmra.mxu0 %v2689
      %v2776 = vpop.f32.mrf.mxu0
      %v2777 = vadd.f32 0.0, %v2776
      %v2778 = vpop.f32.mrf.mxu0
      %v2779 = vadd.f32 0.0, %v2778
      %2780 = vmatmul.bf16.gmra.mxu0 %v2692
      %v2781 = vpop.f32.mrf.mxu0
      %v2782 = vadd.f32 0.0, %v2781
      %v2783 = vpop.f32.mrf.mxu0
      %v2784 = vadd.f32 0.0, %v2783
      %2785 = vdwg.mxu0
      %v2786 = vadd.f32 %v2468, %v2707
      %v2787 = vadd.f32 %v2469, %v2709
      %v2788 = vadd.f32 %v2470, %v2712
      %v2789 = vadd.f32 %v2471, %v2714
      %v2790 = vadd.f32 %v2472, %v2717
      %v2791 = vadd.f32 %v2473, %v2719
      %v2792 = vadd.f32 %v2474, %v2722
      %v2793 = vadd.f32 %v2475, %v2724
      %v2794 = vadd.f32 %v2476, %v2727
      %v2795 = vadd.f32 %v2477, %v2729
      %v2796 = vadd.f32 %v2478, %v2732
      %v2797 = vadd.f32 %v2479, %v2734
      %v2798 = vadd.f32 %v2480, %v2737
      %v2799 = vadd.f32 %v2481, %v2739
      %v2800 = vadd.f32 %v2482, %v2742
      %v2801 = vadd.f32 %v2483, %v2744
      %v2802 = vadd.f32 %v2484, %v2747
      %v2803 = vadd.f32 %v2485, %v2749
      %v2804 = vadd.f32 %v2486, %v2752
      %v2805 = vadd.f32 %v2487, %v2754
      %v2806 = vadd.f32 %v2488, %v2757
      %v2807 = vadd.f32 %v2489, %v2759
      %v2808 = vadd.f32 %v2490, %v2762
      %v2809 = vadd.f32 %v2491, %v2764
      %v2810 = vadd.f32 %v2492, %v2767
      %v2811 = vadd.f32 %v2493, %v2769
      %v2812 = vadd.f32 %v2494, %v2772
      %v2813 = vadd.f32 %v2495, %v2774
      %v2814 = vadd.f32 %v2496, %v2777
      %v2815 = vadd.f32 %v2497, %v2779
      %v2816 = vadd.f32 %v2498, %v2782
      %v2817 = vadd.f32 %v2499, %v2784
      %v2818 = vld [vmem:[%s2181 + $0x2] sm:$0xff]
      %v2819 = vld [vmem:[%s2181 + $0xa] sm:$0xff]
      %v2820 = vld [vmem:[%s2181 + $0x1a] sm:$0xff]
      %v2821 = vld [vmem:[%s2181 + $0x22] sm:$0xff]
      %v2822 = vld [vmem:[%s2181 + $0x32] sm:$0xff]
      %v2823 = vld [vmem:[%s2181 + $0x3a] sm:$0xff]
      %v2824 = vld [vmem:[%s2181 + $0x4a] sm:$0xff]
      %v2825 = vld [vmem:[%s2181 + $0x52] sm:$0xff]
      %v2826 = vld [vmem:[%s2181 + $0x62] sm:$0xff]
      %v2827 = vld [vmem:[%s2181 + $0x6a] sm:$0xff]
      %v2828 = vld [vmem:[%s2181 + $0x7a] sm:$0xff]
      %v2829 = vld [vmem:[%s2181 + $0x82] sm:$0xff]
      %v2830 = vld [vmem:[%s2181 + $0x92] sm:$0xff]
      %v2831 = vld [vmem:[%s2181 + $0x9a] sm:$0xff]
      %v2832 = vld [vmem:[%s2181 + $0xaa] sm:$0xff]
      %v2833 = vld [vmem:[%s2181 + $0xb2] sm:$0xff]
      %v2834 = vld [vmem:[%s2181 + $0xc2] sm:$0xff]
      %v2835 = vld [vmem:[%s2181 + $0xca] sm:$0xff]
      %v2836 = vld [vmem:[%s2181 + $0xda] sm:$0xff]
      %v2837 = vld [vmem:[%s2181 + $0xe2] sm:$0xff]
      %v2838 = vld [vmem:[%s2181 + $0xf2] sm:$0xff]
      %v2839 = vld [vmem:[%s2181 + $0xfa] sm:$0xff]
      %v2840 = vld [vmem:[%s2181 + $0x10a] sm:$0xff]
      %v2841 = vld [vmem:[%s2181 + $0x112] sm:$0xff]
      %v2842 = vld [vmem:[%s2181 + $0x122] sm:$0xff]
      %v2843 = vld [vmem:[%s2181 + $0x12a] sm:$0xff]
      %v2844 = vld [vmem:[%s2181 + $0x13a] sm:$0xff]
      %v2845 = vld [vmem:[%s2181 + $0x142] sm:$0xff]
      %v2846 = vld [vmem:[%s2181 + $0x152] sm:$0xff]
      %v2847 = vld [vmem:[%s2181 + $0x15a] sm:$0xff]
      %v2848 = vld [vmem:[%s2181 + $0x16a] sm:$0xff]
      %v2849 = vld [vmem:[%s2181 + $0x172] sm:$0xff]
      %v2850 = vpack.c.bf16 %v2818, %v2818
      %v2851 = vpack.c.bf16 %v2819, %v2819
      %v2852 = vpack.c.bf16 %v2820, %v2820
      %v2853 = vpack.c.bf16 %v2821, %v2821
      %v2854 = vpack.c.bf16 %v2822, %v2822
      %v2855 = vpack.c.bf16 %v2823, %v2823
      %v2856 = vpack.c.bf16 %v2824, %v2824
      %v2857 = vpack.c.bf16 %v2825, %v2825
      %v2858 = vpack.c.bf16 %v2826, %v2826
      %v2859 = vpack.c.bf16 %v2827, %v2827
      %v2860 = vpack.c.bf16 %v2828, %v2828
      %v2861 = vpack.c.bf16 %v2829, %v2829
      %v2862 = vpack.c.bf16 %v2830, %v2830
      %v2863 = vpack.c.bf16 %v2831, %v2831
      %v2864 = vpack.c.bf16 %v2832, %v2832
      %v2865 = vpack.c.bf16 %v2833, %v2833
      %v2866 = vpack.c.bf16 %v2834, %v2834
      %v2867 = vpack.c.bf16 %v2835, %v2835
      %v2868 = vpack.c.bf16 %v2836, %v2836
      %v2869 = vpack.c.bf16 %v2837, %v2837
      %v2870 = vpack.c.bf16 %v2838, %v2838
      %v2871 = vpack.c.bf16 %v2839, %v2839
      %v2872 = vpack.c.bf16 %v2840, %v2840
      %v2873 = vpack.c.bf16 %v2841, %v2841
      %v2874 = vpack.c.bf16 %v2842, %v2842
      %v2875 = vpack.c.bf16 %v2843, %v2843
      %v2876 = vpack.c.bf16 %v2844, %v2844
      %v2877 = vpack.c.bf16 %v2845, %v2845
      %v2878 = vpack.c.bf16 %v2846, %v2846
      %v2879 = vpack.c.bf16 %v2847, %v2847
      %v2880 = vpack.c.bf16 %v2848, %v2848
      %v2881 = vpack.c.bf16 %v2849, %v2849
      %s2882 = scalar_lea.vmem %s1, 16
      %v2883 = vld [vmem:[%s2882] sm:$0x3]
      %v2916 = vunpack.c.l.b16 %v2850
      %v2917 = vunpack.c.l.b16 %v2851
      %v2918 = vunpack.c.l.b16 %v2852
      %v2919 = vunpack.c.l.b16 %v2853
      %v2920 = vunpack.c.l.b16 %v2854
      %v2921 = vunpack.c.l.b16 %v2855
      %v2922 = vunpack.c.l.b16 %v2856
      %v2923 = vunpack.c.l.b16 %v2857
      %v2924 = vunpack.c.l.b16 %v2858
      %v2925 = vunpack.c.l.b16 %v2859
      %v2926 = vunpack.c.l.b16 %v2860
      %v2927 = vunpack.c.l.b16 %v2861
      %v2928 = vunpack.c.l.b16 %v2862
      %v2929 = vunpack.c.l.b16 %v2863
      %v2930 = vunpack.c.l.b16 %v2864
      %v2931 = vunpack.c.l.b16 %v2865
      %v2932 = vunpack.c.l.b16 %v2866
      %v2933 = vunpack.c.l.b16 %v2867
      %v2934 = vunpack.c.l.b16 %v2868
      %v2935 = vunpack.c.l.b16 %v2869
      %v2936 = vunpack.c.l.b16 %v2870
      %v2937 = vunpack.c.l.b16 %v2871
      %v2938 = vunpack.c.l.b16 %v2872
      %v2939 = vunpack.c.l.b16 %v2873
      %v2940 = vunpack.c.l.b16 %v2874
      %v2941 = vunpack.c.l.b16 %v2875
      %v2942 = vunpack.c.l.b16 %v2876
      %v2943 = vunpack.c.l.b16 %v2877
      %v2944 = vunpack.c.l.b16 %v2878
      %v2945 = vunpack.c.l.b16 %v2879
      %v2946 = vunpack.c.l.b16 %v2880
      %v2947 = vunpack.c.l.b16 %v2881
      %v2948 = vpack.c.b16 %v2917, %v2916
      %v2949 = vpack.c.b16 %v2919, %v2918
      %v2950 = vpack.c.b16 %v2921, %v2920
      %v2951 = vpack.c.b16 %v2923, %v2922
      %v2952 = vpack.c.b16 %v2925, %v2924
      %v2953 = vpack.c.b16 %v2927, %v2926
      %v2954 = vpack.c.b16 %v2929, %v2928
      %v2955 = vpack.c.b16 %v2931, %v2930
      %v2956 = vpack.c.b16 %v2933, %v2932
      %v2957 = vpack.c.b16 %v2935, %v2934
      %v2958 = vpack.c.b16 %v2937, %v2936
      %v2959 = vpack.c.b16 %v2939, %v2938
      %v2960 = vpack.c.b16 %v2941, %v2940
      %v2961 = vpack.c.b16 %v2943, %v2942
      %v2962 = vpack.c.b16 %v2945, %v2944
      %v2963 = vpack.c.b16 %v2947, %v2946
      %v2965 = vsel %vm226, %v2948, 0
      %v2968 = vsel %vm226, %v2949, 0
      %v2971 = vsel %vm226, %v2950, 0
      %v2974 = vsel %vm226, %v2951, 0
      %v2977 = vsel %vm226, %v2952, 0
      %v2980 = vsel %vm226, %v2953, 0
      %v2983 = vsel %vm226, %v2954, 0
      %v2986 = vsel %vm226, %v2955, 0
      %v2989 = vsel %vm226, %v2956, 0
      %v2992 = vsel %vm226, %v2957, 0
      %v2995 = vsel %vm226, %v2958, 0
      %v2998 = vsel %vm226, %v2959, 0
      %v3001 = vsel %vm226, %v2960, 0
      %v3004 = vsel %vm226, %v2961, 0
      %v3007 = vsel %vm226, %v2962, 0
      %v3010 = vsel %vm226, %v2963, 0
      %v3013 = vsel %vm596, %v2883, 0
      %3015 = vmatpush.bf16.msra.mxu0 0
      %3016 = vmatpush.bf16.msra.mxu0 0
      %3017 = vmatpush.bf16.msra.mxu0 0
      %3018 = vmatpush.bf16.msra.mxu0 0
      %3019 = vmatpush.bf16.msra.mxu0 0
      %3020 = vmatpush.bf16.msra.mxu0 0
      %3021 = vmatpush.bf16.msra.mxu0 0
      %3022 = vmatpush.bf16.msra.mxu0 %v3013
      %3023 = vmatmul.bf16.gmra.mxu0 %v2965
      %v3024 = vpop.f32.mrf.mxu0
      %v3025 = vadd.f32 0.0, %v3024
      %v3026 = vpop.f32.mrf.mxu0
      %v3027 = vadd.f32 0.0, %v3026
      %3028 = vmatmul.bf16.gmra.mxu0 %v2968
      %v3029 = vpop.f32.mrf.mxu0
      %v3030 = vadd.f32 0.0, %v3029
      %v3031 = vpop.f32.mrf.mxu0
      %v3032 = vadd.f32 0.0, %v3031
      %3033 = vmatmul.bf16.gmra.mxu0 %v2971
      %v3034 = vpop.f32.mrf.mxu0
      %v3035 = vadd.f32 0.0, %v3034
      %v3036 = vpop.f32.mrf.mxu0
      %v3037 = vadd.f32 0.0, %v3036
      %3038 = vmatmul.bf16.gmra.mxu0 %v2974
      %v3039 = vpop.f32.mrf.mxu0
      %v3040 = vadd.f32 0.0, %v3039
      %v3041 = vpop.f32.mrf.mxu0
      %v3042 = vadd.f32 0.0, %v3041
      %3043 = vmatmul.bf16.gmra.mxu0 %v2977
      %v3044 = vpop.f32.mrf.mxu0
      %v3045 = vadd.f32 0.0, %v3044
      %v3046 = vpop.f32.mrf.mxu0
      %v3047 = vadd.f32 0.0, %v3046
      %3048 = vmatmul.bf16.gmra.mxu0 %v2980
      %v3049 = vpop.f32.mrf.mxu0
      %v3050 = vadd.f32 0.0, %v3049
      %v3051 = vpop.f32.mrf.mxu0
      %v3052 = vadd.f32 0.0, %v3051
      %3053 = vmatmul.bf16.gmra.mxu0 %v2983
      %v3054 = vpop.f32.mrf.mxu0
      %v3055 = vadd.f32 0.0, %v3054
      %v3056 = vpop.f32.mrf.mxu0
      %v3057 = vadd.f32 0.0, %v3056
      %3058 = vmatmul.bf16.gmra.mxu0 %v2986
      %v3059 = vpop.f32.mrf.mxu0
      %v3060 = vadd.f32 0.0, %v3059
      %v3061 = vpop.f32.mrf.mxu0
      %v3062 = vadd.f32 0.0, %v3061
      %3063 = vmatmul.bf16.gmra.mxu0 %v2989
      %v3064 = vpop.f32.mrf.mxu0
      %v3065 = vadd.f32 0.0, %v3064
      %v3066 = vpop.f32.mrf.mxu0
      %v3067 = vadd.f32 0.0, %v3066
      %3068 = vmatmul.bf16.gmra.mxu0 %v2992
      %v3069 = vpop.f32.mrf.mxu0
      %v3070 = vadd.f32 0.0, %v3069
      %v3071 = vpop.f32.mrf.mxu0
      %v3072 = vadd.f32 0.0, %v3071
      %3073 = vmatmul.bf16.gmra.mxu0 %v2995
      %v3074 = vpop.f32.mrf.mxu0
      %v3075 = vadd.f32 0.0, %v3074
      %v3076 = vpop.f32.mrf.mxu0
      %v3077 = vadd.f32 0.0, %v3076
      %3078 = vmatmul.bf16.gmra.mxu0 %v2998
      %v3079 = vpop.f32.mrf.mxu0
      %v3080 = vadd.f32 0.0, %v3079
      %v3081 = vpop.f32.mrf.mxu0
      %v3082 = vadd.f32 0.0, %v3081
      %3083 = vmatmul.bf16.gmra.mxu0 %v3001
      %v3084 = vpop.f32.mrf.mxu0
      %v3085 = vadd.f32 0.0, %v3084
      %v3086 = vpop.f32.mrf.mxu0
      %v3087 = vadd.f32 0.0, %v3086
      %3088 = vmatmul.bf16.gmra.mxu0 %v3004
      %v3089 = vpop.f32.mrf.mxu0
      %v3090 = vadd.f32 0.0, %v3089
      %v3091 = vpop.f32.mrf.mxu0
      %v3092 = vadd.f32 0.0, %v3091
      %3093 = vmatmul.bf16.gmra.mxu0 %v3007
      %v3094 = vpop.f32.mrf.mxu0
      %v3095 = vadd.f32 0.0, %v3094
      %v3096 = vpop.f32.mrf.mxu0
      %v3097 = vadd.f32 0.0, %v3096
      %3098 = vmatmul.bf16.gmra.mxu0 %v3010
      %v3099 = vpop.f32.mrf.mxu0
      %v3100 = vadd.f32 0.0, %v3099
      %v3101 = vpop.f32.mrf.mxu0
      %v3102 = vadd.f32 0.0, %v3101
      %3103 = vdwg.mxu0
      %v3104 = vadd.f32 %v2786, %v3025
      %v3105 = vadd.f32 %v2787, %v3027
      %v3106 = vadd.f32 %v2788, %v3030
      %v3107 = vadd.f32 %v2789, %v3032
      %v3108 = vadd.f32 %v2790, %v3035
      %v3109 = vadd.f32 %v2791, %v3037
      %v3110 = vadd.f32 %v2792, %v3040
      %v3111 = vadd.f32 %v2793, %v3042
      %v3112 = vadd.f32 %v2794, %v3045
      %v3113 = vadd.f32 %v2795, %v3047
      %v3114 = vadd.f32 %v2796, %v3050
      %v3115 = vadd.f32 %v2797, %v3052
      %v3116 = vadd.f32 %v2798, %v3055
      %v3117 = vadd.f32 %v2799, %v3057
      %v3118 = vadd.f32 %v2800, %v3060
      %v3119 = vadd.f32 %v2801, %v3062
      %v3120 = vadd.f32 %v2802, %v3065
      %v3121 = vadd.f32 %v2803, %v3067
      %v3122 = vadd.f32 %v2804, %v3070
      %v3123 = vadd.f32 %v2805, %v3072
      %v3124 = vadd.f32 %v2806, %v3075
      %v3125 = vadd.f32 %v2807, %v3077
      %v3126 = vadd.f32 %v2808, %v3080
      %v3127 = vadd.f32 %v2809, %v3082
      %v3128 = vadd.f32 %v2810, %v3085
      %v3129 = vadd.f32 %v2811, %v3087
      %v3130 = vadd.f32 %v2812, %v3090
      %v3131 = vadd.f32 %v2813, %v3092
      %v3132 = vadd.f32 %v2814, %v3095
      %v3133 = vadd.f32 %v2815, %v3097
      %v3134 = vadd.f32 %v2816, %v3100
      %v3135 = vadd.f32 %v2817, %v3102
      %v3136 = vld [vmem:[%s2] sm:$0x1]
      %v3138 = vperm.slane %v3136, 0
      %v3140 = vadd.f32 %v3104, %v3138
      %v3141 = vadd.f32 %v3105, %v3138
      %v3142 = vadd.f32 %v3106, %v3138
      %v3143 = vadd.f32 %v3107, %v3138
      %v3144 = vadd.f32 %v3108, %v3138
      %v3145 = vadd.f32 %v3109, %v3138
      %v3146 = vadd.f32 %v3110, %v3138
      %v3147 = vadd.f32 %v3111, %v3138
      %v3148 = vadd.f32 %v3112, %v3138
      %v3149 = vadd.f32 %v3113, %v3138
      %v3150 = vadd.f32 %v3114, %v3138
      %v3151 = vadd.f32 %v3115, %v3138
      %v3152 = vadd.f32 %v3116, %v3138
      %v3153 = vadd.f32 %v3117, %v3138
      %v3154 = vadd.f32 %v3118, %v3138
      %v3155 = vadd.f32 %v3119, %v3138
      %v3156 = vadd.f32 %v3120, %v3138
      %v3157 = vadd.f32 %v3121, %v3138
      %v3158 = vadd.f32 %v3122, %v3138
      %v3159 = vadd.f32 %v3123, %v3138
      %v3160 = vadd.f32 %v3124, %v3138
      %v3161 = vadd.f32 %v3125, %v3138
      %v3162 = vadd.f32 %v3126, %v3138
      %v3163 = vadd.f32 %v3127, %v3138
      %v3164 = vadd.f32 %v3128, %v3138
      %v3165 = vadd.f32 %v3129, %v3138
      %v3166 = vadd.f32 %v3130, %v3138
      %v3167 = vadd.f32 %v3131, %v3138
      %v3168 = vadd.f32 %v3132, %v3138
      %v3169 = vadd.f32 %v3133, %v3138
      %v3170 = vadd.f32 %v3134, %v3138
      %v3171 = vadd.f32 %v3135, %v3138
      %v3172 = vmax.f32 %v3140, 0.0
      %v3173 = vmax.f32 %v3141, 0.0
      %v3174 = vmax.f32 %v3142, 0.0
      %v3175 = vmax.f32 %v3143, 0.0
      %v3176 = vmax.f32 %v3144, 0.0
      %v3177 = vmax.f32 %v3145, 0.0
      %v3178 = vmax.f32 %v3146, 0.0
      %v3179 = vmax.f32 %v3147, 0.0
      %v3180 = vmax.f32 %v3148, 0.0
      %v3181 = vmax.f32 %v3149, 0.0
      %v3182 = vmax.f32 %v3150, 0.0
      %v3183 = vmax.f32 %v3151, 0.0
      %v3184 = vmax.f32 %v3152, 0.0
      %v3185 = vmax.f32 %v3153, 0.0
      %v3186 = vmax.f32 %v3154, 0.0
      %v3187 = vmax.f32 %v3155, 0.0
      %v3188 = vmax.f32 %v3156, 0.0
      %v3189 = vmax.f32 %v3157, 0.0
      %v3190 = vmax.f32 %v3158, 0.0
      %v3191 = vmax.f32 %v3159, 0.0
      %v3192 = vmax.f32 %v3160, 0.0
      %v3193 = vmax.f32 %v3161, 0.0
      %v3194 = vmax.f32 %v3162, 0.0
      %v3195 = vmax.f32 %v3163, 0.0
      %v3196 = vmax.f32 %v3164, 0.0
      %v3197 = vmax.f32 %v3165, 0.0
      %v3198 = vmax.f32 %v3166, 0.0
      %v3199 = vmax.f32 %v3167, 0.0
      %v3200 = vmax.f32 %v3168, 0.0
      %v3201 = vmax.f32 %v3169, 0.0
      %v3202 = vmax.f32 %v3170, 0.0
      %v3203 = vmax.f32 %v3171, 0.0
      %3204 = vst.msk [vmem:[#allocation3] sm:$0xff] %vm226, 0.0
      %3205 = vst.msk [vmem:[#allocation3 + $0x8] sm:$0xff] %vm226, 0.0
      %3206 = vst.msk [vmem:[#allocation3 + $0x10] sm:$0x3] %vm229, 0.0
      %s3207 = scalar_lea.vmem [#allocation3], 408
      %3208 = vst.msk [vmem:[%s3207] sm:$0xff] %vm226, 0.0
      %3209 = vst.msk [vmem:[%s3207 + $0x8] sm:$0xff] %vm226, 0.0
      %3210 = vst.msk [vmem:[%s3207 + $0x10] sm:$0x3] %vm229, 0.0
      %3211 = vst.msk [vmem:[#allocation3] sm:$0x1] %vm235, 0.0
      %3212 = vst.msk [vmem:[#allocation3 + $0x18] sm:$0x1] %vm235, 0.0
      %3213 = vst.msk [vmem:[#allocation3 + $0x30] sm:$0x1] %vm235, 0.0
      %3214 = vst.msk [vmem:[#allocation3 + $0x48] sm:$0x1] %vm235, 0.0
      %3215 = vst.msk [vmem:[#allocation3 + $0x60] sm:$0x1] %vm235, 0.0
      %3216 = vst.msk [vmem:[#allocation3 + $0x78] sm:$0x1] %vm235, 0.0
      %3217 = vst.msk [vmem:[#allocation3 + $0x90] sm:$0x1] %vm235, 0.0
      %3218 = vst.msk [vmem:[#allocation3 + $0xa8] sm:$0x1] %vm235, 0.0
      %3219 = vst.msk [vmem:[#allocation3 + $0xc0] sm:$0x1] %vm235, 0.0
      %3220 = vst.msk [vmem:[#allocation3 + $0xd8] sm:$0x1] %vm235, 0.0
      %3221 = vst.msk [vmem:[#allocation3 + $0xf0] sm:$0x1] %vm235, 0.0
      %3222 = vst.msk [vmem:[#allocation3 + $0x108] sm:$0x1] %vm235, 0.0
      %3223 = vst.msk [vmem:[#allocation3 + $0x120] sm:$0x1] %vm235, 0.0
      %3224 = vst.msk [vmem:[#allocation3 + $0x138] sm:$0x1] %vm235, 0.0
      %3225 = vst.msk [vmem:[#allocation3 + $0x150] sm:$0x1] %vm235, 0.0
      %3226 = vst.msk [vmem:[#allocation3 + $0x168] sm:$0x1] %vm235, 0.0
      %3227 = vst.msk [vmem:[#allocation3 + $0x180] sm:$0x1] %vm235, 0.0
      %3228 = vst.msk [vmem:[#allocation3 + $0x198] sm:$0x1] %vm235, 0.0
      %3229 = vst.msk [vmem:[#allocation3 + $0x11] sm:$0x1] %vm235, 0.0
      %3230 = vst.msk [vmem:[#allocation3 + $0x29] sm:$0x1] %vm235, 0.0
      %3231 = vst.msk [vmem:[#allocation3 + $0x41] sm:$0x1] %vm235, 0.0
      %3232 = vst.msk [vmem:[#allocation3 + $0x59] sm:$0x1] %vm235, 0.0
      %3233 = vst.msk [vmem:[#allocation3 + $0x71] sm:$0x1] %vm235, 0.0
      %3234 = vst.msk [vmem:[#allocation3 + $0x89] sm:$0x1] %vm235, 0.0
      %3235 = vst.msk [vmem:[#allocation3 + $0xa1] sm:$0x1] %vm235, 0.0
      %3236 = vst.msk [vmem:[#allocation3 + $0xb9] sm:$0x1] %vm235, 0.0
      %3237 = vst.msk [vmem:[#allocation3 + $0xd1] sm:$0x1] %vm235, 0.0
      %3238 = vst.msk [vmem:[#allocation3 + $0xe9] sm:$0x1] %vm235, 0.0
      %3239 = vst.msk [vmem:[#allocation3 + $0x101] sm:$0x1] %vm235, 0.0
      %3240 = vst.msk [vmem:[#allocation3 + $0x119] sm:$0x1] %vm235, 0.0
      %3241 = vst.msk [vmem:[#allocation3 + $0x131] sm:$0x1] %vm235, 0.0
      %3242 = vst.msk [vmem:[#allocation3 + $0x149] sm:$0x1] %vm235, 0.0
      %3243 = vst.msk [vmem:[#allocation3 + $0x161] sm:$0x1] %vm235, 0.0
      %3244 = vst.msk [vmem:[#allocation3 + $0x179] sm:$0x1] %vm235, 0.0
      %3245 = vst.msk [vmem:[#allocation3 + $0x191] sm:$0x1] %vm235, 0.0
      %3246 = vst.msk [vmem:[#allocation3 + $0x1a9] sm:$0x1] %vm235, 0.0
      %s3247 = scalar_lea.vmem [#allocation3], 24
      %3248 = vst.msk [vmem:[%s3247 + $0x1] sm:$0xff] %vm226, %v3172
      %3249 = vst.msk [vmem:[%s3247 + $0x9] sm:$0xff] %vm226, %v3173
      %3250 = vst.msk [vmem:[%s3247 + $0x19] sm:$0xff] %vm226, %v3174
      %3251 = vst.msk [vmem:[%s3247 + $0x21] sm:$0xff] %vm226, %v3175
      %3252 = vst.msk [vmem:[%s3247 + $0x31] sm:$0xff] %vm226, %v3176
      %3253 = vst.msk [vmem:[%s3247 + $0x39] sm:$0xff] %vm226, %v3177
      %3254 = vst.msk [vmem:[%s3247 + $0x49] sm:$0xff] %vm226, %v3178
      %3255 = vst.msk [vmem:[%s3247 + $0x51] sm:$0xff] %vm226, %v3179
      %3256 = vst.msk [vmem:[%s3247 + $0x61] sm:$0xff] %vm226, %v3180
      %3257 = vst.msk [vmem:[%s3247 + $0x69] sm:$0xff] %vm226, %v3181
      %3258 = vst.msk [vmem:[%s3247 + $0x79] sm:$0xff] %vm226, %v3182
      %3259 = vst.msk [vmem:[%s3247 + $0x81] sm:$0xff] %vm226, %v3183
      %3260 = vst.msk [vmem:[%s3247 + $0x91] sm:$0xff] %vm226, %v3184
      %3261 = vst.msk [vmem:[%s3247 + $0x99] sm:$0xff] %vm226, %v3185
      %3262 = vst.msk [vmem:[%s3247 + $0xa9] sm:$0xff] %vm226, %v3186
      %3263 = vst.msk [vmem:[%s3247 + $0xb1] sm:$0xff] %vm226, %v3187
      %3264 = vst.msk [vmem:[%s3247 + $0xc1] sm:$0xff] %vm226, %v3188
      %3265 = vst.msk [vmem:[%s3247 + $0xc9] sm:$0xff] %vm226, %v3189
      %3266 = vst.msk [vmem:[%s3247 + $0xd9] sm:$0xff] %vm226, %v3190
      %3267 = vst.msk [vmem:[%s3247 + $0xe1] sm:$0xff] %vm226, %v3191
      %3268 = vst.msk [vmem:[%s3247 + $0xf1] sm:$0xff] %vm226, %v3192
      %3269 = vst.msk [vmem:[%s3247 + $0xf9] sm:$0xff] %vm226, %v3193
      %3270 = vst.msk [vmem:[%s3247 + $0x109] sm:$0xff] %vm226, %v3194
      %3271 = vst.msk [vmem:[%s3247 + $0x111] sm:$0xff] %vm226, %v3195
      %3272 = vst.msk [vmem:[%s3247 + $0x121] sm:$0xff] %vm226, %v3196
      %3273 = vst.msk [vmem:[%s3247 + $0x129] sm:$0xff] %vm226, %v3197
      %3274 = vst.msk [vmem:[%s3247 + $0x139] sm:$0xff] %vm226, %v3198
      %3275 = vst.msk [vmem:[%s3247 + $0x141] sm:$0xff] %vm226, %v3199
      %3276 = vst.msk [vmem:[%s3247 + $0x151] sm:$0xff] %vm226, %v3200
      %3277 = vst.msk [vmem:[%s3247 + $0x159] sm:$0xff] %vm226, %v3201
      %3278 = vst.msk [vmem:[%s3247 + $0x169] sm:$0xff] %vm226, %v3202
      %3279 = vst.msk [vmem:[%s3247 + $0x171] sm:$0xff] %vm226, %v3203
      %v3280 = vld [vmem:[#allocation3] sm:$0xff]
      %v3281 = vld [vmem:[#allocation3 + $0x8] sm:$0xff]
      %v3282 = vld [vmem:[#allocation3 + $0x18] sm:$0xff]
      %v3283 = vld [vmem:[#allocation3 + $0x20] sm:$0xff]
      %v3284 = vld [vmem:[#allocation3 + $0x30] sm:$0xff]
      %v3285 = vld [vmem:[#allocation3 + $0x38] sm:$0xff]
      %v3286 = vld [vmem:[#allocation3 + $0x48] sm:$0xff]
      %v3287 = vld [vmem:[#allocation3 + $0x50] sm:$0xff]
      %v3288 = vld [vmem:[#allocation3 + $0x60] sm:$0xff]
      %v3289 = vld [vmem:[#allocation3 + $0x68] sm:$0xff]
      %v3290 = vld [vmem:[#allocation3 + $0x78] sm:$0xff]
      %v3291 = vld [vmem:[#allocation3 + $0x80] sm:$0xff]
      %v3292 = vld [vmem:[#allocation3 + $0x90] sm:$0xff]
      %v3293 = vld [vmem:[#allocation3 + $0x98] sm:$0xff]
      %v3294 = vld [vmem:[#allocation3 + $0xa8] sm:$0xff]
      %v3295 = vld [vmem:[#allocation3 + $0xb0] sm:$0xff]
      %v3296 = vld [vmem:[#allocation3 + $0xc0] sm:$0xff]
      %v3297 = vld [vmem:[#allocation3 + $0xc8] sm:$0xff]
      %v3298 = vld [vmem:[#allocation3 + $0xd8] sm:$0xff]
      %v3299 = vld [vmem:[#allocation3 + $0xe0] sm:$0xff]
      %v3300 = vld [vmem:[#allocation3 + $0xf0] sm:$0xff]
      %v3301 = vld [vmem:[#allocation3 + $0xf8] sm:$0xff]
      %v3302 = vld [vmem:[#allocation3 + $0x108] sm:$0xff]
      %v3303 = vld [vmem:[#allocation3 + $0x110] sm:$0xff]
      %v3304 = vld [vmem:[#allocation3 + $0x120] sm:$0xff]
      %v3305 = vld [vmem:[#allocation3 + $0x128] sm:$0xff]
      %v3306 = vld [vmem:[#allocation3 + $0x138] sm:$0xff]
      %v3307 = vld [vmem:[#allocation3 + $0x140] sm:$0xff]
      %v3308 = vld [vmem:[#allocation3 + $0x150] sm:$0xff]
      %v3309 = vld [vmem:[#allocation3 + $0x158] sm:$0xff]
      %v3310 = vld [vmem:[#allocation3 + $0x168] sm:$0xff]
      %v3311 = vld [vmem:[#allocation3 + $0x170] sm:$0xff]
      %v3312 = vpack.c.bf16 %v3280, %v3280
      %v3313 = vpack.c.bf16 %v3281, %v3281
      %v3314 = vpack.c.bf16 %v3282, %v3282
      %v3315 = vpack.c.bf16 %v3283, %v3283
      %v3316 = vpack.c.bf16 %v3284, %v3284
      %v3317 = vpack.c.bf16 %v3285, %v3285
      %v3318 = vpack.c.bf16 %v3286, %v3286
      %v3319 = vpack.c.bf16 %v3287, %v3287
      %v3320 = vpack.c.bf16 %v3288, %v3288
      %v3321 = vpack.c.bf16 %v3289, %v3289
      %v3322 = vpack.c.bf16 %v3290, %v3290
      %v3323 = vpack.c.bf16 %v3291, %v3291
      %v3324 = vpack.c.bf16 %v3292, %v3292
      %v3325 = vpack.c.bf16 %v3293, %v3293
      %v3326 = vpack.c.bf16 %v3294, %v3294
      %v3327 = vpack.c.bf16 %v3295, %v3295
      %v3328 = vpack.c.bf16 %v3296, %v3296
      %v3329 = vpack.c.bf16 %v3297, %v3297
      %v3330 = vpack.c.bf16 %v3298, %v3298
      %v3331 = vpack.c.bf16 %v3299, %v3299
      %v3332 = vpack.c.bf16 %v3300, %v3300
      %v3333 = vpack.c.bf16 %v3301, %v3301
      %v3334 = vpack.c.bf16 %v3302, %v3302
      %v3335 = vpack.c.bf16 %v3303, %v3303
      %v3336 = vpack.c.bf16 %v3304, %v3304
      %v3337 = vpack.c.bf16 %v3305, %v3305
      %v3338 = vpack.c.bf16 %v3306, %v3306
      %v3339 = vpack.c.bf16 %v3307, %v3307
      %v3340 = vpack.c.bf16 %v3308, %v3308
      %v3341 = vpack.c.bf16 %v3309, %v3309
      %v3342 = vpack.c.bf16 %v3310, %v3310
      %v3343 = vpack.c.bf16 %v3311, %v3311
      %v3344 = vld [vmem:[%s3] sm:$0x3]
      %v3345 = vld [vmem:[#allocation3 + $0x1] sm:$0xff]
      %v3346 = vld [vmem:[#allocation3 + $0x9] sm:$0xff]
      %v3347 = vld [vmem:[#allocation3 + $0x19] sm:$0xff]
      %v3348 = vld [vmem:[#allocation3 + $0x21] sm:$0xff]
      %v3349 = vld [vmem:[#allocation3 + $0x31] sm:$0xff]
      %v3350 = vld [vmem:[#allocation3 + $0x39] sm:$0xff]
      %v3351 = vld [vmem:[#allocation3 + $0x49] sm:$0xff]
      %v3352 = vld [vmem:[#allocation3 + $0x51] sm:$0xff]
      %v3353 = vld [vmem:[#allocation3 + $0x61] sm:$0xff]
      %v3354 = vld [vmem:[#allocation3 + $0x69] sm:$0xff]
      %v3355 = vld [vmem:[#allocation3 + $0x79] sm:$0xff]
      %v3356 = vld [vmem:[#allocation3 + $0x81] sm:$0xff]
      %v3357 = vld [vmem:[#allocation3 + $0x91] sm:$0xff]
      %v3358 = vld [vmem:[#allocation3 + $0x99] sm:$0xff]
      %v3359 = vld [vmem:[#allocation3 + $0xa9] sm:$0xff]
      %v3360 = vld [vmem:[#allocation3 + $0xb1] sm:$0xff]
      %v3361 = vld [vmem:[#allocation3 + $0xc1] sm:$0xff]
      %v3362 = vld [vmem:[#allocation3 + $0xc9] sm:$0xff]
      %v3363 = vld [vmem:[#allocation3 + $0xd9] sm:$0xff]
      %v3364 = vld [vmem:[#allocation3 + $0xe1] sm:$0xff]
      %v3365 = vld [vmem:[#allocation3 + $0xf1] sm:$0xff]
      %v3366 = vld [vmem:[#allocation3 + $0xf9] sm:$0xff]
      %v3367 = vld [vmem:[#allocation3 + $0x109] sm:$0xff]
      %v3368 = vld [vmem:[#allocation3 + $0x111] sm:$0xff]
      %v3369 = vld [vmem:[#allocation3 + $0x121] sm:$0xff]
      %v3370 = vld [vmem:[#allocation3 + $0x129] sm:$0xff]
      %v3371 = vld [vmem:[#allocation3 + $0x139] sm:$0xff]
      %v3372 = vld [vmem:[#allocation3 + $0x141] sm:$0xff]
      %v3373 = vld [vmem:[#allocation3 + $0x151] sm:$0xff]
      %v3374 = vld [vmem:[#allocation3 + $0x159] sm:$0xff]
      %v3375 = vld [vmem:[#allocation3 + $0x169] sm:$0xff]
      %v3376 = vld [vmem:[#allocation3 + $0x171] sm:$0xff]
      %v3377 = vpack.c.bf16 %v3345, %v3345
      %v3378 = vpack.c.bf16 %v3346, %v3346
      %v3379 = vpack.c.bf16 %v3347, %v3347
      %v3380 = vpack.c.bf16 %v3348, %v3348
      %v3381 = vpack.c.bf16 %v3349, %v3349
      %v3382 = vpack.c.bf16 %v3350, %v3350
      %v3383 = vpack.c.bf16 %v3351, %v3351
      %v3384 = vpack.c.bf16 %v3352, %v3352
      %v3385 = vpack.c.bf16 %v3353, %v3353
      %v3386 = vpack.c.bf16 %v3354, %v3354
      %v3387 = vpack.c.bf16 %v3355, %v3355
      %v3388 = vpack.c.bf16 %v3356, %v3356
      %v3389 = vpack.c.bf16 %v3357, %v3357
      %v3390 = vpack.c.bf16 %v3358, %v3358
      %v3391 = vpack.c.bf16 %v3359, %v3359
      %v3392 = vpack.c.bf16 %v3360, %v3360
      %v3393 = vpack.c.bf16 %v3361, %v3361
      %v3394 = vpack.c.bf16 %v3362, %v3362
      %v3395 = vpack.c.bf16 %v3363, %v3363
      %v3396 = vpack.c.bf16 %v3364, %v3364
      %v3397 = vpack.c.bf16 %v3365, %v3365
      %v3398 = vpack.c.bf16 %v3366, %v3366
      %v3399 = vpack.c.bf16 %v3367, %v3367
      %v3400 = vpack.c.bf16 %v3368, %v3368
      %v3401 = vpack.c.bf16 %v3369, %v3369
      %v3402 = vpack.c.bf16 %v3370, %v3370
      %v3403 = vpack.c.bf16 %v3371, %v3371
      %v3404 = vpack.c.bf16 %v3372, %v3372
      %v3405 = vpack.c.bf16 %v3373, %v3373
      %v3406 = vpack.c.bf16 %v3374, %v3374
      %v3407 = vpack.c.bf16 %v3375, %v3375
      %v3408 = vpack.c.bf16 %v3376, %v3376
      %s3409 = scalar_lea.vmem %s3, 2
      %v3410 = vld [vmem:[%s3409] sm:$0x3]
      %v3443 = vunpack.c.l.b16 %v3377
      %v3444 = vunpack.c.l.b16 %v3378
      %v3445 = vunpack.c.l.b16 %v3379
      %v3446 = vunpack.c.l.b16 %v3380
      %v3447 = vunpack.c.l.b16 %v3381
      %v3448 = vunpack.c.l.b16 %v3382
      %v3449 = vunpack.c.l.b16 %v3383
      %v3450 = vunpack.c.l.b16 %v3384
      %v3451 = vunpack.c.l.b16 %v3385
      %v3452 = vunpack.c.l.b16 %v3386
      %v3453 = vunpack.c.l.b16 %v3387
      %v3454 = vunpack.c.l.b16 %v3388
      %v3455 = vunpack.c.l.b16 %v3389
      %v3456 = vunpack.c.l.b16 %v3390
      %v3457 = vunpack.c.l.b16 %v3391
      %v3458 = vunpack.c.l.b16 %v3392
      %v3459 = vunpack.c.l.b16 %v3393
      %v3460 = vunpack.c.l.b16 %v3394
      %v3461 = vunpack.c.l.b16 %v3395
      %v3462 = vunpack.c.l.b16 %v3396
      %v3463 = vunpack.c.l.b16 %v3397
      %v3464 = vunpack.c.l.b16 %v3398
      %v3465 = vunpack.c.l.b16 %v3399
      %v3466 = vunpack.c.l.b16 %v3400
      %v3467 = vunpack.c.l.b16 %v3401
      %v3468 = vunpack.c.l.b16 %v3402
      %v3469 = vunpack.c.l.b16 %v3403
      %v3470 = vunpack.c.l.b16 %v3404
      %v3471 = vunpack.c.l.b16 %v3405
      %v3472 = vunpack.c.l.b16 %v3406
      %v3473 = vunpack.c.l.b16 %v3407
      %v3474 = vunpack.c.l.b16 %v3408
      %v3475 = vpack.c.b16 %v3444, %v3443
      %v3476 = vpack.c.b16 %v3446, %v3445
      %v3477 = vpack.c.b16 %v3448, %v3447
      %v3478 = vpack.c.b16 %v3450, %v3449
      %v3479 = vpack.c.b16 %v3452, %v3451
      %v3480 = vpack.c.b16 %v3454, %v3453
      %v3481 = vpack.c.b16 %v3456, %v3455
      %v3482 = vpack.c.b16 %v3458, %v3457
      %v3483 = vpack.c.b16 %v3460, %v3459
      %v3484 = vpack.c.b16 %v3462, %v3461
      %v3485 = vpack.c.b16 %v3464, %v3463
      %v3486 = vpack.c.b16 %v3466, %v3465
      %v3487 = vpack.c.b16 %v3468, %v3467
      %v3488 = vpack.c.b16 %v3470, %v3469
      %v3489 = vpack.c.b16 %v3472, %v3471
      %v3490 = vpack.c.b16 %v3474, %v3473
      %v3492 = vsel %vm226, %v3475, 0
      %v3495 = vsel %vm226, %v3476, 0
      %v3498 = vsel %vm226, %v3477, 0
      %v3501 = vsel %vm226, %v3478, 0
      %v3504 = vsel %vm226, %v3479, 0
      %v3507 = vsel %vm226, %v3480, 0
      %v3510 = vsel %vm226, %v3481, 0
      %v3513 = vsel %vm226, %v3482, 0
      %v3516 = vsel %vm226, %v3483, 0
      %v3519 = vsel %vm226, %v3484, 0
      %v3522 = vsel %vm226, %v3485, 0
      %v3525 = vsel %vm226, %v3486, 0
      %v3528 = vsel %vm226, %v3487, 0
      %v3531 = vsel %vm226, %v3488, 0
      %v3534 = vsel %vm226, %v3489, 0
      %v3537 = vsel %vm226, %v3490, 0
      %v3540 = vsel %vm596, %v3410, 0
      %3542 = vmatpush.bf16.msra.mxu0 0
      %3543 = vmatpush.bf16.msra.mxu0 0
      %3544 = vmatpush.bf16.msra.mxu0 0
      %3545 = vmatpush.bf16.msra.mxu0 0
      %3546 = vmatpush.bf16.msra.mxu0 0
      %3547 = vmatpush.bf16.msra.mxu0 0
      %3548 = vmatpush.bf16.msra.mxu0 0
      %3549 = vmatpush.bf16.msra.mxu0 %v3540
      %3550 = vmatmul.bf16.gmra.mxu0 %v3492
      %v3551 = vpop.f32.mrf.mxu0
      %v3552 = vadd.f32 0.0, %v3551
      %v3553 = vpop.f32.mrf.mxu0
      %v3554 = vadd.f32 0.0, %v3553
      %3555 = vmatmul.bf16.gmra.mxu0 %v3495
      %v3556 = vpop.f32.mrf.mxu0
      %v3557 = vadd.f32 0.0, %v3556
      %v3558 = vpop.f32.mrf.mxu0
      %v3559 = vadd.f32 0.0, %v3558
      %3560 = vmatmul.bf16.gmra.mxu0 %v3498
      %v3561 = vpop.f32.mrf.mxu0
      %v3562 = vadd.f32 0.0, %v3561
      %v3563 = vpop.f32.mrf.mxu0
      %v3564 = vadd.f32 0.0, %v3563
      %3565 = vmatmul.bf16.gmra.mxu0 %v3501
      %v3566 = vpop.f32.mrf.mxu0
      %v3567 = vadd.f32 0.0, %v3566
      %v3568 = vpop.f32.mrf.mxu0
      %v3569 = vadd.f32 0.0, %v3568
      %3570 = vmatmul.bf16.gmra.mxu0 %v3504
      %v3571 = vpop.f32.mrf.mxu0
      %v3572 = vadd.f32 0.0, %v3571
      %v3573 = vpop.f32.mrf.mxu0
      %v3574 = vadd.f32 0.0, %v3573
      %3575 = vmatmul.bf16.gmra.mxu0 %v3507
      %v3576 = vpop.f32.mrf.mxu0
      %v3577 = vadd.f32 0.0, %v3576
      %v3578 = vpop.f32.mrf.mxu0
      %v3579 = vadd.f32 0.0, %v3578
      %3580 = vmatmul.bf16.gmra.mxu0 %v3510
      %v3581 = vpop.f32.mrf.mxu0
      %v3582 = vadd.f32 0.0, %v3581
      %v3583 = vpop.f32.mrf.mxu0
      %v3584 = vadd.f32 0.0, %v3583
      %3585 = vmatmul.bf16.gmra.mxu0 %v3513
      %v3586 = vpop.f32.mrf.mxu0
      %v3587 = vadd.f32 0.0, %v3586
      %v3588 = vpop.f32.mrf.mxu0
      %v3589 = vadd.f32 0.0, %v3588
      %3590 = vmatmul.bf16.gmra.mxu0 %v3516
      %v3591 = vpop.f32.mrf.mxu0
      %v3592 = vadd.f32 0.0, %v3591
      %v3593 = vpop.f32.mrf.mxu0
      %v3594 = vadd.f32 0.0, %v3593
      %3595 = vmatmul.bf16.gmra.mxu0 %v3519
      %v3596 = vpop.f32.mrf.mxu0
      %v3597 = vadd.f32 0.0, %v3596
      %v3598 = vpop.f32.mrf.mxu0
      %v3599 = vadd.f32 0.0, %v3598
      %3600 = vmatmul.bf16.gmra.mxu0 %v3522
      %v3601 = vpop.f32.mrf.mxu0
      %v3602 = vadd.f32 0.0, %v3601
      %v3603 = vpop.f32.mrf.mxu0
      %v3604 = vadd.f32 0.0, %v3603
      %3605 = vmatmul.bf16.gmra.mxu0 %v3525
      %v3606 = vpop.f32.mrf.mxu0
      %v3607 = vadd.f32 0.0, %v3606
      %v3608 = vpop.f32.mrf.mxu0
      %v3609 = vadd.f32 0.0, %v3608
      %3610 = vmatmul.bf16.gmra.mxu0 %v3528
      %v3611 = vpop.f32.mrf.mxu0
      %v3612 = vadd.f32 0.0, %v3611
      %v3613 = vpop.f32.mrf.mxu0
      %v3614 = vadd.f32 0.0, %v3613
      %3615 = vmatmul.bf16.gmra.mxu0 %v3531
      %v3616 = vpop.f32.mrf.mxu0
      %v3617 = vadd.f32 0.0, %v3616
      %v3618 = vpop.f32.mrf.mxu0
      %v3619 = vadd.f32 0.0, %v3618
      %3620 = vmatmul.bf16.gmra.mxu0 %v3534
      %v3621 = vpop.f32.mrf.mxu0
      %v3622 = vadd.f32 0.0, %v3621
      %v3623 = vpop.f32.mrf.mxu0
      %v3624 = vadd.f32 0.0, %v3623
      %3625 = vmatmul.bf16.gmra.mxu0 %v3537
      %v3626 = vpop.f32.mrf.mxu0
      %v3627 = vadd.f32 0.0, %v3626
      %v3628 = vpop.f32.mrf.mxu0
      %v3629 = vadd.f32 0.0, %v3628
      %3630 = vdwg.mxu0
      %v3663 = vunpack.c.l.b16 %v3312
      %v3664 = vunpack.c.l.b16 %v3313
      %v3665 = vunpack.c.l.b16 %v3314
      %v3666 = vunpack.c.l.b16 %v3315
      %v3667 = vunpack.c.l.b16 %v3316
      %v3668 = vunpack.c.l.b16 %v3317
      %v3669 = vunpack.c.l.b16 %v3318
      %v3670 = vunpack.c.l.b16 %v3319
      %v3671 = vunpack.c.l.b16 %v3320
      %v3672 = vunpack.c.l.b16 %v3321
      %v3673 = vunpack.c.l.b16 %v3322
      %v3674 = vunpack.c.l.b16 %v3323
      %v3675 = vunpack.c.l.b16 %v3324
      %v3676 = vunpack.c.l.b16 %v3325
      %v3677 = vunpack.c.l.b16 %v3326
      %v3678 = vunpack.c.l.b16 %v3327
      %v3679 = vunpack.c.l.b16 %v3328
      %v3680 = vunpack.c.l.b16 %v3329
      %v3681 = vunpack.c.l.b16 %v3330
      %v3682 = vunpack.c.l.b16 %v3331
      %v3683 = vunpack.c.l.b16 %v3332
      %v3684 = vunpack.c.l.b16 %v3333
      %v3685 = vunpack.c.l.b16 %v3334
      %v3686 = vunpack.c.l.b16 %v3335
      %v3687 = vunpack.c.l.b16 %v3336
      %v3688 = vunpack.c.l.b16 %v3337
      %v3689 = vunpack.c.l.b16 %v3338
      %v3690 = vunpack.c.l.b16 %v3339
      %v3691 = vunpack.c.l.b16 %v3340
      %v3692 = vunpack.c.l.b16 %v3341
      %v3693 = vunpack.c.l.b16 %v3342
      %v3694 = vunpack.c.l.b16 %v3343
      %v3695 = vpack.c.b16 %v3664, %v3663
      %v3696 = vpack.c.b16 %v3666, %v3665
      %v3697 = vpack.c.b16 %v3668, %v3667
      %v3698 = vpack.c.b16 %v3670, %v3669
      %v3699 = vpack.c.b16 %v3672, %v3671
      %v3700 = vpack.c.b16 %v3674, %v3673
      %v3701 = vpack.c.b16 %v3676, %v3675
      %v3702 = vpack.c.b16 %v3678, %v3677
      %v3703 = vpack.c.b16 %v3680, %v3679
      %v3704 = vpack.c.b16 %v3682, %v3681
      %v3705 = vpack.c.b16 %v3684, %v3683
      %v3706 = vpack.c.b16 %v3686, %v3685
      %v3707 = vpack.c.b16 %v3688, %v3687
      %v3708 = vpack.c.b16 %v3690, %v3689
      %v3709 = vpack.c.b16 %v3692, %v3691
      %v3710 = vpack.c.b16 %v3694, %v3693
      %v3712 = vsel %vm226, %v3695, 0
      %v3715 = vsel %vm226, %v3696, 0
      %v3718 = vsel %vm226, %v3697, 0
      %v3721 = vsel %vm226, %v3698, 0
      %v3724 = vsel %vm226, %v3699, 0
      %v3727 = vsel %vm226, %v3700, 0
      %v3730 = vsel %vm226, %v3701, 0
      %v3733 = vsel %vm226, %v3702, 0
      %v3736 = vsel %vm226, %v3703, 0
      %v3739 = vsel %vm226, %v3704, 0
      %v3742 = vsel %vm226, %v3705, 0
      %v3745 = vsel %vm226, %v3706, 0
      %v3748 = vsel %vm226, %v3707, 0
      %v3751 = vsel %vm226, %v3708, 0
      %v3754 = vsel %vm226, %v3709, 0
      %v3757 = vsel %vm226, %v3710, 0
      %v3760 = vsel %vm596, %v3344, 0
      %3762 = vmatpush.bf16.msra.mxu0 0
      %3763 = vmatpush.bf16.msra.mxu0 0
      %3764 = vmatpush.bf16.msra.mxu0 0
      %3765 = vmatpush.bf16.msra.mxu0 0
      %3766 = vmatpush.bf16.msra.mxu0 0
      %3767 = vmatpush.bf16.msra.mxu0 0
      %3768 = vmatpush.bf16.msra.mxu0 0
      %3769 = vmatpush.bf16.msra.mxu0 %v3760
      %3770 = vmatmul.bf16.gmra.mxu0 %v3712
      %v3771 = vpop.f32.mrf.mxu0
      %v3772 = vadd.f32 %v3552, %v3771
      %v3773 = vpop.f32.mrf.mxu0
      %v3774 = vadd.f32 %v3554, %v3773
      %3775 = vmatmul.bf16.gmra.mxu0 %v3715
      %v3776 = vpop.f32.mrf.mxu0
      %v3777 = vadd.f32 %v3557, %v3776
      %v3778 = vpop.f32.mrf.mxu0
      %v3779 = vadd.f32 %v3559, %v3778
      %3780 = vmatmul.bf16.gmra.mxu0 %v3718
      %v3781 = vpop.f32.mrf.mxu0
      %v3782 = vadd.f32 %v3562, %v3781
      %v3783 = vpop.f32.mrf.mxu0
      %v3784 = vadd.f32 %v3564, %v3783
      %3785 = vmatmul.bf16.gmra.mxu0 %v3721
      %v3786 = vpop.f32.mrf.mxu0
      %v3787 = vadd.f32 %v3567, %v3786
      %v3788 = vpop.f32.mrf.mxu0
      %v3789 = vadd.f32 %v3569, %v3788
      %3790 = vmatmul.bf16.gmra.mxu0 %v3724
      %v3791 = vpop.f32.mrf.mxu0
      %v3792 = vadd.f32 %v3572, %v3791
      %v3793 = vpop.f32.mrf.mxu0
      %v3794 = vadd.f32 %v3574, %v3793
      %3795 = vmatmul.bf16.gmra.mxu0 %v3727
      %v3796 = vpop.f32.mrf.mxu0
      %v3797 = vadd.f32 %v3577, %v3796
      %v3798 = vpop.f32.mrf.mxu0
      %v3799 = vadd.f32 %v3579, %v3798
      %3800 = vmatmul.bf16.gmra.mxu0 %v3730
      %v3801 = vpop.f32.mrf.mxu0
      %v3802 = vadd.f32 %v3582, %v3801
      %v3803 = vpop.f32.mrf.mxu0
      %v3804 = vadd.f32 %v3584, %v3803
      %3805 = vmatmul.bf16.gmra.mxu0 %v3733
      %v3806 = vpop.f32.mrf.mxu0
      %v3807 = vadd.f32 %v3587, %v3806
      %v3808 = vpop.f32.mrf.mxu0
      %v3809 = vadd.f32 %v3589, %v3808
      %3810 = vmatmul.bf16.gmra.mxu0 %v3736
      %v3811 = vpop.f32.mrf.mxu0
      %v3812 = vadd.f32 %v3592, %v3811
      %v3813 = vpop.f32.mrf.mxu0
      %v3814 = vadd.f32 %v3594, %v3813
      %3815 = vmatmul.bf16.gmra.mxu0 %v3739
      %v3816 = vpop.f32.mrf.mxu0
      %v3817 = vadd.f32 %v3597, %v3816
      %v3818 = vpop.f32.mrf.mxu0
      %v3819 = vadd.f32 %v3599, %v3818
      %3820 = vmatmul.bf16.gmra.mxu0 %v3742
      %v3821 = vpop.f32.mrf.mxu0
      %v3822 = vadd.f32 %v3602, %v3821
      %v3823 = vpop.f32.mrf.mxu0
      %v3824 = vadd.f32 %v3604, %v3823
      %3825 = vmatmul.bf16.gmra.mxu0 %v3745
      %v3826 = vpop.f32.mrf.mxu0
      %v3827 = vadd.f32 %v3607, %v3826
      %v3828 = vpop.f32.mrf.mxu0
      %v3829 = vadd.f32 %v3609, %v3828
      %3830 = vmatmul.bf16.gmra.mxu0 %v3748
      %v3831 = vpop.f32.mrf.mxu0
      %v3832 = vadd.f32 %v3612, %v3831
      %v3833 = vpop.f32.mrf.mxu0
      %v3834 = vadd.f32 %v3614, %v3833
      %3835 = vmatmul.bf16.gmra.mxu0 %v3751
      %v3836 = vpop.f32.mrf.mxu0
      %v3837 = vadd.f32 %v3617, %v3836
      %v3838 = vpop.f32.mrf.mxu0
      %v3839 = vadd.f32 %v3619, %v3838
      %3840 = vmatmul.bf16.gmra.mxu0 %v3754
      %v3841 = vpop.f32.mrf.mxu0
      %v3842 = vadd.f32 %v3622, %v3841
      %v3843 = vpop.f32.mrf.mxu0
      %v3844 = vadd.f32 %v3624, %v3843
      %3845 = vmatmul.bf16.gmra.mxu0 %v3757
      %v3846 = vpop.f32.mrf.mxu0
      %v3847 = vadd.f32 %v3627, %v3846
      %v3848 = vpop.f32.mrf.mxu0
      %v3849 = vadd.f32 %v3629, %v3848
      %3850 = vdwg.mxu0
      %v3851 = vld [vmem:[#allocation3 + $0x2] sm:$0xff]
      %v3852 = vld [vmem:[#allocation3 + $0xa] sm:$0xff]
      %v3853 = vld [vmem:[#allocation3 + $0x1a] sm:$0xff]
      %v3854 = vld [vmem:[#allocation3 + $0x22] sm:$0xff]
      %v3855 = vld [vmem:[#allocation3 + $0x32] sm:$0xff]
      %v3856 = vld [vmem:[#allocation3 + $0x3a] sm:$0xff]
      %v3857 = vld [vmem:[#allocation3 + $0x4a] sm:$0xff]
      %v3858 = vld [vmem:[#allocation3 + $0x52] sm:$0xff]
      %v3859 = vld [vmem:[#allocation3 + $0x62] sm:$0xff]
      %v3860 = vld [vmem:[#allocation3 + $0x6a] sm:$0xff]
      %v3861 = vld [vmem:[#allocation3 + $0x7a] sm:$0xff]
      %v3862 = vld [vmem:[#allocation3 + $0x82] sm:$0xff]
      %v3863 = vld [vmem:[#allocation3 + $0x92] sm:$0xff]
      %v3864 = vld [vmem:[#allocation3 + $0x9a] sm:$0xff]
      %v3865 = vld [vmem:[#allocation3 + $0xaa] sm:$0xff]
      %v3866 = vld [vmem:[#allocation3 + $0xb2] sm:$0xff]
      %v3867 = vld [vmem:[#allocation3 + $0xc2] sm:$0xff]
      %v3868 = vld [vmem:[#allocation3 + $0xca] sm:$0xff]
      %v3869 = vld [vmem:[#allocation3 + $0xda] sm:$0xff]
      %v3870 = vld [vmem:[#allocation3 + $0xe2] sm:$0xff]
      %v3871 = vld [vmem:[#allocation3 + $0xf2] sm:$0xff]
      %v3872 = vld [vmem:[#allocation3 + $0xfa] sm:$0xff]
      %v3873 = vld [vmem:[#allocation3 + $0x10a] sm:$0xff]
      %v3874 = vld [vmem:[#allocation3 + $0x112] sm:$0xff]
      %v3875 = vld [vmem:[#allocation3 + $0x122] sm:$0xff]
      %v3876 = vld [vmem:[#allocation3 + $0x12a] sm:$0xff]
      %v3877 = vld [vmem:[#allocation3 + $0x13a] sm:$0xff]
      %v3878 = vld [vmem:[#allocation3 + $0x142] sm:$0xff]
      %v3879 = vld [vmem:[#allocation3 + $0x152] sm:$0xff]
      %v3880 = vld [vmem:[#allocation3 + $0x15a] sm:$0xff]
      %v3881 = vld [vmem:[#allocation3 + $0x16a] sm:$0xff]
      %v3882 = vld [vmem:[#allocation3 + $0x172] sm:$0xff]
      %v3883 = vpack.c.bf16 %v3851, %v3851
      %v3884 = vpack.c.bf16 %v3852, %v3852
      %v3885 = vpack.c.bf16 %v3853, %v3853
      %v3886 = vpack.c.bf16 %v3854, %v3854
      %v3887 = vpack.c.bf16 %v3855, %v3855
      %v3888 = vpack.c.bf16 %v3856, %v3856
      %v3889 = vpack.c.bf16 %v3857, %v3857
      %v3890 = vpack.c.bf16 %v3858, %v3858
      %v3891 = vpack.c.bf16 %v3859, %v3859
      %v3892 = vpack.c.bf16 %v3860, %v3860
      %v3893 = vpack.c.bf16 %v3861, %v3861
      %v3894 = vpack.c.bf16 %v3862, %v3862
      %v3895 = vpack.c.bf16 %v3863, %v3863
      %v3896 = vpack.c.bf16 %v3864, %v3864
      %v3897 = vpack.c.bf16 %v3865, %v3865
      %v3898 = vpack.c.bf16 %v3866, %v3866
      %v3899 = vpack.c.bf16 %v3867, %v3867
      %v3900 = vpack.c.bf16 %v3868, %v3868
      %v3901 = vpack.c.bf16 %v3869, %v3869
      %v3902 = vpack.c.bf16 %v3870, %v3870
      %v3903 = vpack.c.bf16 %v3871, %v3871
      %v3904 = vpack.c.bf16 %v3872, %v3872
      %v3905 = vpack.c.bf16 %v3873, %v3873
      %v3906 = vpack.c.bf16 %v3874, %v3874
      %v3907 = vpack.c.bf16 %v3875, %v3875
      %v3908 = vpack.c.bf16 %v3876, %v3876
      %v3909 = vpack.c.bf16 %v3877, %v3877
      %v3910 = vpack.c.bf16 %v3878, %v3878
      %v3911 = vpack.c.bf16 %v3879, %v3879
      %v3912 = vpack.c.bf16 %v3880, %v3880
      %v3913 = vpack.c.bf16 %v3881, %v3881
      %v3914 = vpack.c.bf16 %v3882, %v3882
      %s3915 = scalar_lea.vmem %s3, 4
      %v3916 = vld [vmem:[%s3915] sm:$0x3]
      %v3949 = vunpack.c.l.b16 %v3883
      %v3950 = vunpack.c.l.b16 %v3884
      %v3951 = vunpack.c.l.b16 %v3885
      %v3952 = vunpack.c.l.b16 %v3886
      %v3953 = vunpack.c.l.b16 %v3887
      %v3954 = vunpack.c.l.b16 %v3888
      %v3955 = vunpack.c.l.b16 %v3889
      %v3956 = vunpack.c.l.b16 %v3890
      %v3957 = vunpack.c.l.b16 %v3891
      %v3958 = vunpack.c.l.b16 %v3892
      %v3959 = vunpack.c.l.b16 %v3893
      %v3960 = vunpack.c.l.b16 %v3894
      %v3961 = vunpack.c.l.b16 %v3895
      %v3962 = vunpack.c.l.b16 %v3896
      %v3963 = vunpack.c.l.b16 %v3897
      %v3964 = vunpack.c.l.b16 %v3898
      %v3965 = vunpack.c.l.b16 %v3899
      %v3966 = vunpack.c.l.b16 %v3900
      %v3967 = vunpack.c.l.b16 %v3901
      %v3968 = vunpack.c.l.b16 %v3902
      %v3969 = vunpack.c.l.b16 %v3903
      %v3970 = vunpack.c.l.b16 %v3904
      %v3971 = vunpack.c.l.b16 %v3905
      %v3972 = vunpack.c.l.b16 %v3906
      %v3973 = vunpack.c.l.b16 %v3907
      %v3974 = vunpack.c.l.b16 %v3908
      %v3975 = vunpack.c.l.b16 %v3909
      %v3976 = vunpack.c.l.b16 %v3910
      %v3977 = vunpack.c.l.b16 %v3911
      %v3978 = vunpack.c.l.b16 %v3912
      %v3979 = vunpack.c.l.b16 %v3913
      %v3980 = vunpack.c.l.b16 %v3914
      %v3981 = vpack.c.b16 %v3950, %v3949
      %v3982 = vpack.c.b16 %v3952, %v3951
      %v3983 = vpack.c.b16 %v3954, %v3953
      %v3984 = vpack.c.b16 %v3956, %v3955
      %v3985 = vpack.c.b16 %v3958, %v3957
      %v3986 = vpack.c.b16 %v3960, %v3959
      %v3987 = vpack.c.b16 %v3962, %v3961
      %v3988 = vpack.c.b16 %v3964, %v3963
      %v3989 = vpack.c.b16 %v3966, %v3965
      %v3990 = vpack.c.b16 %v3968, %v3967
      %v3991 = vpack.c.b16 %v3970, %v3969
      %v3992 = vpack.c.b16 %v3972, %v3971
      %v3993 = vpack.c.b16 %v3974, %v3973
      %v3994 = vpack.c.b16 %v3976, %v3975
      %v3995 = vpack.c.b16 %v3978, %v3977
      %v3996 = vpack.c.b16 %v3980, %v3979
      %v3998 = vsel %vm226, %v3981, 0
      %v4001 = vsel %vm226, %v3982, 0
      %v4004 = vsel %vm226, %v3983, 0
      %v4007 = vsel %vm226, %v3984, 0
      %v4010 = vsel %vm226, %v3985, 0
      %v4013 = vsel %vm226, %v3986, 0
      %v4016 = vsel %vm226, %v3987, 0
      %v4019 = vsel %vm226, %v3988, 0
      %v4022 = vsel %vm226, %v3989, 0
      %v4025 = vsel %vm226, %v3990, 0
      %v4028 = vsel %vm226, %v3991, 0
      %v4031 = vsel %vm226, %v3992, 0
      %v4034 = vsel %vm226, %v3993, 0
      %v4037 = vsel %vm226, %v3994, 0
      %v4040 = vsel %vm226, %v3995, 0
      %v4043 = vsel %vm226, %v3996, 0
      %v4046 = vsel %vm596, %v3916, 0
      %4048 = vmatpush.bf16.msra.mxu0 0
      %4049 = vmatpush.bf16.msra.mxu0 0
      %4050 = vmatpush.bf16.msra.mxu0 0
      %4051 = vmatpush.bf16.msra.mxu0 0
      %4052 = vmatpush.bf16.msra.mxu0 0
      %4053 = vmatpush.bf16.msra.mxu0 0
      %4054 = vmatpush.bf16.msra.mxu0 0
      %4055 = vmatpush.bf16.msra.mxu0 %v4046
      %4056 = vmatmul.bf16.gmra.mxu0 %v3998
      %v4057 = vpop.f32.mrf.mxu0
      %v4058 = vadd.f32 0.0, %v4057
      %v4059 = vpop.f32.mrf.mxu0
      %v4060 = vadd.f32 0.0, %v4059
      %4061 = vmatmul.bf16.gmra.mxu0 %v4001
      %v4062 = vpop.f32.mrf.mxu0
      %v4063 = vadd.f32 0.0, %v4062
      %v4064 = vpop.f32.mrf.mxu0
      %v4065 = vadd.f32 0.0, %v4064
      %4066 = vmatmul.bf16.gmra.mxu0 %v4004
      %v4067 = vpop.f32.mrf.mxu0
      %v4068 = vadd.f32 0.0, %v4067
      %v4069 = vpop.f32.mrf.mxu0
      %v4070 = vadd.f32 0.0, %v4069
      %4071 = vmatmul.bf16.gmra.mxu0 %v4007
      %v4072 = vpop.f32.mrf.mxu0
      %v4073 = vadd.f32 0.0, %v4072
      %v4074 = vpop.f32.mrf.mxu0
      %v4075 = vadd.f32 0.0, %v4074
      %4076 = vmatmul.bf16.gmra.mxu0 %v4010
      %v4077 = vpop.f32.mrf.mxu0
      %v4078 = vadd.f32 0.0, %v4077
      %v4079 = vpop.f32.mrf.mxu0
      %v4080 = vadd.f32 0.0, %v4079
      %4081 = vmatmul.bf16.gmra.mxu0 %v4013
      %v4082 = vpop.f32.mrf.mxu0
      %v4083 = vadd.f32 0.0, %v4082
      %v4084 = vpop.f32.mrf.mxu0
      %v4085 = vadd.f32 0.0, %v4084
      %4086 = vmatmul.bf16.gmra.mxu0 %v4016
      %v4087 = vpop.f32.mrf.mxu0
      %v4088 = vadd.f32 0.0, %v4087
      %v4089 = vpop.f32.mrf.mxu0
      %v4090 = vadd.f32 0.0, %v4089
      %4091 = vmatmul.bf16.gmra.mxu0 %v4019
      %v4092 = vpop.f32.mrf.mxu0
      %v4093 = vadd.f32 0.0, %v4092
      %v4094 = vpop.f32.mrf.mxu0
      %v4095 = vadd.f32 0.0, %v4094
      %4096 = vmatmul.bf16.gmra.mxu0 %v4022
      %v4097 = vpop.f32.mrf.mxu0
      %v4098 = vadd.f32 0.0, %v4097
      %v4099 = vpop.f32.mrf.mxu0
      %v4100 = vadd.f32 0.0, %v4099
      %4101 = vmatmul.bf16.gmra.mxu0 %v4025
      %v4102 = vpop.f32.mrf.mxu0
      %v4103 = vadd.f32 0.0, %v4102
      %v4104 = vpop.f32.mrf.mxu0
      %v4105 = vadd.f32 0.0, %v4104
      %4106 = vmatmul.bf16.gmra.mxu0 %v4028
      %v4107 = vpop.f32.mrf.mxu0
      %v4108 = vadd.f32 0.0, %v4107
      %v4109 = vpop.f32.mrf.mxu0
      %v4110 = vadd.f32 0.0, %v4109
      %4111 = vmatmul.bf16.gmra.mxu0 %v4031
      %v4112 = vpop.f32.mrf.mxu0
      %v4113 = vadd.f32 0.0, %v4112
      %v4114 = vpop.f32.mrf.mxu0
      %v4115 = vadd.f32 0.0, %v4114
      %4116 = vmatmul.bf16.gmra.mxu0 %v4034
      %v4117 = vpop.f32.mrf.mxu0
      %v4118 = vadd.f32 0.0, %v4117
      %v4119 = vpop.f32.mrf.mxu0
      %v4120 = vadd.f32 0.0, %v4119
      %4121 = vmatmul.bf16.gmra.mxu0 %v4037
      %v4122 = vpop.f32.mrf.mxu0
      %v4123 = vadd.f32 0.0, %v4122
      %v4124 = vpop.f32.mrf.mxu0
      %v4125 = vadd.f32 0.0, %v4124
      %4126 = vmatmul.bf16.gmra.mxu0 %v4040
      %v4127 = vpop.f32.mrf.mxu0
      %v4128 = vadd.f32 0.0, %v4127
      %v4129 = vpop.f32.mrf.mxu0
      %v4130 = vadd.f32 0.0, %v4129
      %4131 = vmatmul.bf16.gmra.mxu0 %v4043
      %v4132 = vpop.f32.mrf.mxu0
      %v4133 = vadd.f32 0.0, %v4132
      %v4134 = vpop.f32.mrf.mxu0
      %v4135 = vadd.f32 0.0, %v4134
      %4136 = vdwg.mxu0
      %v4137 = vadd.f32 %v3772, %v4058
      %v4138 = vadd.f32 %v3774, %v4060
      %v4139 = vadd.f32 %v3777, %v4063
      %v4140 = vadd.f32 %v3779, %v4065
      %v4141 = vadd.f32 %v3782, %v4068
      %v4142 = vadd.f32 %v3784, %v4070
      %v4143 = vadd.f32 %v3787, %v4073
      %v4144 = vadd.f32 %v3789, %v4075
      %v4145 = vadd.f32 %v3792, %v4078
      %v4146 = vadd.f32 %v3794, %v4080
      %v4147 = vadd.f32 %v3797, %v4083
      %v4148 = vadd.f32 %v3799, %v4085
      %v4149 = vadd.f32 %v3802, %v4088
      %v4150 = vadd.f32 %v3804, %v4090
      %v4151 = vadd.f32 %v3807, %v4093
      %v4152 = vadd.f32 %v3809, %v4095
      %v4153 = vadd.f32 %v3812, %v4098
      %v4154 = vadd.f32 %v3814, %v4100
      %v4155 = vadd.f32 %v3817, %v4103
      %v4156 = vadd.f32 %v3819, %v4105
      %v4157 = vadd.f32 %v3822, %v4108
      %v4158 = vadd.f32 %v3824, %v4110
      %v4159 = vadd.f32 %v3827, %v4113
      %v4160 = vadd.f32 %v3829, %v4115
      %v4161 = vadd.f32 %v3832, %v4118
      %v4162 = vadd.f32 %v3834, %v4120
      %v4163 = vadd.f32 %v3837, %v4123
      %v4164 = vadd.f32 %v3839, %v4125
      %v4165 = vadd.f32 %v3842, %v4128
      %v4166 = vadd.f32 %v3844, %v4130
      %v4167 = vadd.f32 %v3847, %v4133
      %v4168 = vadd.f32 %v3849, %v4135
      %v4169 = vld [vmem:[%s3247] sm:$0xff]
      %v4170 = vld [vmem:[%s3247 + $0x8] sm:$0xff]
      %v4171 = vld [vmem:[%s3247 + $0x18] sm:$0xff]
      %v4172 = vld [vmem:[%s3247 + $0x20] sm:$0xff]
      %v4173 = vld [vmem:[%s3247 + $0x30] sm:$0xff]
      %v4174 = vld [vmem:[%s3247 + $0x38] sm:$0xff]
      %v4175 = vld [vmem:[%s3247 + $0x48] sm:$0xff]
      %v4176 = vld [vmem:[%s3247 + $0x50] sm:$0xff]
      %v4177 = vld [vmem:[%s3247 + $0x60] sm:$0xff]
      %v4178 = vld [vmem:[%s3247 + $0x68] sm:$0xff]
      %v4179 = vld [vmem:[%s3247 + $0x78] sm:$0xff]
      %v4180 = vld [vmem:[%s3247 + $0x80] sm:$0xff]
      %v4181 = vld [vmem:[%s3247 + $0x90] sm:$0xff]
      %v4182 = vld [vmem:[%s3247 + $0x98] sm:$0xff]
      %v4183 = vld [vmem:[%s3247 + $0xa8] sm:$0xff]
      %v4184 = vld [vmem:[%s3247 + $0xb0] sm:$0xff]
      %v4185 = vld [vmem:[%s3247 + $0xc0] sm:$0xff]
      %v4186 = vld [vmem:[%s3247 + $0xc8] sm:$0xff]
      %v4187 = vld [vmem:[%s3247 + $0xd8] sm:$0xff]
      %v4188 = vld [vmem:[%s3247 + $0xe0] sm:$0xff]
      %v4189 = vld [vmem:[%s3247 + $0xf0] sm:$0xff]
      %v4190 = vld [vmem:[%s3247 + $0xf8] sm:$0xff]
      %v4191 = vld [vmem:[%s3247 + $0x108] sm:$0xff]
      %v4192 = vld [vmem:[%s3247 + $0x110] sm:$0xff]
      %v4193 = vld [vmem:[%s3247 + $0x120] sm:$0xff]
      %v4194 = vld [vmem:[%s3247 + $0x128] sm:$0xff]
      %v4195 = vld [vmem:[%s3247 + $0x138] sm:$0xff]
      %v4196 = vld [vmem:[%s3247 + $0x140] sm:$0xff]
      %v4197 = vld [vmem:[%s3247 + $0x150] sm:$0xff]
      %v4198 = vld [vmem:[%s3247 + $0x158] sm:$0xff]
      %v4199 = vld [vmem:[%s3247 + $0x168] sm:$0xff]
      %v4200 = vld [vmem:[%s3247 + $0x170] sm:$0xff]
      %v4201 = vpack.c.bf16 %v4169, %v4169
      %v4202 = vpack.c.bf16 %v4170, %v4170
      %v4203 = vpack.c.bf16 %v4171, %v4171
      %v4204 = vpack.c.bf16 %v4172, %v4172
      %v4205 = vpack.c.bf16 %v4173, %v4173
      %v4206 = vpack.c.bf16 %v4174, %v4174
      %v4207 = vpack.c.bf16 %v4175, %v4175
      %v4208 = vpack.c.bf16 %v4176, %v4176
      %v4209 = vpack.c.bf16 %v4177, %v4177
      %v4210 = vpack.c.bf16 %v4178, %v4178
      %v4211 = vpack.c.bf16 %v4179, %v4179
      %v4212 = vpack.c.bf16 %v4180, %v4180
      %v4213 = vpack.c.bf16 %v4181, %v4181
      %v4214 = vpack.c.bf16 %v4182, %v4182
      %v4215 = vpack.c.bf16 %v4183, %v4183
      %v4216 = vpack.c.bf16 %v4184, %v4184
      %v4217 = vpack.c.bf16 %v4185, %v4185
      %v4218 = vpack.c.bf16 %v4186, %v4186
      %v4219 = vpack.c.bf16 %v4187, %v4187
      %v4220 = vpack.c.bf16 %v4188, %v4188
      %v4221 = vpack.c.bf16 %v4189, %v4189
      %v4222 = vpack.c.bf16 %v4190, %v4190
      %v4223 = vpack.c.bf16 %v4191, %v4191
      %v4224 = vpack.c.bf16 %v4192, %v4192
      %v4225 = vpack.c.bf16 %v4193, %v4193
      %v4226 = vpack.c.bf16 %v4194, %v4194
      %v4227 = vpack.c.bf16 %v4195, %v4195
      %v4228 = vpack.c.bf16 %v4196, %v4196
      %v4229 = vpack.c.bf16 %v4197, %v4197
      %v4230 = vpack.c.bf16 %v4198, %v4198
      %v4231 = vpack.c.bf16 %v4199, %v4199
      %v4232 = vpack.c.bf16 %v4200, %v4200
      %s4233 = scalar_lea.vmem %s3, 6
      %v4234 = vld [vmem:[%s4233] sm:$0x3]
      %v4267 = vunpack.c.l.b16 %v4201
      %v4268 = vunpack.c.l.b16 %v4202
      %v4269 = vunpack.c.l.b16 %v4203
      %v4270 = vunpack.c.l.b16 %v4204
      %v4271 = vunpack.c.l.b16 %v4205
      %v4272 = vunpack.c.l.b16 %v4206
      %v4273 = vunpack.c.l.b16 %v4207
      %v4274 = vunpack.c.l.b16 %v4208
      %v4275 = vunpack.c.l.b16 %v4209
      %v4276 = vunpack.c.l.b16 %v4210
      %v4277 = vunpack.c.l.b16 %v4211
      %v4278 = vunpack.c.l.b16 %v4212
      %v4279 = vunpack.c.l.b16 %v4213
      %v4280 = vunpack.c.l.b16 %v4214
      %v4281 = vunpack.c.l.b16 %v4215
      %v4282 = vunpack.c.l.b16 %v4216
      %v4283 = vunpack.c.l.b16 %v4217
      %v4284 = vunpack.c.l.b16 %v4218
      %v4285 = vunpack.c.l.b16 %v4219
      %v4286 = vunpack.c.l.b16 %v4220
      %v4287 = vunpack.c.l.b16 %v4221
      %v4288 = vunpack.c.l.b16 %v4222
      %v4289 = vunpack.c.l.b16 %v4223
      %v4290 = vunpack.c.l.b16 %v4224
      %v4291 = vunpack.c.l.b16 %v4225
      %v4292 = vunpack.c.l.b16 %v4226
      %v4293 = vunpack.c.l.b16 %v4227
      %v4294 = vunpack.c.l.b16 %v4228
      %v4295 = vunpack.c.l.b16 %v4229
      %v4296 = vunpack.c.l.b16 %v4230
      %v4297 = vunpack.c.l.b16 %v4231
      %v4298 = vunpack.c.l.b16 %v4232
      %v4299 = vpack.c.b16 %v4268, %v4267
      %v4300 = vpack.c.b16 %v4270, %v4269
      %v4301 = vpack.c.b16 %v4272, %v4271
      %v4302 = vpack.c.b16 %v4274, %v4273
      %v4303 = vpack.c.b16 %v4276, %v4275
      %v4304 = vpack.c.b16 %v4278, %v4277
      %v4305 = vpack.c.b16 %v4280, %v4279
      %v4306 = vpack.c.b16 %v4282, %v4281
      %v4307 = vpack.c.b16 %v4284, %v4283
      %v4308 = vpack.c.b16 %v4286, %v4285
      %v4309 = vpack.c.b16 %v4288, %v4287
      %v4310 = vpack.c.b16 %v4290, %v4289
      %v4311 = vpack.c.b16 %v4292, %v4291
      %v4312 = vpack.c.b16 %v4294, %v4293
      %v4313 = vpack.c.b16 %v4296, %v4295
      %v4314 = vpack.c.b16 %v4298, %v4297
      %v4316 = vsel %vm226, %v4299, 0
      %v4319 = vsel %vm226, %v4300, 0
      %v4322 = vsel %vm226, %v4301, 0
      %v4325 = vsel %vm226, %v4302, 0
      %v4328 = vsel %vm226, %v4303, 0
      %v4331 = vsel %vm226, %v4304, 0
      %v4334 = vsel %vm226, %v4305, 0
      %v4337 = vsel %vm226, %v4306, 0
      %v4340 = vsel %vm226, %v4307, 0
      %v4343 = vsel %vm226, %v4308, 0
      %v4346 = vsel %vm226, %v4309, 0
      %v4349 = vsel %vm226, %v4310, 0
      %v4352 = vsel %vm226, %v4311, 0
      %v4355 = vsel %vm226, %v4312, 0
      %v4358 = vsel %vm226, %v4313, 0
      %v4361 = vsel %vm226, %v4314, 0
      %v4364 = vsel %vm596, %v4234, 0
      %4366 = vmatpush.bf16.msra.mxu0 0
      %4367 = vmatpush.bf16.msra.mxu0 0
      %4368 = vmatpush.bf16.msra.mxu0 0
      %4369 = vmatpush.bf16.msra.mxu0 0
      %4370 = vmatpush.bf16.msra.mxu0 0
      %4371 = vmatpush.bf16.msra.mxu0 0
      %4372 = vmatpush.bf16.msra.mxu0 0
      %4373 = vmatpush.bf16.msra.mxu0 %v4364
      %4374 = vmatmul.bf16.gmra.mxu0 %v4316
      %v4375 = vpop.f32.mrf.mxu0
      %v4376 = vadd.f32 0.0, %v4375
      %v4377 = vpop.f32.mrf.mxu0
      %v4378 = vadd.f32 0.0, %v4377
      %4379 = vmatmul.bf16.gmra.mxu0 %v4319
      %v4380 = vpop.f32.mrf.mxu0
      %v4381 = vadd.f32 0.0, %v4380
      %v4382 = vpop.f32.mrf.mxu0
      %v4383 = vadd.f32 0.0, %v4382
      %4384 = vmatmul.bf16.gmra.mxu0 %v4322
      %v4385 = vpop.f32.mrf.mxu0
      %v4386 = vadd.f32 0.0, %v4385
      %v4387 = vpop.f32.mrf.mxu0
      %v4388 = vadd.f32 0.0, %v4387
      %4389 = vmatmul.bf16.gmra.mxu0 %v4325
      %v4390 = vpop.f32.mrf.mxu0
      %v4391 = vadd.f32 0.0, %v4390
      %v4392 = vpop.f32.mrf.mxu0
      %v4393 = vadd.f32 0.0, %v4392
      %4394 = vmatmul.bf16.gmra.mxu0 %v4328
      %v4395 = vpop.f32.mrf.mxu0
      %v4396 = vadd.f32 0.0, %v4395
      %v4397 = vpop.f32.mrf.mxu0
      %v4398 = vadd.f32 0.0, %v4397
      %4399 = vmatmul.bf16.gmra.mxu0 %v4331
      %v4400 = vpop.f32.mrf.mxu0
      %v4401 = vadd.f32 0.0, %v4400
      %v4402 = vpop.f32.mrf.mxu0
      %v4403 = vadd.f32 0.0, %v4402
      %4404 = vmatmul.bf16.gmra.mxu0 %v4334
      %v4405 = vpop.f32.mrf.mxu0
      %v4406 = vadd.f32 0.0, %v4405
      %v4407 = vpop.f32.mrf.mxu0
      %v4408 = vadd.f32 0.0, %v4407
      %4409 = vmatmul.bf16.gmra.mxu0 %v4337
      %v4410 = vpop.f32.mrf.mxu0
      %v4411 = vadd.f32 0.0, %v4410
      %v4412 = vpop.f32.mrf.mxu0
      %v4413 = vadd.f32 0.0, %v4412
      %4414 = vmatmul.bf16.gmra.mxu0 %v4340
      %v4415 = vpop.f32.mrf.mxu0
      %v4416 = vadd.f32 0.0, %v4415
      %v4417 = vpop.f32.mrf.mxu0
      %v4418 = vadd.f32 0.0, %v4417
      %4419 = vmatmul.bf16.gmra.mxu0 %v4343
      %v4420 = vpop.f32.mrf.mxu0
      %v4421 = vadd.f32 0.0, %v4420
      %v4422 = vpop.f32.mrf.mxu0
      %v4423 = vadd.f32 0.0, %v4422
      %4424 = vmatmul.bf16.gmra.mxu0 %v4346
      %v4425 = vpop.f32.mrf.mxu0
      %v4426 = vadd.f32 0.0, %v4425
      %v4427 = vpop.f32.mrf.mxu0
      %v4428 = vadd.f32 0.0, %v4427
      %4429 = vmatmul.bf16.gmra.mxu0 %v4349
      %v4430 = vpop.f32.mrf.mxu0
      %v4431 = vadd.f32 0.0, %v4430
      %v4432 = vpop.f32.mrf.mxu0
      %v4433 = vadd.f32 0.0, %v4432
      %4434 = vmatmul.bf16.gmra.mxu0 %v4352
      %v4435 = vpop.f32.mrf.mxu0
      %v4436 = vadd.f32 0.0, %v4435
      %v4437 = vpop.f32.mrf.mxu0
      %v4438 = vadd.f32 0.0, %v4437
      %4439 = vmatmul.bf16.gmra.mxu0 %v4355
      %v4440 = vpop.f32.mrf.mxu0
      %v4441 = vadd.f32 0.0, %v4440
      %v4442 = vpop.f32.mrf.mxu0
      %v4443 = vadd.f32 0.0, %v4442
      %4444 = vmatmul.bf16.gmra.mxu0 %v4358
      %v4445 = vpop.f32.mrf.mxu0
      %v4446 = vadd.f32 0.0, %v4445
      %v4447 = vpop.f32.mrf.mxu0
      %v4448 = vadd.f32 0.0, %v4447
      %4449 = vmatmul.bf16.gmra.mxu0 %v4361
      %v4450 = vpop.f32.mrf.mxu0
      %v4451 = vadd.f32 0.0, %v4450
      %v4452 = vpop.f32.mrf.mxu0
      %v4453 = vadd.f32 0.0, %v4452
      %4454 = vdwg.mxu0
      %v4455 = vadd.f32 %v4137, %v4376
      %v4456 = vadd.f32 %v4138, %v4378
      %v4457 = vadd.f32 %v4139, %v4381
      %v4458 = vadd.f32 %v4140, %v4383
      %v4459 = vadd.f32 %v4141, %v4386
      %v4460 = vadd.f32 %v4142, %v4388
      %v4461 = vadd.f32 %v4143, %v4391
      %v4462 = vadd.f32 %v4144, %v4393
      %v4463 = vadd.f32 %v4145, %v4396
      %v4464 = vadd.f32 %v4146, %v4398
      %v4465 = vadd.f32 %v4147, %v4401
      %v4466 = vadd.f32 %v4148, %v4403
      %v4467 = vadd.f32 %v4149, %v4406
      %v4468 = vadd.f32 %v4150, %v4408
      %v4469 = vadd.f32 %v4151, %v4411
      %v4470 = vadd.f32 %v4152, %v4413
      %v4471 = vadd.f32 %v4153, %v4416
      %v4472 = vadd.f32 %v4154, %v4418
      %v4473 = vadd.f32 %v4155, %v4421
      %v4474 = vadd.f32 %v4156, %v4423
      %v4475 = vadd.f32 %v4157, %v4426
      %v4476 = vadd.f32 %v4158, %v4428
      %v4477 = vadd.f32 %v4159, %v4431
      %v4478 = vadd.f32 %v4160, %v4433
      %v4479 = vadd.f32 %v4161, %v4436
      %v4480 = vadd.f32 %v4162, %v4438
      %v4481 = vadd.f32 %v4163, %v4441
      %v4482 = vadd.f32 %v4164, %v4443
      %v4483 = vadd.f32 %v4165, %v4446
      %v4484 = vadd.f32 %v4166, %v4448
      %v4485 = vadd.f32 %v4167, %v4451
      %v4486 = vadd.f32 %v4168, %v4453
      %v4487 = vld [vmem:[%s3247 + $0x1] sm:$0xff]
      %v4488 = vld [vmem:[%s3247 + $0x9] sm:$0xff]
      %v4489 = vld [vmem:[%s3247 + $0x19] sm:$0xff]
      %v4490 = vld [vmem:[%s3247 + $0x21] sm:$0xff]
      %v4491 = vld [vmem:[%s3247 + $0x31] sm:$0xff]
      %v4492 = vld [vmem:[%s3247 + $0x39] sm:$0xff]
      %v4493 = vld [vmem:[%s3247 + $0x49] sm:$0xff]
      %v4494 = vld [vmem:[%s3247 + $0x51] sm:$0xff]
      %v4495 = vld [vmem:[%s3247 + $0x61] sm:$0xff]
      %v4496 = vld [vmem:[%s3247 + $0x69] sm:$0xff]
      %v4497 = vld [vmem:[%s3247 + $0x79] sm:$0xff]
      %v4498 = vld [vmem:[%s3247 + $0x81] sm:$0xff]
      %v4499 = vld [vmem:[%s3247 + $0x91] sm:$0xff]
      %v4500 = vld [vmem:[%s3247 + $0x99] sm:$0xff]
      %v4501 = vld [vmem:[%s3247 + $0xa9] sm:$0xff]
      %v4502 = vld [vmem:[%s3247 + $0xb1] sm:$0xff]
      %v4503 = vld [vmem:[%s3247 + $0xc1] sm:$0xff]
      %v4504 = vld [vmem:[%s3247 + $0xc9] sm:$0xff]
      %v4505 = vld [vmem:[%s3247 + $0xd9] sm:$0xff]
      %v4506 = vld [vmem:[%s3247 + $0xe1] sm:$0xff]
      %v4507 = vld [vmem:[%s3247 + $0xf1] sm:$0xff]
      %v4508 = vld [vmem:[%s3247 + $0xf9] sm:$0xff]
      %v4509 = vld [vmem:[%s3247 + $0x109] sm:$0xff]
      %v4510 = vld [vmem:[%s3247 + $0x111] sm:$0xff]
      %v4511 = vld [vmem:[%s3247 + $0x121] sm:$0xff]
      %v4512 = vld [vmem:[%s3247 + $0x129] sm:$0xff]
      %v4513 = vld [vmem:[%s3247 + $0x139] sm:$0xff]
      %v4514 = vld [vmem:[%s3247 + $0x141] sm:$0xff]
      %v4515 = vld [vmem:[%s3247 + $0x151] sm:$0xff]
      %v4516 = vld [vmem:[%s3247 + $0x159] sm:$0xff]
      %v4517 = vld [vmem:[%s3247 + $0x169] sm:$0xff]
      %v4518 = vld [vmem:[%s3247 + $0x171] sm:$0xff]
      %v4519 = vpack.c.bf16 %v4487, %v4487
      %v4520 = vpack.c.bf16 %v4488, %v4488
      %v4521 = vpack.c.bf16 %v4489, %v4489
      %v4522 = vpack.c.bf16 %v4490, %v4490
      %v4523 = vpack.c.bf16 %v4491, %v4491
      %v4524 = vpack.c.bf16 %v4492, %v4492
      %v4525 = vpack.c.bf16 %v4493, %v4493
      %v4526 = vpack.c.bf16 %v4494, %v4494
      %v4527 = vpack.c.bf16 %v4495, %v4495
      %v4528 = vpack.c.bf16 %v4496, %v4496
      %v4529 = vpack.c.bf16 %v4497, %v4497
      %v4530 = vpack.c.bf16 %v4498, %v4498
      %v4531 = vpack.c.bf16 %v4499, %v4499
      %v4532 = vpack.c.bf16 %v4500, %v4500
      %v4533 = vpack.c.bf16 %v4501, %v4501
      %v4534 = vpack.c.bf16 %v4502, %v4502
      %v4535 = vpack.c.bf16 %v4503, %v4503
      %v4536 = vpack.c.bf16 %v4504, %v4504
      %v4537 = vpack.c.bf16 %v4505, %v4505
      %v4538 = vpack.c.bf16 %v4506, %v4506
      %v4539 = vpack.c.bf16 %v4507, %v4507
      %v4540 = vpack.c.bf16 %v4508, %v4508
      %v4541 = vpack.c.bf16 %v4509, %v4509
      %v4542 = vpack.c.bf16 %v4510, %v4510
      %v4543 = vpack.c.bf16 %v4511, %v4511
      %v4544 = vpack.c.bf16 %v4512, %v4512
      %v4545 = vpack.c.bf16 %v4513, %v4513
      %v4546 = vpack.c.bf16 %v4514, %v4514
      %v4547 = vpack.c.bf16 %v4515, %v4515
      %v4548 = vpack.c.bf16 %v4516, %v4516
      %v4549 = vpack.c.bf16 %v4517, %v4517
      %v4550 = vpack.c.bf16 %v4518, %v4518
      %s4551 = scalar_lea.vmem %s3, 8
      %v4552 = vld [vmem:[%s4551] sm:$0x3]
      %v4585 = vunpack.c.l.b16 %v4519
      %v4586 = vunpack.c.l.b16 %v4520
      %v4587 = vunpack.c.l.b16 %v4521
      %v4588 = vunpack.c.l.b16 %v4522
      %v4589 = vunpack.c.l.b16 %v4523
      %v4590 = vunpack.c.l.b16 %v4524
      %v4591 = vunpack.c.l.b16 %v4525
      %v4592 = vunpack.c.l.b16 %v4526
      %v4593 = vunpack.c.l.b16 %v4527
      %v4594 = vunpack.c.l.b16 %v4528
      %v4595 = vunpack.c.l.b16 %v4529
      %v4596 = vunpack.c.l.b16 %v4530
      %v4597 = vunpack.c.l.b16 %v4531
      %v4598 = vunpack.c.l.b16 %v4532
      %v4599 = vunpack.c.l.b16 %v4533
      %v4600 = vunpack.c.l.b16 %v4534
      %v4601 = vunpack.c.l.b16 %v4535
      %v4602 = vunpack.c.l.b16 %v4536
      %v4603 = vunpack.c.l.b16 %v4537
      %v4604 = vunpack.c.l.b16 %v4538
      %v4605 = vunpack.c.l.b16 %v4539
      %v4606 = vunpack.c.l.b16 %v4540
      %v4607 = vunpack.c.l.b16 %v4541
      %v4608 = vunpack.c.l.b16 %v4542
      %v4609 = vunpack.c.l.b16 %v4543
      %v4610 = vunpack.c.l.b16 %v4544
      %v4611 = vunpack.c.l.b16 %v4545
      %v4612 = vunpack.c.l.b16 %v4546
      %v4613 = vunpack.c.l.b16 %v4547
      %v4614 = vunpack.c.l.b16 %v4548
      %v4615 = vunpack.c.l.b16 %v4549
      %v4616 = vunpack.c.l.b16 %v4550
      %v4617 = vpack.c.b16 %v4586, %v4585
      %v4618 = vpack.c.b16 %v4588, %v4587
      %v4619 = vpack.c.b16 %v4590, %v4589
      %v4620 = vpack.c.b16 %v4592, %v4591
      %v4621 = vpack.c.b16 %v4594, %v4593
      %v4622 = vpack.c.b16 %v4596, %v4595
      %v4623 = vpack.c.b16 %v4598, %v4597
      %v4624 = vpack.c.b16 %v4600, %v4599
      %v4625 = vpack.c.b16 %v4602, %v4601
      %v4626 = vpack.c.b16 %v4604, %v4603
      %v4627 = vpack.c.b16 %v4606, %v4605
      %v4628 = vpack.c.b16 %v4608, %v4607
      %v4629 = vpack.c.b16 %v4610, %v4609
      %v4630 = vpack.c.b16 %v4612, %v4611
      %v4631 = vpack.c.b16 %v4614, %v4613
      %v4632 = vpack.c.b16 %v4616, %v4615
      %v4634 = vsel %vm226, %v4617, 0
      %v4637 = vsel %vm226, %v4618, 0
      %v4640 = vsel %vm226, %v4619, 0
      %v4643 = vsel %vm226, %v4620, 0
      %v4646 = vsel %vm226, %v4621, 0
      %v4649 = vsel %vm226, %v4622, 0
      %v4652 = vsel %vm226, %v4623, 0
      %v4655 = vsel %vm226, %v4624, 0
      %v4658 = vsel %vm226, %v4625, 0
      %v4661 = vsel %vm226, %v4626, 0
      %v4664 = vsel %vm226, %v4627, 0
      %v4667 = vsel %vm226, %v4628, 0
      %v4670 = vsel %vm226, %v4629, 0
      %v4673 = vsel %vm226, %v4630, 0
      %v4676 = vsel %vm226, %v4631, 0
      %v4679 = vsel %vm226, %v4632, 0
      %v4682 = vsel %vm596, %v4552, 0
      %4684 = vmatpush.bf16.msra.mxu0 0
      %4685 = vmatpush.bf16.msra.mxu0 0
      %4686 = vmatpush.bf16.msra.mxu0 0
      %4687 = vmatpush.bf16.msra.mxu0 0
      %4688 = vmatpush.bf16.msra.mxu0 0
      %4689 = vmatpush.bf16.msra.mxu0 0
      %4690 = vmatpush.bf16.msra.mxu0 0
      %4691 = vmatpush.bf16.msra.mxu0 %v4682
      %4692 = vmatmul.bf16.gmra.mxu0 %v4634
      %v4693 = vpop.f32.mrf.mxu0
      %v4694 = vadd.f32 0.0, %v4693
      %v4695 = vpop.f32.mrf.mxu0
      %v4696 = vadd.f32 0.0, %v4695
      %4697 = vmatmul.bf16.gmra.mxu0 %v4637
      %v4698 = vpop.f32.mrf.mxu0
      %v4699 = vadd.f32 0.0, %v4698
      %v4700 = vpop.f32.mrf.mxu0
      %v4701 = vadd.f32 0.0, %v4700
      %4702 = vmatmul.bf16.gmra.mxu0 %v4640
      %v4703 = vpop.f32.mrf.mxu0
      %v4704 = vadd.f32 0.0, %v4703
      %v4705 = vpop.f32.mrf.mxu0
      %v4706 = vadd.f32 0.0, %v4705
      %4707 = vmatmul.bf16.gmra.mxu0 %v4643
      %v4708 = vpop.f32.mrf.mxu0
      %v4709 = vadd.f32 0.0, %v4708
      %v4710 = vpop.f32.mrf.mxu0
      %v4711 = vadd.f32 0.0, %v4710
      %4712 = vmatmul.bf16.gmra.mxu0 %v4646
      %v4713 = vpop.f32.mrf.mxu0
      %v4714 = vadd.f32 0.0, %v4713
      %v4715 = vpop.f32.mrf.mxu0
      %v4716 = vadd.f32 0.0, %v4715
      %4717 = vmatmul.bf16.gmra.mxu0 %v4649
      %v4718 = vpop.f32.mrf.mxu0
      %v4719 = vadd.f32 0.0, %v4718
      %v4720 = vpop.f32.mrf.mxu0
      %v4721 = vadd.f32 0.0, %v4720
      %4722 = vmatmul.bf16.gmra.mxu0 %v4652
      %v4723 = vpop.f32.mrf.mxu0
      %v4724 = vadd.f32 0.0, %v4723
      %v4725 = vpop.f32.mrf.mxu0
      %v4726 = vadd.f32 0.0, %v4725
      %4727 = vmatmul.bf16.gmra.mxu0 %v4655
      %v4728 = vpop.f32.mrf.mxu0
      %v4729 = vadd.f32 0.0, %v4728
      %v4730 = vpop.f32.mrf.mxu0
      %v4731 = vadd.f32 0.0, %v4730
      %4732 = vmatmul.bf16.gmra.mxu0 %v4658
      %v4733 = vpop.f32.mrf.mxu0
      %v4734 = vadd.f32 0.0, %v4733
      %v4735 = vpop.f32.mrf.mxu0
      %v4736 = vadd.f32 0.0, %v4735
      %4737 = vmatmul.bf16.gmra.mxu0 %v4661
      %v4738 = vpop.f32.mrf.mxu0
      %v4739 = vadd.f32 0.0, %v4738
      %v4740 = vpop.f32.mrf.mxu0
      %v4741 = vadd.f32 0.0, %v4740
      %4742 = vmatmul.bf16.gmra.mxu0 %v4664
      %v4743 = vpop.f32.mrf.mxu0
      %v4744 = vadd.f32 0.0, %v4743
      %v4745 = vpop.f32.mrf.mxu0
      %v4746 = vadd.f32 0.0, %v4745
      %4747 = vmatmul.bf16.gmra.mxu0 %v4667
      %v4748 = vpop.f32.mrf.mxu0
      %v4749 = vadd.f32 0.0, %v4748
      %v4750 = vpop.f32.mrf.mxu0
      %v4751 = vadd.f32 0.0, %v4750
      %4752 = vmatmul.bf16.gmra.mxu0 %v4670
      %v4753 = vpop.f32.mrf.mxu0
      %v4754 = vadd.f32 0.0, %v4753
      %v4755 = vpop.f32.mrf.mxu0
      %v4756 = vadd.f32 0.0, %v4755
      %4757 = vmatmul.bf16.gmra.mxu0 %v4673
      %v4758 = vpop.f32.mrf.mxu0
      %v4759 = vadd.f32 0.0, %v4758
      %v4760 = vpop.f32.mrf.mxu0
      %v4761 = vadd.f32 0.0, %v4760
      %4762 = vmatmul.bf16.gmra.mxu0 %v4676
      %v4763 = vpop.f32.mrf.mxu0
      %v4764 = vadd.f32 0.0, %v4763
      %v4765 = vpop.f32.mrf.mxu0
      %v4766 = vadd.f32 0.0, %v4765
      %4767 = vmatmul.bf16.gmra.mxu0 %v4679
      %v4768 = vpop.f32.mrf.mxu0
      %v4769 = vadd.f32 0.0, %v4768
      %v4770 = vpop.f32.mrf.mxu0
      %v4771 = vadd.f32 0.0, %v4770
      %4772 = vdwg.mxu0
      %v4773 = vadd.f32 %v4455, %v4694
      %v4774 = vadd.f32 %v4456, %v4696
      %v4775 = vadd.f32 %v4457, %v4699
      %v4776 = vadd.f32 %v4458, %v4701
      %v4777 = vadd.f32 %v4459, %v4704
      %v4778 = vadd.f32 %v4460, %v4706
      %v4779 = vadd.f32 %v4461, %v4709
      %v4780 = vadd.f32 %v4462, %v4711
      %v4781 = vadd.f32 %v4463, %v4714
      %v4782 = vadd.f32 %v4464, %v4716
      %v4783 = vadd.f32 %v4465, %v4719
      %v4784 = vadd.f32 %v4466, %v4721
      %v4785 = vadd.f32 %v4467, %v4724
      %v4786 = vadd.f32 %v4468, %v4726
      %v4787 = vadd.f32 %v4469, %v4729
      %v4788 = vadd.f32 %v4470, %v4731
      %v4789 = vadd.f32 %v4471, %v4734
      %v4790 = vadd.f32 %v4472, %v4736
      %v4791 = vadd.f32 %v4473, %v4739
      %v4792 = vadd.f32 %v4474, %v4741
      %v4793 = vadd.f32 %v4475, %v4744
      %v4794 = vadd.f32 %v4476, %v4746
      %v4795 = vadd.f32 %v4477, %v4749
      %v4796 = vadd.f32 %v4478, %v4751
      %v4797 = vadd.f32 %v4479, %v4754
      %v4798 = vadd.f32 %v4480, %v4756
      %v4799 = vadd.f32 %v4481, %v4759
      %v4800 = vadd.f32 %v4482, %v4761
      %v4801 = vadd.f32 %v4483, %v4764
      %v4802 = vadd.f32 %v4484, %v4766
      %v4803 = vadd.f32 %v4485, %v4769
      %v4804 = vadd.f32 %v4486, %v4771
      %v4805 = vld [vmem:[%s3247 + $0x2] sm:$0xff]
      %v4806 = vld [vmem:[%s3247 + $0xa] sm:$0xff]
      %v4807 = vld [vmem:[%s3247 + $0x1a] sm:$0xff]
      %v4808 = vld [vmem:[%s3247 + $0x22] sm:$0xff]
      %v4809 = vld [vmem:[%s3247 + $0x32] sm:$0xff]
      %v4810 = vld [vmem:[%s3247 + $0x3a] sm:$0xff]
      %v4811 = vld [vmem:[%s3247 + $0x4a] sm:$0xff]
      %v4812 = vld [vmem:[%s3247 + $0x52] sm:$0xff]
      %v4813 = vld [vmem:[%s3247 + $0x62] sm:$0xff]
      %v4814 = vld [vmem:[%s3247 + $0x6a] sm:$0xff]
      %v4815 = vld [vmem:[%s3247 + $0x7a] sm:$0xff]
      %v4816 = vld [vmem:[%s3247 + $0x82] sm:$0xff]
      %v4817 = vld [vmem:[%s3247 + $0x92] sm:$0xff]
      %v4818 = vld [vmem:[%s3247 + $0x9a] sm:$0xff]
      %v4819 = vld [vmem:[%s3247 + $0xaa] sm:$0xff]
      %v4820 = vld [vmem:[%s3247 + $0xb2] sm:$0xff]
      %v4821 = vld [vmem:[%s3247 + $0xc2] sm:$0xff]
      %v4822 = vld [vmem:[%s3247 + $0xca] sm:$0xff]
      %v4823 = vld [vmem:[%s3247 + $0xda] sm:$0xff]
      %v4824 = vld [vmem:[%s3247 + $0xe2] sm:$0xff]
      %v4825 = vld [vmem:[%s3247 + $0xf2] sm:$0xff]
      %v4826 = vld [vmem:[%s3247 + $0xfa] sm:$0xff]
      %v4827 = vld [vmem:[%s3247 + $0x10a] sm:$0xff]
      %v4828 = vld [vmem:[%s3247 + $0x112] sm:$0xff]
      %v4829 = vld [vmem:[%s3247 + $0x122] sm:$0xff]
      %v4830 = vld [vmem:[%s3247 + $0x12a] sm:$0xff]
      %v4831 = vld [vmem:[%s3247 + $0x13a] sm:$0xff]
      %v4832 = vld [vmem:[%s3247 + $0x142] sm:$0xff]
      %v4833 = vld [vmem:[%s3247 + $0x152] sm:$0xff]
      %v4834 = vld [vmem:[%s3247 + $0x15a] sm:$0xff]
      %v4835 = vld [vmem:[%s3247 + $0x16a] sm:$0xff]
      %v4836 = vld [vmem:[%s3247 + $0x172] sm:$0xff]
      %v4837 = vpack.c.bf16 %v4805, %v4805
      %v4838 = vpack.c.bf16 %v4806, %v4806
      %v4839 = vpack.c.bf16 %v4807, %v4807
      %v4840 = vpack.c.bf16 %v4808, %v4808
      %v4841 = vpack.c.bf16 %v4809, %v4809
      %v4842 = vpack.c.bf16 %v4810, %v4810
      %v4843 = vpack.c.bf16 %v4811, %v4811
      %v4844 = vpack.c.bf16 %v4812, %v4812
      %v4845 = vpack.c.bf16 %v4813, %v4813
      %v4846 = vpack.c.bf16 %v4814, %v4814
      %v4847 = vpack.c.bf16 %v4815, %v4815
      %v4848 = vpack.c.bf16 %v4816, %v4816
      %v4849 = vpack.c.bf16 %v4817, %v4817
      %v4850 = vpack.c.bf16 %v4818, %v4818
      %v4851 = vpack.c.bf16 %v4819, %v4819
      %v4852 = vpack.c.bf16 %v4820, %v4820
      %v4853 = vpack.c.bf16 %v4821, %v4821
      %v4854 = vpack.c.bf16 %v4822, %v4822
      %v4855 = vpack.c.bf16 %v4823, %v4823
      %v4856 = vpack.c.bf16 %v4824, %v4824
      %v4857 = vpack.c.bf16 %v4825, %v4825
      %v4858 = vpack.c.bf16 %v4826, %v4826
      %v4859 = vpack.c.bf16 %v4827, %v4827
      %v4860 = vpack.c.bf16 %v4828, %v4828
      %v4861 = vpack.c.bf16 %v4829, %v4829
      %v4862 = vpack.c.bf16 %v4830, %v4830
      %v4863 = vpack.c.bf16 %v4831, %v4831
      %v4864 = vpack.c.bf16 %v4832, %v4832
      %v4865 = vpack.c.bf16 %v4833, %v4833
      %v4866 = vpack.c.bf16 %v4834, %v4834
      %v4867 = vpack.c.bf16 %v4835, %v4835
      %v4868 = vpack.c.bf16 %v4836, %v4836
      %s4869 = scalar_lea.vmem %s3, 10
      %v4870 = vld [vmem:[%s4869] sm:$0x3]
      %v4903 = vunpack.c.l.b16 %v4837
      %v4904 = vunpack.c.l.b16 %v4838
      %v4905 = vunpack.c.l.b16 %v4839
      %v4906 = vunpack.c.l.b16 %v4840
      %v4907 = vunpack.c.l.b16 %v4841
      %v4908 = vunpack.c.l.b16 %v4842
      %v4909 = vunpack.c.l.b16 %v4843
      %v4910 = vunpack.c.l.b16 %v4844
      %v4911 = vunpack.c.l.b16 %v4845
      %v4912 = vunpack.c.l.b16 %v4846
      %v4913 = vunpack.c.l.b16 %v4847
      %v4914 = vunpack.c.l.b16 %v4848
      %v4915 = vunpack.c.l.b16 %v4849
      %v4916 = vunpack.c.l.b16 %v4850
      %v4917 = vunpack.c.l.b16 %v4851
      %v4918 = vunpack.c.l.b16 %v4852
      %v4919 = vunpack.c.l.b16 %v4853
      %v4920 = vunpack.c.l.b16 %v4854
      %v4921 = vunpack.c.l.b16 %v4855
      %v4922 = vunpack.c.l.b16 %v4856
      %v4923 = vunpack.c.l.b16 %v4857
      %v4924 = vunpack.c.l.b16 %v4858
      %v4925 = vunpack.c.l.b16 %v4859
      %v4926 = vunpack.c.l.b16 %v4860
      %v4927 = vunpack.c.l.b16 %v4861
      %v4928 = vunpack.c.l.b16 %v4862
      %v4929 = vunpack.c.l.b16 %v4863
      %v4930 = vunpack.c.l.b16 %v4864
      %v4931 = vunpack.c.l.b16 %v4865
      %v4932 = vunpack.c.l.b16 %v4866
      %v4933 = vunpack.c.l.b16 %v4867
      %v4934 = vunpack.c.l.b16 %v4868
      %v4935 = vpack.c.b16 %v4904, %v4903
      %v4936 = vpack.c.b16 %v4906, %v4905
      %v4937 = vpack.c.b16 %v4908, %v4907
      %v4938 = vpack.c.b16 %v4910, %v4909
      %v4939 = vpack.c.b16 %v4912, %v4911
      %v4940 = vpack.c.b16 %v4914, %v4913
      %v4941 = vpack.c.b16 %v4916, %v4915
      %v4942 = vpack.c.b16 %v4918, %v4917
      %v4943 = vpack.c.b16 %v4920, %v4919
      %v4944 = vpack.c.b16 %v4922, %v4921
      %v4945 = vpack.c.b16 %v4924, %v4923
      %v4946 = vpack.c.b16 %v4926, %v4925
      %v4947 = vpack.c.b16 %v4928, %v4927
      %v4948 = vpack.c.b16 %v4930, %v4929
      %v4949 = vpack.c.b16 %v4932, %v4931
      %v4950 = vpack.c.b16 %v4934, %v4933
      %v4952 = vsel %vm226, %v4935, 0
      %v4955 = vsel %vm226, %v4936, 0
      %v4958 = vsel %vm226, %v4937, 0
      %v4961 = vsel %vm226, %v4938, 0
      %v4964 = vsel %vm226, %v4939, 0
      %v4967 = vsel %vm226, %v4940, 0
      %v4970 = vsel %vm226, %v4941, 0
      %v4973 = vsel %vm226, %v4942, 0
      %v4976 = vsel %vm226, %v4943, 0
      %v4979 = vsel %vm226, %v4944, 0
      %v4982 = vsel %vm226, %v4945, 0
      %v4985 = vsel %vm226, %v4946, 0
      %v4988 = vsel %vm226, %v4947, 0
      %v4991 = vsel %vm226, %v4948, 0
      %v4994 = vsel %vm226, %v4949, 0
      %v4997 = vsel %vm226, %v4950, 0
      %v5000 = vsel %vm596, %v4870, 0
      %5002 = vmatpush.bf16.msra.mxu0 0
      %5003 = vmatpush.bf16.msra.mxu0 0
      %5004 = vmatpush.bf16.msra.mxu0 0
      %5005 = vmatpush.bf16.msra.mxu0 0
      %5006 = vmatpush.bf16.msra.mxu0 0
      %5007 = vmatpush.bf16.msra.mxu0 0
      %5008 = vmatpush.bf16.msra.mxu0 0
      %5009 = vmatpush.bf16.msra.mxu0 %v5000
      %5010 = vmatmul.bf16.gmra.mxu0 %v4952
      %v5011 = vpop.f32.mrf.mxu0
      %v5012 = vadd.f32 0.0, %v5011
      %v5013 = vpop.f32.mrf.mxu0
      %v5014 = vadd.f32 0.0, %v5013
      %5015 = vmatmul.bf16.gmra.mxu0 %v4955
      %v5016 = vpop.f32.mrf.mxu0
      %v5017 = vadd.f32 0.0, %v5016
      %v5018 = vpop.f32.mrf.mxu0
      %v5019 = vadd.f32 0.0, %v5018
      %5020 = vmatmul.bf16.gmra.mxu0 %v4958
      %v5021 = vpop.f32.mrf.mxu0
      %v5022 = vadd.f32 0.0, %v5021
      %v5023 = vpop.f32.mrf.mxu0
      %v5024 = vadd.f32 0.0, %v5023
      %5025 = vmatmul.bf16.gmra.mxu0 %v4961
      %v5026 = vpop.f32.mrf.mxu0
      %v5027 = vadd.f32 0.0, %v5026
      %v5028 = vpop.f32.mrf.mxu0
      %v5029 = vadd.f32 0.0, %v5028
      %5030 = vmatmul.bf16.gmra.mxu0 %v4964
      %v5031 = vpop.f32.mrf.mxu0
      %v5032 = vadd.f32 0.0, %v5031
      %v5033 = vpop.f32.mrf.mxu0
      %v5034 = vadd.f32 0.0, %v5033
      %5035 = vmatmul.bf16.gmra.mxu0 %v4967
      %v5036 = vpop.f32.mrf.mxu0
      %v5037 = vadd.f32 0.0, %v5036
      %v5038 = vpop.f32.mrf.mxu0
      %v5039 = vadd.f32 0.0, %v5038
      %5040 = vmatmul.bf16.gmra.mxu0 %v4970
      %v5041 = vpop.f32.mrf.mxu0
      %v5042 = vadd.f32 0.0, %v5041
      %v5043 = vpop.f32.mrf.mxu0
      %v5044 = vadd.f32 0.0, %v5043
      %5045 = vmatmul.bf16.gmra.mxu0 %v4973
      %v5046 = vpop.f32.mrf.mxu0
      %v5047 = vadd.f32 0.0, %v5046
      %v5048 = vpop.f32.mrf.mxu0
      %v5049 = vadd.f32 0.0, %v5048
      %5050 = vmatmul.bf16.gmra.mxu0 %v4976
      %v5051 = vpop.f32.mrf.mxu0
      %v5052 = vadd.f32 0.0, %v5051
      %v5053 = vpop.f32.mrf.mxu0
      %v5054 = vadd.f32 0.0, %v5053
      %5055 = vmatmul.bf16.gmra.mxu0 %v4979
      %v5056 = vpop.f32.mrf.mxu0
      %v5057 = vadd.f32 0.0, %v5056
      %v5058 = vpop.f32.mrf.mxu0
      %v5059 = vadd.f32 0.0, %v5058
      %5060 = vmatmul.bf16.gmra.mxu0 %v4982
      %v5061 = vpop.f32.mrf.mxu0
      %v5062 = vadd.f32 0.0, %v5061
      %v5063 = vpop.f32.mrf.mxu0
      %v5064 = vadd.f32 0.0, %v5063
      %5065 = vmatmul.bf16.gmra.mxu0 %v4985
      %v5066 = vpop.f32.mrf.mxu0
      %v5067 = vadd.f32 0.0, %v5066
      %v5068 = vpop.f32.mrf.mxu0
      %v5069 = vadd.f32 0.0, %v5068
      %5070 = vmatmul.bf16.gmra.mxu0 %v4988
      %v5071 = vpop.f32.mrf.mxu0
      %v5072 = vadd.f32 0.0, %v5071
      %v5073 = vpop.f32.mrf.mxu0
      %v5074 = vadd.f32 0.0, %v5073
      %5075 = vmatmul.bf16.gmra.mxu0 %v4991
      %v5076 = vpop.f32.mrf.mxu0
      %v5077 = vadd.f32 0.0, %v5076
      %v5078 = vpop.f32.mrf.mxu0
      %v5079 = vadd.f32 0.0, %v5078
      %5080 = vmatmul.bf16.gmra.mxu0 %v4994
      %v5081 = vpop.f32.mrf.mxu0
      %v5082 = vadd.f32 0.0, %v5081
      %v5083 = vpop.f32.mrf.mxu0
      %v5084 = vadd.f32 0.0, %v5083
      %5085 = vmatmul.bf16.gmra.mxu0 %v4997
      %v5086 = vpop.f32.mrf.mxu0
      %v5087 = vadd.f32 0.0, %v5086
      %v5088 = vpop.f32.mrf.mxu0
      %v5089 = vadd.f32 0.0, %v5088
      %5090 = vdwg.mxu0
      %v5091 = vadd.f32 %v4773, %v5012
      %v5092 = vadd.f32 %v4774, %v5014
      %v5093 = vadd.f32 %v4775, %v5017
      %v5094 = vadd.f32 %v4776, %v5019
      %v5095 = vadd.f32 %v4777, %v5022
      %v5096 = vadd.f32 %v4778, %v5024
      %v5097 = vadd.f32 %v4779, %v5027
      %v5098 = vadd.f32 %v4780, %v5029
      %v5099 = vadd.f32 %v4781, %v5032
      %v5100 = vadd.f32 %v4782, %v5034
      %v5101 = vadd.f32 %v4783, %v5037
      %v5102 = vadd.f32 %v4784, %v5039
      %v5103 = vadd.f32 %v4785, %v5042
      %v5104 = vadd.f32 %v4786, %v5044
      %v5105 = vadd.f32 %v4787, %v5047
      %v5106 = vadd.f32 %v4788, %v5049
      %v5107 = vadd.f32 %v4789, %v5052
      %v5108 = vadd.f32 %v4790, %v5054
      %v5109 = vadd.f32 %v4791, %v5057
      %v5110 = vadd.f32 %v4792, %v5059
      %v5111 = vadd.f32 %v4793, %v5062
      %v5112 = vadd.f32 %v4794, %v5064
      %v5113 = vadd.f32 %v4795, %v5067
      %v5114 = vadd.f32 %v4796, %v5069
      %v5115 = vadd.f32 %v4797, %v5072
      %v5116 = vadd.f32 %v4798, %v5074
      %v5117 = vadd.f32 %v4799, %v5077
      %v5118 = vadd.f32 %v4800, %v5079
      %v5119 = vadd.f32 %v4801, %v5082
      %v5120 = vadd.f32 %v4802, %v5084
      %v5121 = vadd.f32 %v4803, %v5087
      %v5122 = vadd.f32 %v4804, %v5089
      %s5123 = scalar_lea.vmem [#allocation3], 48
      %v5124 = vld [vmem:[%s5123] sm:$0xff]
      %v5125 = vld [vmem:[%s5123 + $0x8] sm:$0xff]
      %v5126 = vld [vmem:[%s5123 + $0x18] sm:$0xff]
      %v5127 = vld [vmem:[%s5123 + $0x20] sm:$0xff]
      %v5128 = vld [vmem:[%s5123 + $0x30] sm:$0xff]
      %v5129 = vld [vmem:[%s5123 + $0x38] sm:$0xff]
      %v5130 = vld [vmem:[%s5123 + $0x48] sm:$0xff]
      %v5131 = vld [vmem:[%s5123 + $0x50] sm:$0xff]
      %v5132 = vld [vmem:[%s5123 + $0x60] sm:$0xff]
      %v5133 = vld [vmem:[%s5123 + $0x68] sm:$0xff]
      %v5134 = vld [vmem:[%s5123 + $0x78] sm:$0xff]
      %v5135 = vld [vmem:[%s5123 + $0x80] sm:$0xff]
      %v5136 = vld [vmem:[%s5123 + $0x90] sm:$0xff]
      %v5137 = vld [vmem:[%s5123 + $0x98] sm:$0xff]
      %v5138 = vld [vmem:[%s5123 + $0xa8] sm:$0xff]
      %v5139 = vld [vmem:[%s5123 + $0xb0] sm:$0xff]
      %v5140 = vld [vmem:[%s5123 + $0xc0] sm:$0xff]
      %v5141 = vld [vmem:[%s5123 + $0xc8] sm:$0xff]
      %v5142 = vld [vmem:[%s5123 + $0xd8] sm:$0xff]
      %v5143 = vld [vmem:[%s5123 + $0xe0] sm:$0xff]
      %v5144 = vld [vmem:[%s5123 + $0xf0] sm:$0xff]
      %v5145 = vld [vmem:[%s5123 + $0xf8] sm:$0xff]
      %v5146 = vld [vmem:[%s5123 + $0x108] sm:$0xff]
      %v5147 = vld [vmem:[%s5123 + $0x110] sm:$0xff]
      %v5148 = vld [vmem:[%s5123 + $0x120] sm:$0xff]
      %v5149 = vld [vmem:[%s5123 + $0x128] sm:$0xff]
      %v5150 = vld [vmem:[%s5123 + $0x138] sm:$0xff]
      %v5151 = vld [vmem:[%s5123 + $0x140] sm:$0xff]
      %v5152 = vld [vmem:[%s5123 + $0x150] sm:$0xff]
      %v5153 = vld [vmem:[%s5123 + $0x158] sm:$0xff]
      %v5154 = vld [vmem:[%s5123 + $0x168] sm:$0xff]
      %v5155 = vld [vmem:[%s5123 + $0x170] sm:$0xff]
      %v5156 = vpack.c.bf16 %v5124, %v5124
      %v5157 = vpack.c.bf16 %v5125, %v5125
      %v5158 = vpack.c.bf16 %v5126, %v5126
      %v5159 = vpack.c.bf16 %v5127, %v5127
      %v5160 = vpack.c.bf16 %v5128, %v5128
      %v5161 = vpack.c.bf16 %v5129, %v5129
      %v5162 = vpack.c.bf16 %v5130, %v5130
      %v5163 = vpack.c.bf16 %v5131, %v5131
      %v5164 = vpack.c.bf16 %v5132, %v5132
      %v5165 = vpack.c.bf16 %v5133, %v5133
      %v5166 = vpack.c.bf16 %v5134, %v5134
      %v5167 = vpack.c.bf16 %v5135, %v5135
      %v5168 = vpack.c.bf16 %v5136, %v5136
      %v5169 = vpack.c.bf16 %v5137, %v5137
      %v5170 = vpack.c.bf16 %v5138, %v5138
      %v5171 = vpack.c.bf16 %v5139, %v5139
      %v5172 = vpack.c.bf16 %v5140, %v5140
      %v5173 = vpack.c.bf16 %v5141, %v5141
      %v5174 = vpack.c.bf16 %v5142, %v5142
      %v5175 = vpack.c.bf16 %v5143, %v5143
      %v5176 = vpack.c.bf16 %v5144, %v5144
      %v5177 = vpack.c.bf16 %v5145, %v5145
      %v5178 = vpack.c.bf16 %v5146, %v5146
      %v5179 = vpack.c.bf16 %v5147, %v5147
      %v5180 = vpack.c.bf16 %v5148, %v5148
      %v5181 = vpack.c.bf16 %v5149, %v5149
      %v5182 = vpack.c.bf16 %v5150, %v5150
      %v5183 = vpack.c.bf16 %v5151, %v5151
      %v5184 = vpack.c.bf16 %v5152, %v5152
      %v5185 = vpack.c.bf16 %v5153, %v5153
      %v5186 = vpack.c.bf16 %v5154, %v5154
      %v5187 = vpack.c.bf16 %v5155, %v5155
      %s5188 = scalar_lea.vmem %s3, 12
      %v5189 = vld [vmem:[%s5188] sm:$0x3]
      %v5222 = vunpack.c.l.b16 %v5156
      %v5223 = vunpack.c.l.b16 %v5157
      %v5224 = vunpack.c.l.b16 %v5158
      %v5225 = vunpack.c.l.b16 %v5159
      %v5226 = vunpack.c.l.b16 %v5160
      %v5227 = vunpack.c.l.b16 %v5161
      %v5228 = vunpack.c.l.b16 %v5162
      %v5229 = vunpack.c.l.b16 %v5163
      %v5230 = vunpack.c.l.b16 %v5164
      %v5231 = vunpack.c.l.b16 %v5165
      %v5232 = vunpack.c.l.b16 %v5166
      %v5233 = vunpack.c.l.b16 %v5167
      %v5234 = vunpack.c.l.b16 %v5168
      %v5235 = vunpack.c.l.b16 %v5169
      %v5236 = vunpack.c.l.b16 %v5170
      %v5237 = vunpack.c.l.b16 %v5171
      %v5238 = vunpack.c.l.b16 %v5172
      %v5239 = vunpack.c.l.b16 %v5173
      %v5240 = vunpack.c.l.b16 %v5174
      %v5241 = vunpack.c.l.b16 %v5175
      %v5242 = vunpack.c.l.b16 %v5176
      %v5243 = vunpack.c.l.b16 %v5177
      %v5244 = vunpack.c.l.b16 %v5178
      %v5245 = vunpack.c.l.b16 %v5179
      %v5246 = vunpack.c.l.b16 %v5180
      %v5247 = vunpack.c.l.b16 %v5181
      %v5248 = vunpack.c.l.b16 %v5182
      %v5249 = vunpack.c.l.b16 %v5183
      %v5250 = vunpack.c.l.b16 %v5184
      %v5251 = vunpack.c.l.b16 %v5185
      %v5252 = vunpack.c.l.b16 %v5186
      %v5253 = vunpack.c.l.b16 %v5187
      %v5254 = vpack.c.b16 %v5223, %v5222
      %v5255 = vpack.c.b16 %v5225, %v5224
      %v5256 = vpack.c.b16 %v5227, %v5226
      %v5257 = vpack.c.b16 %v5229, %v5228
      %v5258 = vpack.c.b16 %v5231, %v5230
      %v5259 = vpack.c.b16 %v5233, %v5232
      %v5260 = vpack.c.b16 %v5235, %v5234
      %v5261 = vpack.c.b16 %v5237, %v5236
      %v5262 = vpack.c.b16 %v5239, %v5238
      %v5263 = vpack.c.b16 %v5241, %v5240
      %v5264 = vpack.c.b16 %v5243, %v5242
      %v5265 = vpack.c.b16 %v5245, %v5244
      %v5266 = vpack.c.b16 %v5247, %v5246
      %v5267 = vpack.c.b16 %v5249, %v5248
      %v5268 = vpack.c.b16 %v5251, %v5250
      %v5269 = vpack.c.b16 %v5253, %v5252
      %v5271 = vsel %vm226, %v5254, 0
      %v5274 = vsel %vm226, %v5255, 0
      %v5277 = vsel %vm226, %v5256, 0
      %v5280 = vsel %vm226, %v5257, 0
      %v5283 = vsel %vm226, %v5258, 0
      %v5286 = vsel %vm226, %v5259, 0
      %v5289 = vsel %vm226, %v5260, 0
      %v5292 = vsel %vm226, %v5261, 0
      %v5295 = vsel %vm226, %v5262, 0
      %v5298 = vsel %vm226, %v5263, 0
      %v5301 = vsel %vm226, %v5264, 0
      %v5304 = vsel %vm226, %v5265, 0
      %v5307 = vsel %vm226, %v5266, 0
      %v5310 = vsel %vm226, %v5267, 0
      %v5313 = vsel %vm226, %v5268, 0
      %v5316 = vsel %vm226, %v5269, 0
      %v5319 = vsel %vm596, %v5189, 0
      %5321 = vmatpush.bf16.msra.mxu0 0
      %5322 = vmatpush.bf16.msra.mxu0 0
      %5323 = vmatpush.bf16.msra.mxu0 0
      %5324 = vmatpush.bf16.msra.mxu0 0
      %5325 = vmatpush.bf16.msra.mxu0 0
      %5326 = vmatpush.bf16.msra.mxu0 0
      %5327 = vmatpush.bf16.msra.mxu0 0
      %5328 = vmatpush.bf16.msra.mxu0 %v5319
      %5329 = vmatmul.bf16.gmra.mxu0 %v5271
      %v5330 = vpop.f32.mrf.mxu0
      %v5331 = vadd.f32 0.0, %v5330
      %v5332 = vpop.f32.mrf.mxu0
      %v5333 = vadd.f32 0.0, %v5332
      %5334 = vmatmul.bf16.gmra.mxu0 %v5274
      %v5335 = vpop.f32.mrf.mxu0
      %v5336 = vadd.f32 0.0, %v5335
      %v5337 = vpop.f32.mrf.mxu0
      %v5338 = vadd.f32 0.0, %v5337
      %5339 = vmatmul.bf16.gmra.mxu0 %v5277
      %v5340 = vpop.f32.mrf.mxu0
      %v5341 = vadd.f32 0.0, %v5340
      %v5342 = vpop.f32.mrf.mxu0
      %v5343 = vadd.f32 0.0, %v5342
      %5344 = vmatmul.bf16.gmra.mxu0 %v5280
      %v5345 = vpop.f32.mrf.mxu0
      %v5346 = vadd.f32 0.0, %v5345
      %v5347 = vpop.f32.mrf.mxu0
      %v5348 = vadd.f32 0.0, %v5347
      %5349 = vmatmul.bf16.gmra.mxu0 %v5283
      %v5350 = vpop.f32.mrf.mxu0
      %v5351 = vadd.f32 0.0, %v5350
      %v5352 = vpop.f32.mrf.mxu0
      %v5353 = vadd.f32 0.0, %v5352
      %5354 = vmatmul.bf16.gmra.mxu0 %v5286
      %v5355 = vpop.f32.mrf.mxu0
      %v5356 = vadd.f32 0.0, %v5355
      %v5357 = vpop.f32.mrf.mxu0
      %v5358 = vadd.f32 0.0, %v5357
      %5359 = vmatmul.bf16.gmra.mxu0 %v5289
      %v5360 = vpop.f32.mrf.mxu0
      %v5361 = vadd.f32 0.0, %v5360
      %v5362 = vpop.f32.mrf.mxu0
      %v5363 = vadd.f32 0.0, %v5362
      %5364 = vmatmul.bf16.gmra.mxu0 %v5292
      %v5365 = vpop.f32.mrf.mxu0
      %v5366 = vadd.f32 0.0, %v5365
      %v5367 = vpop.f32.mrf.mxu0
      %v5368 = vadd.f32 0.0, %v5367
      %5369 = vmatmul.bf16.gmra.mxu0 %v5295
      %v5370 = vpop.f32.mrf.mxu0
      %v5371 = vadd.f32 0.0, %v5370
      %v5372 = vpop.f32.mrf.mxu0
      %v5373 = vadd.f32 0.0, %v5372
      %5374 = vmatmul.bf16.gmra.mxu0 %v5298
      %v5375 = vpop.f32.mrf.mxu0
      %v5376 = vadd.f32 0.0, %v5375
      %v5377 = vpop.f32.mrf.mxu0
      %v5378 = vadd.f32 0.0, %v5377
      %5379 = vmatmul.bf16.gmra.mxu0 %v5301
      %v5380 = vpop.f32.mrf.mxu0
      %v5381 = vadd.f32 0.0, %v5380
      %v5382 = vpop.f32.mrf.mxu0
      %v5383 = vadd.f32 0.0, %v5382
      %5384 = vmatmul.bf16.gmra.mxu0 %v5304
      %v5385 = vpop.f32.mrf.mxu0
      %v5386 = vadd.f32 0.0, %v5385
      %v5387 = vpop.f32.mrf.mxu0
      %v5388 = vadd.f32 0.0, %v5387
      %5389 = vmatmul.bf16.gmra.mxu0 %v5307
      %v5390 = vpop.f32.mrf.mxu0
      %v5391 = vadd.f32 0.0, %v5390
      %v5392 = vpop.f32.mrf.mxu0
      %v5393 = vadd.f32 0.0, %v5392
      %5394 = vmatmul.bf16.gmra.mxu0 %v5310
      %v5395 = vpop.f32.mrf.mxu0
      %v5396 = vadd.f32 0.0, %v5395
      %v5397 = vpop.f32.mrf.mxu0
      %v5398 = vadd.f32 0.0, %v5397
      %5399 = vmatmul.bf16.gmra.mxu0 %v5313
      %v5400 = vpop.f32.mrf.mxu0
      %v5401 = vadd.f32 0.0, %v5400
      %v5402 = vpop.f32.mrf.mxu0
      %v5403 = vadd.f32 0.0, %v5402
      %5404 = vmatmul.bf16.gmra.mxu0 %v5316
      %v5405 = vpop.f32.mrf.mxu0
      %v5406 = vadd.f32 0.0, %v5405
      %v5407 = vpop.f32.mrf.mxu0
      %v5408 = vadd.f32 0.0, %v5407
      %5409 = vdwg.mxu0
      %v5410 = vadd.f32 %v5091, %v5331
      %v5411 = vadd.f32 %v5092, %v5333
      %v5412 = vadd.f32 %v5093, %v5336
      %v5413 = vadd.f32 %v5094, %v5338
      %v5414 = vadd.f32 %v5095, %v5341
      %v5415 = vadd.f32 %v5096, %v5343
      %v5416 = vadd.f32 %v5097, %v5346
      %v5417 = vadd.f32 %v5098, %v5348
      %v5418 = vadd.f32 %v5099, %v5351
      %v5419 = vadd.f32 %v5100, %v5353
      %v5420 = vadd.f32 %v5101, %v5356
      %v5421 = vadd.f32 %v5102, %v5358
      %v5422 = vadd.f32 %v5103, %v5361
      %v5423 = vadd.f32 %v5104, %v5363
      %v5424 = vadd.f32 %v5105, %v5366
      %v5425 = vadd.f32 %v5106, %v5368
      %v5426 = vadd.f32 %v5107, %v5371
      %v5427 = vadd.f32 %v5108, %v5373
      %v5428 = vadd.f32 %v5109, %v5376
      %v5429 = vadd.f32 %v5110, %v5378
      %v5430 = vadd.f32 %v5111, %v5381
      %v5431 = vadd.f32 %v5112, %v5383
      %v5432 = vadd.f32 %v5113, %v5386
      %v5433 = vadd.f32 %v5114, %v5388
      %v5434 = vadd.f32 %v5115, %v5391
      %v5435 = vadd.f32 %v5116, %v5393
      %v5436 = vadd.f32 %v5117, %v5396
      %v5437 = vadd.f32 %v5118, %v5398
      %v5438 = vadd.f32 %v5119, %v5401
      %v5439 = vadd.f32 %v5120, %v5403
      %v5440 = vadd.f32 %v5121, %v5406
      %v5441 = vadd.f32 %v5122, %v5408
      %v5442 = vld [vmem:[%s5123 + $0x1] sm:$0xff]
      %v5443 = vld [vmem:[%s5123 + $0x9] sm:$0xff]
      %v5444 = vld [vmem:[%s5123 + $0x19] sm:$0xff]
      %v5445 = vld [vmem:[%s5123 + $0x21] sm:$0xff]
      %v5446 = vld [vmem:[%s5123 + $0x31] sm:$0xff]
      %v5447 = vld [vmem:[%s5123 + $0x39] sm:$0xff]
      %v5448 = vld [vmem:[%s5123 + $0x49] sm:$0xff]
      %v5449 = vld [vmem:[%s5123 + $0x51] sm:$0xff]
      %v5450 = vld [vmem:[%s5123 + $0x61] sm:$0xff]
      %v5451 = vld [vmem:[%s5123 + $0x69] sm:$0xff]
      %v5452 = vld [vmem:[%s5123 + $0x79] sm:$0xff]
      %v5453 = vld [vmem:[%s5123 + $0x81] sm:$0xff]
      %v5454 = vld [vmem:[%s5123 + $0x91] sm:$0xff]
      %v5455 = vld [vmem:[%s5123 + $0x99] sm:$0xff]
      %v5456 = vld [vmem:[%s5123 + $0xa9] sm:$0xff]
      %v5457 = vld [vmem:[%s5123 + $0xb1] sm:$0xff]
      %v5458 = vld [vmem:[%s5123 + $0xc1] sm:$0xff]
      %v5459 = vld [vmem:[%s5123 + $0xc9] sm:$0xff]
      %v5460 = vld [vmem:[%s5123 + $0xd9] sm:$0xff]
      %v5461 = vld [vmem:[%s5123 + $0xe1] sm:$0xff]
      %v5462 = vld [vmem:[%s5123 + $0xf1] sm:$0xff]
      %v5463 = vld [vmem:[%s5123 + $0xf9] sm:$0xff]
      %v5464 = vld [vmem:[%s5123 + $0x109] sm:$0xff]
      %v5465 = vld [vmem:[%s5123 + $0x111] sm:$0xff]
      %v5466 = vld [vmem:[%s5123 + $0x121] sm:$0xff]
      %v5467 = vld [vmem:[%s5123 + $0x129] sm:$0xff]
      %v5468 = vld [vmem:[%s5123 + $0x139] sm:$0xff]
      %v5469 = vld [vmem:[%s5123 + $0x141] sm:$0xff]
      %v5470 = vld [vmem:[%s5123 + $0x151] sm:$0xff]
      %v5471 = vld [vmem:[%s5123 + $0x159] sm:$0xff]
      %v5472 = vld [vmem:[%s5123 + $0x169] sm:$0xff]
      %v5473 = vld [vmem:[%s5123 + $0x171] sm:$0xff]
      %v5474 = vpack.c.bf16 %v5442, %v5442
      %v5475 = vpack.c.bf16 %v5443, %v5443
      %v5476 = vpack.c.bf16 %v5444, %v5444
      %v5477 = vpack.c.bf16 %v5445, %v5445
      %v5478 = vpack.c.bf16 %v5446, %v5446
      %v5479 = vpack.c.bf16 %v5447, %v5447
      %v5480 = vpack.c.bf16 %v5448, %v5448
      %v5481 = vpack.c.bf16 %v5449, %v5449
      %v5482 = vpack.c.bf16 %v5450, %v5450
      %v5483 = vpack.c.bf16 %v5451, %v5451
      %v5484 = vpack.c.bf16 %v5452, %v5452
      %v5485 = vpack.c.bf16 %v5453, %v5453
      %v5486 = vpack.c.bf16 %v5454, %v5454
      %v5487 = vpack.c.bf16 %v5455, %v5455
      %v5488 = vpack.c.bf16 %v5456, %v5456
      %v5489 = vpack.c.bf16 %v5457, %v5457
      %v5490 = vpack.c.bf16 %v5458, %v5458
      %v5491 = vpack.c.bf16 %v5459, %v5459
      %v5492 = vpack.c.bf16 %v5460, %v5460
      %v5493 = vpack.c.bf16 %v5461, %v5461
      %v5494 = vpack.c.bf16 %v5462, %v5462
      %v5495 = vpack.c.bf16 %v5463, %v5463
      %v5496 = vpack.c.bf16 %v5464, %v5464
      %v5497 = vpack.c.bf16 %v5465, %v5465
      %v5498 = vpack.c.bf16 %v5466, %v5466
      %v5499 = vpack.c.bf16 %v5467, %v5467
      %v5500 = vpack.c.bf16 %v5468, %v5468
      %v5501 = vpack.c.bf16 %v5469, %v5469
      %v5502 = vpack.c.bf16 %v5470, %v5470
      %v5503 = vpack.c.bf16 %v5471, %v5471
      %v5504 = vpack.c.bf16 %v5472, %v5472
      %v5505 = vpack.c.bf16 %v5473, %v5473
      %s5506 = scalar_lea.vmem %s3, 14
      %v5507 = vld [vmem:[%s5506] sm:$0x3]
      %v5540 = vunpack.c.l.b16 %v5474
      %v5541 = vunpack.c.l.b16 %v5475
      %v5542 = vunpack.c.l.b16 %v5476
      %v5543 = vunpack.c.l.b16 %v5477
      %v5544 = vunpack.c.l.b16 %v5478
      %v5545 = vunpack.c.l.b16 %v5479
      %v5546 = vunpack.c.l.b16 %v5480
      %v5547 = vunpack.c.l.b16 %v5481
      %v5548 = vunpack.c.l.b16 %v5482
      %v5549 = vunpack.c.l.b16 %v5483
      %v5550 = vunpack.c.l.b16 %v5484
      %v5551 = vunpack.c.l.b16 %v5485
      %v5552 = vunpack.c.l.b16 %v5486
      %v5553 = vunpack.c.l.b16 %v5487
      %v5554 = vunpack.c.l.b16 %v5488
      %v5555 = vunpack.c.l.b16 %v5489
      %v5556 = vunpack.c.l.b16 %v5490
      %v5557 = vunpack.c.l.b16 %v5491
      %v5558 = vunpack.c.l.b16 %v5492
      %v5559 = vunpack.c.l.b16 %v5493
      %v5560 = vunpack.c.l.b16 %v5494
      %v5561 = vunpack.c.l.b16 %v5495
      %v5562 = vunpack.c.l.b16 %v5496
      %v5563 = vunpack.c.l.b16 %v5497
      %v5564 = vunpack.c.l.b16 %v5498
      %v5565 = vunpack.c.l.b16 %v5499
      %v5566 = vunpack.c.l.b16 %v5500
      %v5567 = vunpack.c.l.b16 %v5501
      %v5568 = vunpack.c.l.b16 %v5502
      %v5569 = vunpack.c.l.b16 %v5503
      %v5570 = vunpack.c.l.b16 %v5504
      %v5571 = vunpack.c.l.b16 %v5505
      %v5572 = vpack.c.b16 %v5541, %v5540
      %v5573 = vpack.c.b16 %v5543, %v5542
      %v5574 = vpack.c.b16 %v5545, %v5544
      %v5575 = vpack.c.b16 %v5547, %v5546
      %v5576 = vpack.c.b16 %v5549, %v5548
      %v5577 = vpack.c.b16 %v5551, %v5550
      %v5578 = vpack.c.b16 %v5553, %v5552
      %v5579 = vpack.c.b16 %v5555, %v5554
      %v5580 = vpack.c.b16 %v5557, %v5556
      %v5581 = vpack.c.b16 %v5559, %v5558
      %v5582 = vpack.c.b16 %v5561, %v5560
      %v5583 = vpack.c.b16 %v5563, %v5562
      %v5584 = vpack.c.b16 %v5565, %v5564
      %v5585 = vpack.c.b16 %v5567, %v5566
      %v5586 = vpack.c.b16 %v5569, %v5568
      %v5587 = vpack.c.b16 %v5571, %v5570
      %v5589 = vsel %vm226, %v5572, 0
      %v5592 = vsel %vm226, %v5573, 0
      %v5595 = vsel %vm226, %v5574, 0
      %v5598 = vsel %vm226, %v5575, 0
      %v5601 = vsel %vm226, %v5576, 0
      %v5604 = vsel %vm226, %v5577, 0
      %v5607 = vsel %vm226, %v5578, 0
      %v5610 = vsel %vm226, %v5579, 0
      %v5613 = vsel %vm226, %v5580, 0
      %v5616 = vsel %vm226, %v5581, 0
      %v5619 = vsel %vm226, %v5582, 0
      %v5622 = vsel %vm226, %v5583, 0
      %v5625 = vsel %vm226, %v5584, 0
      %v5628 = vsel %vm226, %v5585, 0
      %v5631 = vsel %vm226, %v5586, 0
      %v5634 = vsel %vm226, %v5587, 0
      %v5637 = vsel %vm596, %v5507, 0
      %5639 = vmatpush.bf16.msra.mxu0 0
      %5640 = vmatpush.bf16.msra.mxu0 0
      %5641 = vmatpush.bf16.msra.mxu0 0
      %5642 = vmatpush.bf16.msra.mxu0 0
      %5643 = vmatpush.bf16.msra.mxu0 0
      %5644 = vmatpush.bf16.msra.mxu0 0
      %5645 = vmatpush.bf16.msra.mxu0 0
      %5646 = vmatpush.bf16.msra.mxu0 %v5637
      %5647 = vmatmul.bf16.gmra.mxu0 %v5589
      %v5648 = vpop.f32.mrf.mxu0
      %v5649 = vadd.f32 0.0, %v5648
      %v5650 = vpop.f32.mrf.mxu0
      %v5651 = vadd.f32 0.0, %v5650
      %5652 = vmatmul.bf16.gmra.mxu0 %v5592
      %v5653 = vpop.f32.mrf.mxu0
      %v5654 = vadd.f32 0.0, %v5653
      %v5655 = vpop.f32.mrf.mxu0
      %v5656 = vadd.f32 0.0, %v5655
      %5657 = vmatmul.bf16.gmra.mxu0 %v5595
      %v5658 = vpop.f32.mrf.mxu0
      %v5659 = vadd.f32 0.0, %v5658
      %v5660 = vpop.f32.mrf.mxu0
      %v5661 = vadd.f32 0.0, %v5660
      %5662 = vmatmul.bf16.gmra.mxu0 %v5598
      %v5663 = vpop.f32.mrf.mxu0
      %v5664 = vadd.f32 0.0, %v5663
      %v5665 = vpop.f32.mrf.mxu0
      %v5666 = vadd.f32 0.0, %v5665
      %5667 = vmatmul.bf16.gmra.mxu0 %v5601
      %v5668 = vpop.f32.mrf.mxu0
      %v5669 = vadd.f32 0.0, %v5668
      %v5670 = vpop.f32.mrf.mxu0
      %v5671 = vadd.f32 0.0, %v5670
      %5672 = vmatmul.bf16.gmra.mxu0 %v5604
      %v5673 = vpop.f32.mrf.mxu0
      %v5674 = vadd.f32 0.0, %v5673
      %v5675 = vpop.f32.mrf.mxu0
      %v5676 = vadd.f32 0.0, %v5675
      %5677 = vmatmul.bf16.gmra.mxu0 %v5607
      %v5678 = vpop.f32.mrf.mxu0
      %v5679 = vadd.f32 0.0, %v5678
      %v5680 = vpop.f32.mrf.mxu0
      %v5681 = vadd.f32 0.0, %v5680
      %5682 = vmatmul.bf16.gmra.mxu0 %v5610
      %v5683 = vpop.f32.mrf.mxu0
      %v5684 = vadd.f32 0.0, %v5683
      %v5685 = vpop.f32.mrf.mxu0
      %v5686 = vadd.f32 0.0, %v5685
      %5687 = vmatmul.bf16.gmra.mxu0 %v5613
      %v5688 = vpop.f32.mrf.mxu0
      %v5689 = vadd.f32 0.0, %v5688
      %v5690 = vpop.f32.mrf.mxu0
      %v5691 = vadd.f32 0.0, %v5690
      %5692 = vmatmul.bf16.gmra.mxu0 %v5616
      %v5693 = vpop.f32.mrf.mxu0
      %v5694 = vadd.f32 0.0, %v5693
      %v5695 = vpop.f32.mrf.mxu0
      %v5696 = vadd.f32 0.0, %v5695
      %5697 = vmatmul.bf16.gmra.mxu0 %v5619
      %v5698 = vpop.f32.mrf.mxu0
      %v5699 = vadd.f32 0.0, %v5698
      %v5700 = vpop.f32.mrf.mxu0
      %v5701 = vadd.f32 0.0, %v5700
      %5702 = vmatmul.bf16.gmra.mxu0 %v5622
      %v5703 = vpop.f32.mrf.mxu0
      %v5704 = vadd.f32 0.0, %v5703
      %v5705 = vpop.f32.mrf.mxu0
      %v5706 = vadd.f32 0.0, %v5705
      %5707 = vmatmul.bf16.gmra.mxu0 %v5625
      %v5708 = vpop.f32.mrf.mxu0
      %v5709 = vadd.f32 0.0, %v5708
      %v5710 = vpop.f32.mrf.mxu0
      %v5711 = vadd.f32 0.0, %v5710
      %5712 = vmatmul.bf16.gmra.mxu0 %v5628
      %v5713 = vpop.f32.mrf.mxu0
      %v5714 = vadd.f32 0.0, %v5713
      %v5715 = vpop.f32.mrf.mxu0
      %v5716 = vadd.f32 0.0, %v5715
      %5717 = vmatmul.bf16.gmra.mxu0 %v5631
      %v5718 = vpop.f32.mrf.mxu0
      %v5719 = vadd.f32 0.0, %v5718
      %v5720 = vpop.f32.mrf.mxu0
      %v5721 = vadd.f32 0.0, %v5720
      %5722 = vmatmul.bf16.gmra.mxu0 %v5634
      %v5723 = vpop.f32.mrf.mxu0
      %v5724 = vadd.f32 0.0, %v5723
      %v5725 = vpop.f32.mrf.mxu0
      %v5726 = vadd.f32 0.0, %v5725
      %5727 = vdwg.mxu0
      %v5728 = vadd.f32 %v5410, %v5649
      %v5729 = vadd.f32 %v5411, %v5651
      %v5730 = vadd.f32 %v5412, %v5654
      %v5731 = vadd.f32 %v5413, %v5656
      %v5732 = vadd.f32 %v5414, %v5659
      %v5733 = vadd.f32 %v5415, %v5661
      %v5734 = vadd.f32 %v5416, %v5664
      %v5735 = vadd.f32 %v5417, %v5666
      %v5736 = vadd.f32 %v5418, %v5669
      %v5737 = vadd.f32 %v5419, %v5671
      %v5738 = vadd.f32 %v5420, %v5674
      %v5739 = vadd.f32 %v5421, %v5676
      %v5740 = vadd.f32 %v5422, %v5679
      %v5741 = vadd.f32 %v5423, %v5681
      %v5742 = vadd.f32 %v5424, %v5684
      %v5743 = vadd.f32 %v5425, %v5686
      %v5744 = vadd.f32 %v5426, %v5689
      %v5745 = vadd.f32 %v5427, %v5691
      %v5746 = vadd.f32 %v5428, %v5694
      %v5747 = vadd.f32 %v5429, %v5696
      %v5748 = vadd.f32 %v5430, %v5699
      %v5749 = vadd.f32 %v5431, %v5701
      %v5750 = vadd.f32 %v5432, %v5704
      %v5751 = vadd.f32 %v5433, %v5706
      %v5752 = vadd.f32 %v5434, %v5709
      %v5753 = vadd.f32 %v5435, %v5711
      %v5754 = vadd.f32 %v5436, %v5714
      %v5755 = vadd.f32 %v5437, %v5716
      %v5756 = vadd.f32 %v5438, %v5719
      %v5757 = vadd.f32 %v5439, %v5721
      %v5758 = vadd.f32 %v5440, %v5724
      %v5759 = vadd.f32 %v5441, %v5726
      %v5760 = vld [vmem:[%s5123 + $0x2] sm:$0xff]
      %v5761 = vld [vmem:[%s5123 + $0xa] sm:$0xff]
      %v5762 = vld [vmem:[%s5123 + $0x1a] sm:$0xff]
      %v5763 = vld [vmem:[%s5123 + $0x22] sm:$0xff]
      %v5764 = vld [vmem:[%s5123 + $0x32] sm:$0xff]
      %v5765 = vld [vmem:[%s5123 + $0x3a] sm:$0xff]
      %v5766 = vld [vmem:[%s5123 + $0x4a] sm:$0xff]
      %v5767 = vld [vmem:[%s5123 + $0x52] sm:$0xff]
      %v5768 = vld [vmem:[%s5123 + $0x62] sm:$0xff]
      %v5769 = vld [vmem:[%s5123 + $0x6a] sm:$0xff]
      %v5770 = vld [vmem:[%s5123 + $0x7a] sm:$0xff]
      %v5771 = vld [vmem:[%s5123 + $0x82] sm:$0xff]
      %v5772 = vld [vmem:[%s5123 + $0x92] sm:$0xff]
      %v5773 = vld [vmem:[%s5123 + $0x9a] sm:$0xff]
      %v5774 = vld [vmem:[%s5123 + $0xaa] sm:$0xff]
      %v5775 = vld [vmem:[%s5123 + $0xb2] sm:$0xff]
      %v5776 = vld [vmem:[%s5123 + $0xc2] sm:$0xff]
      %v5777 = vld [vmem:[%s5123 + $0xca] sm:$0xff]
      %v5778 = vld [vmem:[%s5123 + $0xda] sm:$0xff]
      %v5779 = vld [vmem:[%s5123 + $0xe2] sm:$0xff]
      %v5780 = vld [vmem:[%s5123 + $0xf2] sm:$0xff]
      %v5781 = vld [vmem:[%s5123 + $0xfa] sm:$0xff]
      %v5782 = vld [vmem:[%s5123 + $0x10a] sm:$0xff]
      %v5783 = vld [vmem:[%s5123 + $0x112] sm:$0xff]
      %v5784 = vld [vmem:[%s5123 + $0x122] sm:$0xff]
      %v5785 = vld [vmem:[%s5123 + $0x12a] sm:$0xff]
      %v5786 = vld [vmem:[%s5123 + $0x13a] sm:$0xff]
      %v5787 = vld [vmem:[%s5123 + $0x142] sm:$0xff]
      %v5788 = vld [vmem:[%s5123 + $0x152] sm:$0xff]
      %v5789 = vld [vmem:[%s5123 + $0x15a] sm:$0xff]
      %v5790 = vld [vmem:[%s5123 + $0x16a] sm:$0xff]
      %v5791 = vld [vmem:[%s5123 + $0x172] sm:$0xff]
      %v5792 = vpack.c.bf16 %v5760, %v5760
      %v5793 = vpack.c.bf16 %v5761, %v5761
      %v5794 = vpack.c.bf16 %v5762, %v5762
      %v5795 = vpack.c.bf16 %v5763, %v5763
      %v5796 = vpack.c.bf16 %v5764, %v5764
      %v5797 = vpack.c.bf16 %v5765, %v5765
      %v5798 = vpack.c.bf16 %v5766, %v5766
      %v5799 = vpack.c.bf16 %v5767, %v5767
      %v5800 = vpack.c.bf16 %v5768, %v5768
      %v5801 = vpack.c.bf16 %v5769, %v5769
      %v5802 = vpack.c.bf16 %v5770, %v5770
      %v5803 = vpack.c.bf16 %v5771, %v5771
      %v5804 = vpack.c.bf16 %v5772, %v5772
      %v5805 = vpack.c.bf16 %v5773, %v5773
      %v5806 = vpack.c.bf16 %v5774, %v5774
      %v5807 = vpack.c.bf16 %v5775, %v5775
      %v5808 = vpack.c.bf16 %v5776, %v5776
      %v5809 = vpack.c.bf16 %v5777, %v5777
      %v5810 = vpack.c.bf16 %v5778, %v5778
      %v5811 = vpack.c.bf16 %v5779, %v5779
      %v5812 = vpack.c.bf16 %v5780, %v5780
      %v5813 = vpack.c.bf16 %v5781, %v5781
      %v5814 = vpack.c.bf16 %v5782, %v5782
      %v5815 = vpack.c.bf16 %v5783, %v5783
      %v5816 = vpack.c.bf16 %v5784, %v5784
      %v5817 = vpack.c.bf16 %v5785, %v5785
      %v5818 = vpack.c.bf16 %v5786, %v5786
      %v5819 = vpack.c.bf16 %v5787, %v5787
      %v5820 = vpack.c.bf16 %v5788, %v5788
      %v5821 = vpack.c.bf16 %v5789, %v5789
      %v5822 = vpack.c.bf16 %v5790, %v5790
      %v5823 = vpack.c.bf16 %v5791, %v5791
      %s5824 = scalar_lea.vmem %s3, 16
      %v5825 = vld [vmem:[%s5824] sm:$0x3]
      %v5858 = vunpack.c.l.b16 %v5792
      %v5859 = vunpack.c.l.b16 %v5793
      %v5860 = vunpack.c.l.b16 %v5794
      %v5861 = vunpack.c.l.b16 %v5795
      %v5862 = vunpack.c.l.b16 %v5796
      %v5863 = vunpack.c.l.b16 %v5797
      %v5864 = vunpack.c.l.b16 %v5798
      %v5865 = vunpack.c.l.b16 %v5799
      %v5866 = vunpack.c.l.b16 %v5800
      %v5867 = vunpack.c.l.b16 %v5801
      %v5868 = vunpack.c.l.b16 %v5802
      %v5869 = vunpack.c.l.b16 %v5803
      %v5870 = vunpack.c.l.b16 %v5804
      %v5871 = vunpack.c.l.b16 %v5805
      %v5872 = vunpack.c.l.b16 %v5806
      %v5873 = vunpack.c.l.b16 %v5807
      %v5874 = vunpack.c.l.b16 %v5808
      %v5875 = vunpack.c.l.b16 %v5809
      %v5876 = vunpack.c.l.b16 %v5810
      %v5877 = vunpack.c.l.b16 %v5811
      %v5878 = vunpack.c.l.b16 %v5812
      %v5879 = vunpack.c.l.b16 %v5813
      %v5880 = vunpack.c.l.b16 %v5814
      %v5881 = vunpack.c.l.b16 %v5815
      %v5882 = vunpack.c.l.b16 %v5816
      %v5883 = vunpack.c.l.b16 %v5817
      %v5884 = vunpack.c.l.b16 %v5818
      %v5885 = vunpack.c.l.b16 %v5819
      %v5886 = vunpack.c.l.b16 %v5820
      %v5887 = vunpack.c.l.b16 %v5821
      %v5888 = vunpack.c.l.b16 %v5822
      %v5889 = vunpack.c.l.b16 %v5823
      %v5890 = vpack.c.b16 %v5859, %v5858
      %v5891 = vpack.c.b16 %v5861, %v5860
      %v5892 = vpack.c.b16 %v5863, %v5862
      %v5893 = vpack.c.b16 %v5865, %v5864
      %v5894 = vpack.c.b16 %v5867, %v5866
      %v5895 = vpack.c.b16 %v5869, %v5868
      %v5896 = vpack.c.b16 %v5871, %v5870
      %v5897 = vpack.c.b16 %v5873, %v5872
      %v5898 = vpack.c.b16 %v5875, %v5874
      %v5899 = vpack.c.b16 %v5877, %v5876
      %v5900 = vpack.c.b16 %v5879, %v5878
      %v5901 = vpack.c.b16 %v5881, %v5880
      %v5902 = vpack.c.b16 %v5883, %v5882
      %v5903 = vpack.c.b16 %v5885, %v5884
      %v5904 = vpack.c.b16 %v5887, %v5886
      %v5905 = vpack.c.b16 %v5889, %v5888
      %v5907 = vsel %vm226, %v5890, 0
      %v5910 = vsel %vm226, %v5891, 0
      %v5913 = vsel %vm226, %v5892, 0
      %v5916 = vsel %vm226, %v5893, 0
      %v5919 = vsel %vm226, %v5894, 0
      %v5922 = vsel %vm226, %v5895, 0
      %v5925 = vsel %vm226, %v5896, 0
      %v5928 = vsel %vm226, %v5897, 0
      %v5931 = vsel %vm226, %v5898, 0
      %v5934 = vsel %vm226, %v5899, 0
      %v5937 = vsel %vm226, %v5900, 0
      %v5940 = vsel %vm226, %v5901, 0
      %v5943 = vsel %vm226, %v5902, 0
      %v5946 = vsel %vm226, %v5903, 0
      %v5949 = vsel %vm226, %v5904, 0
      %v5952 = vsel %vm226, %v5905, 0
      %v5955 = vsel %vm596, %v5825, 0
      %5957 = vmatpush.bf16.msra.mxu0 0
      %5958 = vmatpush.bf16.msra.mxu0 0
      %5959 = vmatpush.bf16.msra.mxu0 0
      %5960 = vmatpush.bf16.msra.mxu0 0
      %5961 = vmatpush.bf16.msra.mxu0 0
      %5962 = vmatpush.bf16.msra.mxu0 0
      %5963 = vmatpush.bf16.msra.mxu0 0
      %5964 = vmatpush.bf16.msra.mxu0 %v5955
      %5965 = vmatmul.bf16.gmra.mxu0 %v5907
      %v5966 = vpop.f32.mrf.mxu0
      %v5967 = vadd.f32 0.0, %v5966
      %v5968 = vpop.f32.mrf.mxu0
      %v5969 = vadd.f32 0.0, %v5968
      %5970 = vmatmul.bf16.gmra.mxu0 %v5910
      %v5971 = vpop.f32.mrf.mxu0
      %v5972 = vadd.f32 0.0, %v5971
      %v5973 = vpop.f32.mrf.mxu0
      %v5974 = vadd.f32 0.0, %v5973
      %5975 = vmatmul.bf16.gmra.mxu0 %v5913
      %v5976 = vpop.f32.mrf.mxu0
      %v5977 = vadd.f32 0.0, %v5976
      %v5978 = vpop.f32.mrf.mxu0
      %v5979 = vadd.f32 0.0, %v5978
      %5980 = vmatmul.bf16.gmra.mxu0 %v5916
      %v5981 = vpop.f32.mrf.mxu0
      %v5982 = vadd.f32 0.0, %v5981
      %v5983 = vpop.f32.mrf.mxu0
      %v5984 = vadd.f32 0.0, %v5983
      %5985 = vmatmul.bf16.gmra.mxu0 %v5919
      %v5986 = vpop.f32.mrf.mxu0
      %v5987 = vadd.f32 0.0, %v5986
      %v5988 = vpop.f32.mrf.mxu0
      %v5989 = vadd.f32 0.0, %v5988
      %5990 = vmatmul.bf16.gmra.mxu0 %v5922
      %v5991 = vpop.f32.mrf.mxu0
      %v5992 = vadd.f32 0.0, %v5991
      %v5993 = vpop.f32.mrf.mxu0
      %v5994 = vadd.f32 0.0, %v5993
      %5995 = vmatmul.bf16.gmra.mxu0 %v5925
      %v5996 = vpop.f32.mrf.mxu0
      %v5997 = vadd.f32 0.0, %v5996
      %v5998 = vpop.f32.mrf.mxu0
      %v5999 = vadd.f32 0.0, %v5998
      %6000 = vmatmul.bf16.gmra.mxu0 %v5928
      %v6001 = vpop.f32.mrf.mxu0
      %v6002 = vadd.f32 0.0, %v6001
      %v6003 = vpop.f32.mrf.mxu0
      %v6004 = vadd.f32 0.0, %v6003
      %6005 = vmatmul.bf16.gmra.mxu0 %v5931
      %v6006 = vpop.f32.mrf.mxu0
      %v6007 = vadd.f32 0.0, %v6006
      %v6008 = vpop.f32.mrf.mxu0
      %v6009 = vadd.f32 0.0, %v6008
      %6010 = vmatmul.bf16.gmra.mxu0 %v5934
      %v6011 = vpop.f32.mrf.mxu0
      %v6012 = vadd.f32 0.0, %v6011
      %v6013 = vpop.f32.mrf.mxu0
      %v6014 = vadd.f32 0.0, %v6013
      %6015 = vmatmul.bf16.gmra.mxu0 %v5937
      %v6016 = vpop.f32.mrf.mxu0
      %v6017 = vadd.f32 0.0, %v6016
      %v6018 = vpop.f32.mrf.mxu0
      %v6019 = vadd.f32 0.0, %v6018
      %6020 = vmatmul.bf16.gmra.mxu0 %v5940
      %v6021 = vpop.f32.mrf.mxu0
      %v6022 = vadd.f32 0.0, %v6021
      %v6023 = vpop.f32.mrf.mxu0
      %v6024 = vadd.f32 0.0, %v6023
      %6025 = vmatmul.bf16.gmra.mxu0 %v5943
      %v6026 = vpop.f32.mrf.mxu0
      %v6027 = vadd.f32 0.0, %v6026
      %v6028 = vpop.f32.mrf.mxu0
      %v6029 = vadd.f32 0.0, %v6028
      %6030 = vmatmul.bf16.gmra.mxu0 %v5946
      %v6031 = vpop.f32.mrf.mxu0
      %v6032 = vadd.f32 0.0, %v6031
      %v6033 = vpop.f32.mrf.mxu0
      %v6034 = vadd.f32 0.0, %v6033
      %6035 = vmatmul.bf16.gmra.mxu0 %v5949
      %v6036 = vpop.f32.mrf.mxu0
      %v6037 = vadd.f32 0.0, %v6036
      %v6038 = vpop.f32.mrf.mxu0
      %v6039 = vadd.f32 0.0, %v6038
      %6040 = vmatmul.bf16.gmra.mxu0 %v5952
      %v6041 = vpop.f32.mrf.mxu0
      %v6042 = vadd.f32 0.0, %v6041
      %v6043 = vpop.f32.mrf.mxu0
      %v6044 = vadd.f32 0.0, %v6043
      %6045 = vdwg.mxu0
      %v6046 = vadd.f32 %v5728, %v5967
      %v6047 = vadd.f32 %v5729, %v5969
      %v6048 = vadd.f32 %v5730, %v5972
      %v6049 = vadd.f32 %v5731, %v5974
      %v6050 = vadd.f32 %v5732, %v5977
      %v6051 = vadd.f32 %v5733, %v5979
      %v6052 = vadd.f32 %v5734, %v5982
      %v6053 = vadd.f32 %v5735, %v5984
      %v6054 = vadd.f32 %v5736, %v5987
      %v6055 = vadd.f32 %v5737, %v5989
      %v6056 = vadd.f32 %v5738, %v5992
      %v6057 = vadd.f32 %v5739, %v5994
      %v6058 = vadd.f32 %v5740, %v5997
      %v6059 = vadd.f32 %v5741, %v5999
      %v6060 = vadd.f32 %v5742, %v6002
      %v6061 = vadd.f32 %v5743, %v6004
      %v6062 = vadd.f32 %v5744, %v6007
      %v6063 = vadd.f32 %v5745, %v6009
      %v6064 = vadd.f32 %v5746, %v6012
      %v6065 = vadd.f32 %v5747, %v6014
      %v6066 = vadd.f32 %v5748, %v6017
      %v6067 = vadd.f32 %v5749, %v6019
      %v6068 = vadd.f32 %v5750, %v6022
      %v6069 = vadd.f32 %v5751, %v6024
      %v6070 = vadd.f32 %v5752, %v6027
      %v6071 = vadd.f32 %v5753, %v6029
      %v6072 = vadd.f32 %v5754, %v6032
      %v6073 = vadd.f32 %v5755, %v6034
      %v6074 = vadd.f32 %v5756, %v6037
      %v6075 = vadd.f32 %v5757, %v6039
      %v6076 = vadd.f32 %v5758, %v6042
      %v6077 = vadd.f32 %v5759, %v6044
      %v6078 = vld [vmem:[%s4] sm:$0x1]
      %v6080 = vperm.slane %v6078, 0
      %v6082 = vadd.f32 %v6046, %v6080
      %v6083 = vadd.f32 %v6047, %v6080
      %v6084 = vadd.f32 %v6048, %v6080
      %v6085 = vadd.f32 %v6049, %v6080
      %v6086 = vadd.f32 %v6050, %v6080
      %v6087 = vadd.f32 %v6051, %v6080
      %v6088 = vadd.f32 %v6052, %v6080
      %v6089 = vadd.f32 %v6053, %v6080
      %v6090 = vadd.f32 %v6054, %v6080
      %v6091 = vadd.f32 %v6055, %v6080
      %v6092 = vadd.f32 %v6056, %v6080
      %v6093 = vadd.f32 %v6057, %v6080
      %v6094 = vadd.f32 %v6058, %v6080
      %v6095 = vadd.f32 %v6059, %v6080
      %v6096 = vadd.f32 %v6060, %v6080
      %v6097 = vadd.f32 %v6061, %v6080
      %v6098 = vadd.f32 %v6062, %v6080
      %v6099 = vadd.f32 %v6063, %v6080
      %v6100 = vadd.f32 %v6064, %v6080
      %v6101 = vadd.f32 %v6065, %v6080
      %v6102 = vadd.f32 %v6066, %v6080
      %v6103 = vadd.f32 %v6067, %v6080
      %v6104 = vadd.f32 %v6068, %v6080
      %v6105 = vadd.f32 %v6069, %v6080
      %v6106 = vadd.f32 %v6070, %v6080
      %v6107 = vadd.f32 %v6071, %v6080
      %v6108 = vadd.f32 %v6072, %v6080
      %v6109 = vadd.f32 %v6073, %v6080
      %v6110 = vadd.f32 %v6074, %v6080
      %v6111 = vadd.f32 %v6075, %v6080
      %v6112 = vadd.f32 %v6076, %v6080
      %v6113 = vadd.f32 %v6077, %v6080
      %v6114 = vld [vmem:[%s219] sm:$0xff]
      %v6115 = vld [vmem:[%s219 + $0x8] sm:$0xff]
      %v6116 = vld [vmem:[%s219 + $0x10] sm:$0xff]
      %v6117 = vld [vmem:[%s219 + $0x18] sm:$0xff]
      %v6118 = vld [vmem:[%s219 + $0x20] sm:$0xff]
      %v6119 = vld [vmem:[%s219 + $0x28] sm:$0xff]
      %v6120 = vld [vmem:[%s219 + $0x30] sm:$0xff]
      %v6121 = vld [vmem:[%s219 + $0x38] sm:$0xff]
      %v6122 = vld [vmem:[%s219 + $0x40] sm:$0xff]
      %v6123 = vld [vmem:[%s219 + $0x48] sm:$0xff]
      %v6124 = vld [vmem:[%s219 + $0x50] sm:$0xff]
      %v6125 = vld [vmem:[%s219 + $0x58] sm:$0xff]
      %v6126 = vld [vmem:[%s219 + $0x60] sm:$0xff]
      %v6127 = vld [vmem:[%s219 + $0x68] sm:$0xff]
      %v6128 = vld [vmem:[%s219 + $0x70] sm:$0xff]
      %v6129 = vld [vmem:[%s219 + $0x78] sm:$0xff]
      %v6130 = vld [vmem:[%s219 + $0x80] sm:$0xff]
      %v6131 = vld [vmem:[%s219 + $0x88] sm:$0xff]
      %v6132 = vld [vmem:[%s219 + $0x90] sm:$0xff]
      %v6133 = vld [vmem:[%s219 + $0x98] sm:$0xff]
      %v6134 = vld [vmem:[%s219 + $0xa0] sm:$0xff]
      %v6135 = vld [vmem:[%s219 + $0xa8] sm:$0xff]
      %v6136 = vld [vmem:[%s219 + $0xb0] sm:$0xff]
      %v6137 = vld [vmem:[%s219 + $0xb8] sm:$0xff]
      %v6138 = vld [vmem:[%s219 + $0xc0] sm:$0xff]
      %v6139 = vld [vmem:[%s219 + $0xc8] sm:$0xff]
      %v6140 = vld [vmem:[%s219 + $0xd0] sm:$0xff]
      %v6141 = vld [vmem:[%s219 + $0xd8] sm:$0xff]
      %v6142 = vld [vmem:[%s219 + $0xe0] sm:$0xff]
      %v6143 = vld [vmem:[%s219 + $0xe8] sm:$0xff]
      %v6144 = vld [vmem:[%s219 + $0xf0] sm:$0xff]
      %v6145 = vld [vmem:[%s219 + $0xf8] sm:$0xff]
      %v6146 = vadd.f32 %v6082, %v6114
      %v6147 = vadd.f32 %v6083, %v6115
      %v6148 = vadd.f32 %v6084, %v6116
      %v6149 = vadd.f32 %v6085, %v6117
      %v6150 = vadd.f32 %v6086, %v6118
      %v6151 = vadd.f32 %v6087, %v6119
      %v6152 = vadd.f32 %v6088, %v6120
      %v6153 = vadd.f32 %v6089, %v6121
      %v6154 = vadd.f32 %v6090, %v6122
      %v6155 = vadd.f32 %v6091, %v6123
      %v6156 = vadd.f32 %v6092, %v6124
      %v6157 = vadd.f32 %v6093, %v6125
      %v6158 = vadd.f32 %v6094, %v6126
      %v6159 = vadd.f32 %v6095, %v6127
      %v6160 = vadd.f32 %v6096, %v6128
      %v6161 = vadd.f32 %v6097, %v6129
      %v6162 = vadd.f32 %v6098, %v6130
      %v6163 = vadd.f32 %v6099, %v6131
      %v6164 = vadd.f32 %v6100, %v6132
      %v6165 = vadd.f32 %v6101, %v6133
      %v6166 = vadd.f32 %v6102, %v6134
      %v6167 = vadd.f32 %v6103, %v6135
      %v6168 = vadd.f32 %v6104, %v6136
      %v6169 = vadd.f32 %v6105, %v6137
      %v6170 = vadd.f32 %v6106, %v6138
      %v6171 = vadd.f32 %v6107, %v6139
      %v6172 = vadd.f32 %v6108, %v6140
      %v6173 = vadd.f32 %v6109, %v6141
      %v6174 = vadd.f32 %v6110, %v6142
      %v6175 = vadd.f32 %v6111, %v6143
      %v6176 = vadd.f32 %v6112, %v6144
      %v6177 = vadd.f32 %v6113, %v6145
      %v6178 = vmax.f32 %v6146, 0.0
      %v6179 = vmax.f32 %v6147, 0.0
      %v6180 = vmax.f32 %v6148, 0.0
      %v6181 = vmax.f32 %v6149, 0.0
      %v6182 = vmax.f32 %v6150, 0.0
      %v6183 = vmax.f32 %v6151, 0.0
      %v6184 = vmax.f32 %v6152, 0.0
      %v6185 = vmax.f32 %v6153, 0.0
      %v6186 = vmax.f32 %v6154, 0.0
      %v6187 = vmax.f32 %v6155, 0.0
      %v6188 = vmax.f32 %v6156, 0.0
      %v6189 = vmax.f32 %v6157, 0.0
      %v6190 = vmax.f32 %v6158, 0.0
      %v6191 = vmax.f32 %v6159, 0.0
      %v6192 = vmax.f32 %v6160, 0.0
      %v6193 = vmax.f32 %v6161, 0.0
      %v6194 = vmax.f32 %v6162, 0.0
      %v6195 = vmax.f32 %v6163, 0.0
      %v6196 = vmax.f32 %v6164, 0.0
      %v6197 = vmax.f32 %v6165, 0.0
      %v6198 = vmax.f32 %v6166, 0.0
      %v6199 = vmax.f32 %v6167, 0.0
      %v6200 = vmax.f32 %v6168, 0.0
      %v6201 = vmax.f32 %v6169, 0.0
      %v6202 = vmax.f32 %v6170, 0.0
      %v6203 = vmax.f32 %v6171, 0.0
      %v6204 = vmax.f32 %v6172, 0.0
      %v6205 = vmax.f32 %v6173, 0.0
      %v6206 = vmax.f32 %v6174, 0.0
      %v6207 = vmax.f32 %v6175, 0.0
      %v6208 = vmax.f32 %v6176, 0.0
      %v6209 = vmax.f32 %v6177, 0.0
      %6210 = vst.msk [vmem:[%s224] sm:$0xff] %vm226, %v6178
      %6211 = vst.msk [vmem:[%s224 + $0x8] sm:$0xff] %vm226, %v6179
      %6212 = vst.msk [vmem:[%s224 + $0x10] sm:$0xff] %vm226, %v6180
      %6213 = vst.msk [vmem:[%s224 + $0x18] sm:$0xff] %vm226, %v6181
      %6214 = vst.msk [vmem:[%s224 + $0x20] sm:$0xff] %vm226, %v6182
      %6215 = vst.msk [vmem:[%s224 + $0x28] sm:$0xff] %vm226, %v6183
      %6216 = vst.msk [vmem:[%s224 + $0x30] sm:$0xff] %vm226, %v6184
      %6217 = vst.msk [vmem:[%s224 + $0x38] sm:$0xff] %vm226, %v6185
      %6218 = vst.msk [vmem:[%s224 + $0x40] sm:$0xff] %vm226, %v6186
      %6219 = vst.msk [vmem:[%s224 + $0x48] sm:$0xff] %vm226, %v6187
      %6220 = vst.msk [vmem:[%s224 + $0x50] sm:$0xff] %vm226, %v6188
      %6221 = vst.msk [vmem:[%s224 + $0x58] sm:$0xff] %vm226, %v6189
      %6222 = vst.msk [vmem:[%s224 + $0x60] sm:$0xff] %vm226, %v6190
      %6223 = vst.msk [vmem:[%s224 + $0x68] sm:$0xff] %vm226, %v6191
      %6224 = vst.msk [vmem:[%s224 + $0x70] sm:$0xff] %vm226, %v6192
      %6225 = vst.msk [vmem:[%s224 + $0x78] sm:$0xff] %vm226, %v6193
      %6226 = vst.msk [vmem:[%s224 + $0x80] sm:$0xff] %vm226, %v6194
      %6227 = vst.msk [vmem:[%s224 + $0x88] sm:$0xff] %vm226, %v6195
      %6228 = vst.msk [vmem:[%s224 + $0x90] sm:$0xff] %vm226, %v6196
      %6229 = vst.msk [vmem:[%s224 + $0x98] sm:$0xff] %vm226, %v6197
      %6230 = vst.msk [vmem:[%s224 + $0xa0] sm:$0xff] %vm226, %v6198
      %6231 = vst.msk [vmem:[%s224 + $0xa8] sm:$0xff] %vm226, %v6199
      %6232 = vst.msk [vmem:[%s224 + $0xb0] sm:$0xff] %vm226, %v6200
      %6233 = vst.msk [vmem:[%s224 + $0xb8] sm:$0xff] %vm226, %v6201
      %6234 = vst.msk [vmem:[%s224 + $0xc0] sm:$0xff] %vm226, %v6202
      %6235 = vst.msk [vmem:[%s224 + $0xc8] sm:$0xff] %vm226, %v6203
      %6236 = vst.msk [vmem:[%s224 + $0xd0] sm:$0xff] %vm226, %v6204
      %6237 = vst.msk [vmem:[%s224 + $0xd8] sm:$0xff] %vm226, %v6205
      %6238 = vst.msk [vmem:[%s224 + $0xe0] sm:$0xff] %vm226, %v6206
      %6239 = vst.msk [vmem:[%s224 + $0xe8] sm:$0xff] %vm226, %v6207
      %6240 = vst.msk [vmem:[%s224 + $0xf0] sm:$0xff] %vm226, %v6208
      %6241 = vst.msk [vmem:[%s224 + $0xf8] sm:$0xff] %vm226, %v6209
      %p6242 = scmp.lt.s32.totalorder %s16, 1
      %s6243 = scalar_select %p6242, %s16, 1
      %s6244 = smul.addr %s6243, 32
      %s6245 = smul.addr %s6244, 8
      %s6246 = scalar_lea.vmem %s5, %s6245
      // Predicated region
      $region41: #{tpu_custom_call.1} parent=39 // pred_check
        %p6247 = pneg %p144
      $region42: #{tpu_custom_call.1} parent=39 // pred_check_branch
        %6249 = sbr.rel (%p6247) target = $region44
      $region43: #{tpu_custom_call.1} parent=39 // pred_region
        _
      $region44: #{tpu_custom_call.1} parent=39 // pred_fallthru
        _
    $region40: #{tpu_custom_call.1} parent=5 // pred_fallthru
      _
    %p6250 = scmp.le.s32.totalorder 2, %s11
    // Predicated region
    $region45: #{tpu_custom_call.1} parent=5 // pred_check
      %p6251 = pneg %p6250
    $region46: #{tpu_custom_call.1} parent=5 // pred_check_branch
      %6253 = sbr.rel (%p6251) target = $region48
    $region47: #{tpu_custom_call.1} parent=5 // pred_region
      %s6254 = ssub.s32 %s11, 2
      // Predicated region
      $region49: #{tpu_custom_call.1} parent=47 // pred_check
        %p6255 = pneg %p150
      $region50: #{tpu_custom_call.1} parent=47 // pred_check_branch
        %6257 = sbr.rel (%p6255) target = $region52
      $region51: #{tpu_custom_call.1} parent=47 // pred_region
        %p6258 = scmp.lt.s32.totalorder %s17, 1
        %s6259 = scalar_select %p6258, %s17, 1
        %s6260 = smul.addr %s6259, 32
        %s6261 = smul.addr %s6260, 8
        %s6262 = scalar_lea.vmem %s5, %s6261
      $region52: #{tpu_custom_call.1} parent=47 // pred_fallthru
        _
    $region48: #{tpu_custom_call.1} parent=5 // pred_fallthru
      _
  $region6: #{tpu_custom_call.1} parent=0 // loop_footer
    %s15 = sadd.s32 1, %s11
  $region7: #{tpu_custom_call.1} parent=0 // loop_footer_branch
    %10 = sbr.rel target = $region3
  $region8: #{tpu_custom_call.1} parent=0 // loop_exit
    _

</llo_original>
